<compile_context>
chip_gen: v7x
topology: tpu7x:2x2x1
jax: 0.10.0
libtpu: 0.0.40
codegen_flags: <defaults>
</compile_context>

<pallas_src>
import functools

import jax
import jax.numpy as jnp
from jax.experimental import pallas as pl
from jax.experimental.pallas import tpu as pltpu


# ----------------------------------------------------------------------------
# Pallas kernel: fused 3-layer MLP head
#   int8 weights (per-out-channel scale) -> bf16 on VPU -> MXU, f32 accumulation
# ----------------------------------------------------------------------------
def ensemble_head_kernel(x_ref, w1_ref, s1_ref, b1_ref, w2_ref, s2_ref, b2_ref,
                         w3_ref, b3_ref, o_ref):
    # x: (TB, 768) bf16 (already cast in the wrapper).
    x = x_ref[...]

    # int8 -> f32 -> bf16 widening (int8 values are exactly representable in
    # bf16); per-output-channel scale is folded in AFTER f32 accumulation.
    w1 = w1_ref[...].astype(jnp.float32).astype(jnp.bfloat16)
    h1 = jnp.dot(x, w1, preferred_element_type=jnp.float32)
    h1 = h1 * s1_ref[...] + b1_ref[...]                      # (TB, 1024) f32

    w2 = w2_ref[...].astype(jnp.float32).astype(jnp.bfloat16)
    h2 = jnp.dot(h1.astype(jnp.bfloat16), w2, preferred_element_type=jnp.float32)
    h2 = h2 * s2_ref[...] + b2_ref[...]                      # (TB, 1024) f32

    out = jnp.dot(h2.astype(jnp.bfloat16), w3_ref[...],
                  preferred_element_type=jnp.float32) + b3_ref[...]   # (TB, 128)
    o_ref[...] = out.astype(o_ref.dtype)


def _pick_batch_tile():
    """TB=512 on v6e/v7x (amortize grid-step overhead), 256 on v5e/older."""
    try:
        kind = jax.devices()[0].device_kind.lower()
    except Exception:
        return 256
    return 512 if ("v6" in kind or "v7" in kind) else 256


def ensemble_head(x1, w1q, s1, b1, w2q, s2, b2, w3, b3, *, batch_tile=None):
    """x1: (B, 768) bf16; w1q/w2q int8 (in,out); s*,b* f32 (1,out);
    w3 bf16 (1024, C_pad); b3 f32 (1, C_pad).  Returns (B, C_pad) f32."""
    B, F_in = x1.shape
    H1 = w1q.shape[1]
    H2 = w2q.shape[1]
    C_pad = w3.shape[1]
    if batch_tile is None:
        batch_tile = _pick_batch_tile()

    weight_bytes = (w1q.size + w2q.size) * 1 + w3.size * 2
    aux_bytes = (s1.size + b1.size + s2.size + b2.size + b3.size) * 4

    def cost(rows):
        return pl.CostEstimate(
            flops=2 * rows * (F_in * H1 + H1 * H2 + H2 * C_pad),
            transcendentals=0,
            bytes_accessed=int(rows * F_in * 2 + weight_bytes + aux_bytes
                               + rows * C_pad * 4))

    if B <= batch_tile:
        # Small batch: one monolithic block (weight DMA dominates anyway).
        full = lambda shape: pl.BlockSpec(shape, lambda: (0,) * len(shape))
        return pl.pallas_call(
            ensemble_head_kernel,
            out_shape=jax.ShapeDtypeStruct((B, C_pad), jnp.float32),
            grid=(),
            in_specs=[
                full((B, F_in)),
                full((F_in, H1)), full((1, H1)), full((1, H1)),
                full((H1, H2)), full((1, H2)), full((1, H2)),
                full((H2, C_pad)), full((1, C_pad)),
            ],
            out_specs=full((B, C_pad)),
            cost_estimate=cost(B),
            compiler_params=pltpu.CompilerParams(
                vmem_limit_bytes=40 * 1024 * 1024),
        )(x1, w1q, s1, b1, w2q, s2, b2, w3, b3)

    # Large batch: tile the batch axis, keep weights VMEM-resident (constant
    # block index + single buffer), shard across TensorCores.
    n_tiles = pl.cdiv(B, batch_tile)
    B_pad = n_tiles * batch_tile
    if B_pad != B:
        # Pad with zeros so no grid step computes on undefined rows.
        x1 = jnp.pad(x1, ((0, B_pad - B), (0, 0)))

    const = lambda shape: pl.BlockSpec(shape, lambda i: (0,) * len(shape),
                                       pipeline_mode=pl.Buffered(1))
    out = pl.pallas_call(
        ensemble_head_kernel,
        out_shape=jax.ShapeDtypeStruct((B_pad, C_pad), jnp.float32),
        grid=(n_tiles,),
        in_specs=[
            pl.BlockSpec((batch_tile, F_in), lambda i: (i, 0)),
            const((F_in, H1)), const((1, H1)), const((1, H1)),
            const((H1, H2)), const((1, H2)), const((1, H2)),
            const((H2, C_pad)), const((1, C_pad)),
        ],
        out_specs=pl.BlockSpec((batch_tile, C_pad), lambda i: (i, 0)),
        cost_estimate=cost(B_pad),
        compiler_params=pltpu.CompilerParams(
            dimension_semantics=("parallel",),
            vmem_limit_bytes=40 * 1024 * 1024),
    )(x1, w1q, s1, b1, w2q, s2, b2, w3, b3)
    return out[:B]


# ----------------------------------------------------------------------------
# Synthetic sub-models (glue, plain JAX) — the originals are injected modules.
# ----------------------------------------------------------------------------
def synthetic_language_model(params, input_ids, attention_mask, token_type_ids):
    """Embedding lookup + segment embedding + masked mean pool -> (B, 768)."""
    tok = params["tok_emb"][input_ids]                  # (B, S, 768)
    seg = params["seg_emb"][token_type_ids]             # (B, S, 768)
    h = tok + seg
    mask = attention_mask.astype(jnp.float32)[..., None]   # (B, S, 1)
    pooled = (h * mask).sum(axis=1) / jnp.maximum(mask.sum(axis=1), 1.0)
    return pooled                                       # (B, 768) f32


def synthetic_vision_model(params, images):
    """Flatten NCHW image + linear projection. Output is unused (as in the
    reference forward, which discards x2) — DCE'd under jit."""
    B = images.shape[0]
    flat = images.reshape(B, -1)
    return flat @ params["vis_w"] + params["vis_b"]     # (B, 512), discarded


# ----------------------------------------------------------------------------
# Full forward (mirrors MyEnsemble.forward)
# ----------------------------------------------------------------------------
@functools.partial(jax.jit, static_argnames=("n_classes",))
def my_ensemble_forward(params, input_ids, attention_mask, token_type_ids,
                        images, *, n_classes):
    x1 = synthetic_language_model(params, input_ids, attention_mask, token_type_ids)
    x2 = synthetic_vision_model(params, images)
    del x2  # reference forward computes x2 but never uses it
    x1 = x1.astype(jnp.bfloat16)   # kernel math is bf16 anyway; halves x DMA
    out_padded = ensemble_head(
        x1,
        params["w1q"], params["s1"], params["b1"],
        params["w2q"], params["s2"], params["b2"],
        params["w3"], params["b3"],
    )
    return out_padded[:, :n_classes]


# ----------------------------------------------------------------------------
# Deterministic parameter init (int8 per-channel quantized head) + reference
# ----------------------------------------------------------------------------
def init_params(key, *, vocab=100, n_seg=2, n_classes=8, img_feat=4 * 16 * 16,
                c_pad=128):
    ks = jax.random.split(key, 8)

    def lin_f32(k, fan_in, fan_out):
        bound = 1.0 / (fan_in ** 0.5)
        kw, kb = jax.random.split(k)
        w = jax.random.uniform(kw, (fan_in, fan_out), jnp.float32, -bound, bound)
        b = jax.random.uniform(kb, (1, fan_out), jnp.float32, -bound, bound)
        return w, b

    def quant_int8(w):
        absmax = jnp.max(jnp.abs(w), axis=0, keepdims=True)       # (1, out)
        scale = jnp.maximum(absmax, 1e-8) / 127.0
        q = jnp.clip(jnp.round(w / scale), -127, 127).astype(jnp.int8)
        return q, scale.astype(jnp.float32)

    w1, b1 = lin_f32(ks[0], 768, 1024)       # latent_layer1
    w2, b2 = lin_f32(ks[1], 1024, 1024)      # latent_layer2
    w3, b3 = lin_f32(ks[2], 1024, n_classes) # classifier
    w1q, s1 = quant_int8(w1)
    w2q, s2 = quant_int8(w2)

    # Pad classifier to lane-dense 128 output columns (zero-padded), bf16.
    c_pad = max(c_pad, n_classes)
    w3p = jnp.zeros((1024, c_pad), jnp.float32).at[:, :n_classes].set(w3)
    w3p = w3p.astype(jnp.bfloat16)
    b3p = jnp.zeros((1, c_pad), jnp.float32).at[:, :n_classes].set(b3)

    vis_w, vis_b = lin_f32(ks[3], img_feat, 512)
    return {
        "w1q": w1q, "s1": s1, "b1": b1,
        "w2q": w2q, "s2": s2, "b2": b2,
        "w3": w3p, "b3": b3p,
        "tok_emb": jax.random.normal(ks[4], (vocab, 768), jnp.float32) * 0.02,
        "seg_emb": jax.random.normal(ks[5], (n_seg, 768), jnp.float32) * 0.02,
        "vis_w": vis_w, "vis_b": vis_b[0],
    }


def head_reference(x_bf16, params):
    """Plain-JAX reference with the exact same int8/bf16/f32-acc recipe."""
    w1 = params["w1q"].astype(jnp.float32).astype(jnp.bfloat16)
    w2 = params["w2q"].astype(jnp.float32).astype(jnp.bfloat16)
    h1 = jnp.dot(x_bf16, w1, preferred_element_type=jnp.float32)
    h1 = h1 * params["s1"] + params["b1"]
    h2 = jnp.dot(h1.astype(jnp.bfloat16), w2, preferred_element_type=jnp.float32)
    h2 = h2 * params["s2"] + params["b2"]
    return jnp.dot(h2.astype(jnp.bfloat16), params["w3"],
                   preferred_element_type=jnp.float32) + params["b3"]


if __name__ == "__main__":
    key = jax.random.PRNGKey(0)
    kp, ki, km, kt, kimg, kx = jax.random.split(key, 6)

    B, S, n_classes = 8, 8, 8
    params = init_params(kp, n_classes=n_classes)

    input_ids = jax.random.randint(ki, (B, S), 0, 100, dtype=jnp.int32)
    attention_mask = jnp.ones((B, S), dtype=jnp.int32)
    token_type_ids = jax.random.randint(kt, (B, S), 0, 2, dtype=jnp.int32)
    images = jax.random.normal(kimg, (B, 4, 16, 16), jnp.float32)   # NCHW

    # 1) Full forward (small batch -> monolithic kernel path).
    out = my_ensemble_forward(params, input_ids, attention_mask,
                              token_type_ids, images, n_classes=n_classes)
    out = jax.block_until_ready(out)
    assert out.shape == (B, n_classes)

    x1 = synthetic_language_model(params, input_ids, attention_mask,
                                  token_type_ids).astype(jnp.bfloat16)
    ref = head_reference(x1, params)[:, :n_classes]
    assert jnp.allclose(out, ref, atol=2e-2, rtol=2e-2)

    # 2) Exercise the batch-tiled grid path (parallel grid, Buffered(1) weights,
    #    padded last tile) directly on the head.
    Bb = 600
    xb = jax.random.normal(kx, (Bb, 768), jnp.float32).astype(jnp.bfloat16)
    outb = ensemble_head(xb,
                         params["w1q"], params["s1"], params["b1"],
                         params["w2q"], params["s2"], params["b2"],
                         params["w3"], params["b3"])
    outb = jax.block_until_ready(outb)
    refb = head_reference(xb, params)
    assert outb.shape == refb.shape
    assert jnp.allclose(outb, refb, atol=2e-2, rtol=2e-2)

    print("KERNEL_OK")
</pallas_src>

<mosaic_0001>
module attributes {stable_mosaic.version = 11 : i64} {
  func.func @ensemble_head_kernel(%arg0: memref<8x768xbf16, #tpu.memory_space<vmem>>, %arg1: memref<768x1024xi8, #tpu.memory_space<vmem>>, %arg2: memref<1x1024xf32, #tpu.memory_space<vmem>>, %arg3: memref<1x1024xf32, #tpu.memory_space<vmem>>, %arg4: memref<1024x1024xi8, #tpu.memory_space<vmem>>, %arg5: memref<1x1024xf32, #tpu.memory_space<vmem>>, %arg6: memref<1x1024xf32, #tpu.memory_space<vmem>>, %arg7: memref<1024x128xbf16, #tpu.memory_space<vmem>>, %arg8: memref<1x128xf32, #tpu.memory_space<vmem>>, %arg9: memref<8x128xf32, #tpu.memory_space<vmem>>) attributes {dimension_semantics = [], scalar_prefetch = 0 : i64, scratch_operands = 0 : i64, tpu.core_type = #tpu.core_type<tc>} {
    %c0 = arith.constant 0 : index
    %c0_0 = arith.constant 0 : index
    %0 = vector.load %arg0[%c0, %c0_0] : memref<8x768xbf16, #tpu.memory_space<vmem>>, vector<8x768xbf16>
    %c0_1 = arith.constant 0 : index
    %c0_2 = arith.constant 0 : index
    %1 = vector.load %arg1[%c0_1, %c0_2] : memref<768x1024xi8, #tpu.memory_space<vmem>>, vector<768x1024xi8>
    %2 = arith.sitofp %1 : vector<768x1024xi8> to vector<768x1024xf32>
    %3 = arith.truncf %2 : vector<768x1024xf32> to vector<768x1024xbf16>
    %cst = arith.constant dense<0.000000e+00> : vector<8x1024xf32>
    %4 = tpu.matmul %0, %3, %cst {dimension_numbers = #tpu.dot_dimension_numbers<[1], [0], [0], [1], [0, 0, 1, 1], [], []>} : vector<8x768xbf16>, vector<768x1024xbf16>, vector<8x1024xf32> -> vector<8x1024xf32>
    %c0_3 = arith.constant 0 : index
    %c0_4 = arith.constant 0 : index
    %5 = vector.load %arg2[%c0_3, %c0_4] : memref<1x1024xf32, #tpu.memory_space<vmem>>, vector<1x1024xf32>
    %6 = vector.broadcast %5 : vector<1x1024xf32> to vector<8x1024xf32>
    %7 = arith.mulf %4, %6 : vector<8x1024xf32>
    %c0_5 = arith.constant 0 : index
    %c0_6 = arith.constant 0 : index
    %8 = vector.load %arg3[%c0_5, %c0_6] : memref<1x1024xf32, #tpu.memory_space<vmem>>, vector<1x1024xf32>
    %9 = vector.broadcast %8 : vector<1x1024xf32> to vector<8x1024xf32>
    %10 = arith.addf %7, %9 : vector<8x1024xf32>
    %c0_7 = arith.constant 0 : index
    %c0_8 = arith.constant 0 : index
    %11 = vector.load %arg4[%c0_7, %c0_8] : memref<1024x1024xi8, #tpu.memory_space<vmem>>, vector<1024x1024xi8>
    %12 = arith.sitofp %11 : vector<1024x1024xi8> to vector<1024x1024xf32>
    %13 = arith.truncf %12 : vector<1024x1024xf32> to vector<1024x1024xbf16>
    %14 = arith.truncf %10 : vector<8x1024xf32> to vector<8x1024xbf16>
    %cst_9 = arith.constant dense<0.000000e+00> : vector<8x1024xf32>
    %15 = tpu.matmul %14, %13, %cst_9 {dimension_numbers = #tpu.dot_dimension_numbers<[1], [0], [0], [1], [0, 0, 1, 1], [], []>} : vector<8x1024xbf16>, vector<1024x1024xbf16>, vector<8x1024xf32> -> vector<8x1024xf32>
    %c0_10 = arith.constant 0 : index
    %c0_11 = arith.constant 0 : index
    %16 = vector.load %arg5[%c0_10, %c0_11] : memref<1x1024xf32, #tpu.memory_space<vmem>>, vector<1x1024xf32>
    %17 = vector.broadcast %16 : vector<1x1024xf32> to vector<8x1024xf32>
    %18 = arith.mulf %15, %17 : vector<8x1024xf32>
    %c0_12 = arith.constant 0 : index
    %c0_13 = arith.constant 0 : index
    %19 = vector.load %arg6[%c0_12, %c0_13] : memref<1x1024xf32, #tpu.memory_space<vmem>>, vector<1x1024xf32>
    %20 = vector.broadcast %19 : vector<1x1024xf32> to vector<8x1024xf32>
    %21 = arith.addf %18, %20 : vector<8x1024xf32>
    %22 = arith.truncf %21 : vector<8x1024xf32> to vector<8x1024xbf16>
    %c0_14 = arith.constant 0 : index
    %c0_15 = arith.constant 0 : index
    %23 = vector.load %arg7[%c0_14, %c0_15] : memref<1024x128xbf16, #tpu.memory_space<vmem>>, vector<1024x128xbf16>
    %cst_16 = arith.constant dense<0.000000e+00> : vector<8x128xf32>
    %24 = tpu.matmul %22, %23, %cst_16 {dimension_numbers = #tpu.dot_dimension_numbers<[1], [0], [0], [1], [0, 0, 1, 1], [], []>} : vector<8x1024xbf16>, vector<1024x128xbf16>, vector<8x128xf32> -> vector<8x128xf32>
    %c0_17 = arith.constant 0 : index
    %c0_18 = arith.constant 0 : index
    %25 = vector.load %arg8[%c0_17, %c0_18] : memref<1x128xf32, #tpu.memory_space<vmem>>, vector<1x128xf32>
    %26 = vector.broadcast %25 : vector<1x128xf32> to vector<8x128xf32>
    %27 = arith.addf %24, %26 : vector<8x128xf32>
    %c0_19 = arith.constant 0 : index
    %c0_20 = arith.constant 0 : index
    %28 = vector.load %arg9[%c0_19, %c0_20] : memref<8x128xf32, #tpu.memory_space<vmem>>, vector<8x128xf32>
    tpu.vector_store %arg9[%c0_19, %c0_20], %27 {strides = array<i32>} : memref<8x128xf32, #tpu.memory_space<vmem>>, vector<8x128xf32>,
    return
  }
}

</mosaic_0001>

<llo_original>
// kernel: my_ensemble_forward.1
$region0: #{my_ensemble_forward.1}
  #allocation0 [shape = 'u32[]', space=smem, size = 0x4, offset = 0x4, fixed_abs, tag = 'smem constant byte address 0x4 - core index']
  #allocation1 [shape = 'u32[144,128]{1,0:T(1,128)}', space=vmem, size = 0x12000, scoped, tag = 'internal scratch']
  %s0 = inlined_call_operand.vmem [shape: bf16[8,768], index: 0, kind: input, shape index: {}]
  %s1 = inlined_call_operand.vmem [shape: s8[768,1024], index: 1, kind: input, shape index: {}]
  %s2 = inlined_call_operand.vmem [shape: f32[1,1024], index: 2, kind: input, shape index: {}]
  %s3 = inlined_call_operand.vmem [shape: f32[1,1024], index: 3, kind: input, shape index: {}]
  %s4 = inlined_call_operand.vmem [shape: s8[1024,1024], index: 4, kind: input, shape index: {}]
  %s5 = inlined_call_operand.vmem [shape: f32[1,1024], index: 5, kind: input, shape index: {}]
  %s6 = inlined_call_operand.vmem [shape: f32[1,1024], index: 6, kind: input, shape index: {}]
  %s7 = inlined_call_operand.vmem [shape: bf16[1024,128], index: 7, kind: input, shape index: {}]
  %s8 = inlined_call_operand.vmem [shape: f32[1,128], index: 8, kind: input, shape index: {}]
  %s9 = inlined_call_operand.hbm [shape: f32[8,128], index: 9, kind: output, shape index: {}]
  %s10 = sld [smem:[#allocation0]]
  $region46: #{my_ensemble_forward.1} parent=0
    _
  %s12 = ssub.s32 1, %s10
  %s13 = scalar_select 0, %s12, %s10
  $region1: #{my_ensemble_forward.1} parent=0
    #allocation2 [shape = 'u8[4096]{0}', space=vmem, size = 0x1000, scoped, tag = 'output window, operand 0, single buffered']
    #allocation3 [shape = 's32[1]{0}', space=sflag, size = 0x4, scoped, tag = 'scoped memory for my_ensemble_forward.1']
    %14 = vsyncpa [#allocation3], 0
    // Predicated region
    $region2: #{my_ensemble_forward.1} parent=1 // pred_check
      _
    $region3: #{my_ensemble_forward.1} parent=1 // pred_check_branch
      %16 = sbr.rel (0) target = $region5
    $region4: #{my_ensemble_forward.1} parent=1 // pred_region
      _
    $region5: #{my_ensemble_forward.1} parent=1 // pred_fallthru
      _
    // Predicated region
    $region6: #{my_ensemble_forward.1} parent=1 // pred_check
      _
    $region7: #{my_ensemble_forward.1} parent=1 // pred_check_branch
      %18 = sbr.rel (0) target = $region9
    $region8: #{my_ensemble_forward.1} parent=1 // pred_region
      _
    $region9: #{my_ensemble_forward.1} parent=1 // pred_fallthru
      _
    // Predicated region
    $region10: #{my_ensemble_forward.1} parent=1 // pred_check
      _
    $region11: #{my_ensemble_forward.1} parent=1 // pred_check_branch
      %20 = sbr.rel (0) target = $region13
    $region12: #{my_ensemble_forward.1} parent=1 // pred_region
      _
    $region13: #{my_ensemble_forward.1} parent=1 // pred_fallthru
      _
    // Predicated region
    $region14: #{my_ensemble_forward.1} parent=1 // pred_check
      _
    $region15: #{my_ensemble_forward.1} parent=1 // pred_check_branch
      %22 = sbr.rel (0) target = $region17
    $region16: #{my_ensemble_forward.1} parent=1 // pred_region
      _
    $region17: #{my_ensemble_forward.1} parent=1 // pred_fallthru
      _
    // Predicated region
    $region18: #{my_ensemble_forward.1} parent=1 // pred_check
      _
    $region19: #{my_ensemble_forward.1} parent=1 // pred_check_branch
      %24 = sbr.rel (0) target = $region21
    $region20: #{my_ensemble_forward.1} parent=1 // pred_region
      _
    $region21: #{my_ensemble_forward.1} parent=1 // pred_fallthru
      _
    // Predicated region
    $region22: #{my_ensemble_forward.1} parent=1 // pred_check
      _
    $region23: #{my_ensemble_forward.1} parent=1 // pred_check_branch
      %26 = sbr.rel (0) target = $region25
    $region24: #{my_ensemble_forward.1} parent=1 // pred_region
      _
    $region25: #{my_ensemble_forward.1} parent=1 // pred_fallthru
      _
    // Predicated region
    $region26: #{my_ensemble_forward.1} parent=1 // pred_check
      _
    $region27: #{my_ensemble_forward.1} parent=1 // pred_check_branch
      %28 = sbr.rel (0) target = $region29
    $region28: #{my_ensemble_forward.1} parent=1 // pred_region
      _
    $region29: #{my_ensemble_forward.1} parent=1 // pred_fallthru
      _
    // Predicated region
    $region30: #{my_ensemble_forward.1} parent=1 // pred_check
      _
    $region31: #{my_ensemble_forward.1} parent=1 // pred_check_branch
      %30 = sbr.rel (0) target = $region33
    $region32: #{my_ensemble_forward.1} parent=1 // pred_region
      _
    $region33: #{my_ensemble_forward.1} parent=1 // pred_fallthru
      _
    // Predicated region
    $region34: #{my_ensemble_forward.1} parent=1 // pred_check
      _
    $region35: #{my_ensemble_forward.1} parent=1 // pred_check_branch
      %32 = sbr.rel (0) target = $region37
    $region36: #{my_ensemble_forward.1} parent=1 // pred_region
      _
    $region37: #{my_ensemble_forward.1} parent=1 // pred_fallthru
      _
    %v34 = vld [vmem:[%s0] sm:$0xff]
    %v35 = vld [vmem:[%s0 + $0x8] sm:$0xff]
    %v36 = vld [vmem:[%s0 + $0x10] sm:$0xff]
    %v37 = vld [vmem:[%s1] sm:$0xff]
    %v38 = vld [vmem:[%s1 + $0x8] sm:$0xff]
    %v39 = vld [vmem:[%s1 + $0x10] sm:$0xff]
    %v40 = vld [vmem:[%s1 + $0x18] sm:$0xff]
    %v41 = vld [vmem:[%s1 + $0x20] sm:$0xff]
    %v42 = vld [vmem:[%s1 + $0x28] sm:$0xff]
    %v43 = vld [vmem:[%s1 + $0x30] sm:$0xff]
    %v44 = vld [vmem:[%s1 + $0x38] sm:$0xff]
    %v45 = vld [vmem:[%s1 + $0x40] sm:$0xff]
    %v46 = vld [vmem:[%s1 + $0x48] sm:$0xff]
    %v47 = vld [vmem:[%s1 + $0x50] sm:$0xff]
    %v48 = vld [vmem:[%s1 + $0x58] sm:$0xff]
    %v49 = vld [vmem:[%s1 + $0x60] sm:$0xff]
    %v50 = vld [vmem:[%s1 + $0x68] sm:$0xff]
    %v51 = vld [vmem:[%s1 + $0x70] sm:$0xff]
    %v52 = vld [vmem:[%s1 + $0x78] sm:$0xff]
    %v53 = vld [vmem:[%s1 + $0x80] sm:$0xff]
    %v54 = vld [vmem:[%s1 + $0x88] sm:$0xff]
    %v55 = vld [vmem:[%s1 + $0x90] sm:$0xff]
    %v56 = vld [vmem:[%s1 + $0x98] sm:$0xff]
    %v57 = vld [vmem:[%s1 + $0xa0] sm:$0xff]
    %v58 = vld [vmem:[%s1 + $0xa8] sm:$0xff]
    %v59 = vld [vmem:[%s1 + $0xb0] sm:$0xff]
    %v60 = vld [vmem:[%s1 + $0xb8] sm:$0xff]
    %v61 = vld [vmem:[%s1 + $0xc0] sm:$0xff]
    %v62 = vld [vmem:[%s1 + $0xc8] sm:$0xff]
    %v63 = vld [vmem:[%s1 + $0xd0] sm:$0xff]
    %v64 = vld [vmem:[%s1 + $0xd8] sm:$0xff]
    %v65 = vld [vmem:[%s1 + $0xe0] sm:$0xff]
    %v66 = vld [vmem:[%s1 + $0xe8] sm:$0xff]
    %v67 = vld [vmem:[%s1 + $0xf0] sm:$0xff]
    %v68 = vld [vmem:[%s1 + $0xf8] sm:$0xff]
    %v69 = vld [vmem:[%s1 + $0x100] sm:$0xff]
    %v70 = vld [vmem:[%s1 + $0x108] sm:$0xff]
    %v71 = vld [vmem:[%s1 + $0x110] sm:$0xff]
    %v72 = vld [vmem:[%s1 + $0x118] sm:$0xff]
    %v73 = vld [vmem:[%s1 + $0x120] sm:$0xff]
    %v74 = vld [vmem:[%s1 + $0x128] sm:$0xff]
    %v75 = vld [vmem:[%s1 + $0x130] sm:$0xff]
    %v76 = vld [vmem:[%s1 + $0x138] sm:$0xff]
    %v77 = vld [vmem:[%s1 + $0x140] sm:$0xff]
    %v78 = vld [vmem:[%s1 + $0x148] sm:$0xff]
    %v79 = vld [vmem:[%s1 + $0x150] sm:$0xff]
    %v80 = vld [vmem:[%s1 + $0x158] sm:$0xff]
    %v81 = vld [vmem:[%s1 + $0x160] sm:$0xff]
    %v82 = vld [vmem:[%s1 + $0x168] sm:$0xff]
    %v83 = vld [vmem:[%s1 + $0x170] sm:$0xff]
    %v84 = vld [vmem:[%s1 + $0x178] sm:$0xff]
    %v85 = vld [vmem:[%s1 + $0x180] sm:$0xff]
    %v86 = vld [vmem:[%s1 + $0x188] sm:$0xff]
    %v87 = vld [vmem:[%s1 + $0x190] sm:$0xff]
    %v88 = vld [vmem:[%s1 + $0x198] sm:$0xff]
    %v89 = vld [vmem:[%s1 + $0x1a0] sm:$0xff]
    %v90 = vld [vmem:[%s1 + $0x1a8] sm:$0xff]
    %v91 = vld [vmem:[%s1 + $0x1b0] sm:$0xff]
    %v92 = vld [vmem:[%s1 + $0x1b8] sm:$0xff]
    %v93 = vld [vmem:[%s1 + $0x1c0] sm:$0xff]
    %v94 = vld [vmem:[%s1 + $0x1c8] sm:$0xff]
    %v95 = vld [vmem:[%s1 + $0x1d0] sm:$0xff]
    %v96 = vld [vmem:[%s1 + $0x1d8] sm:$0xff]
    %v97 = vld [vmem:[%s1 + $0x1e0] sm:$0xff]
    %v98 = vld [vmem:[%s1 + $0x1e8] sm:$0xff]
    %v99 = vld [vmem:[%s1 + $0x1f0] sm:$0xff]
    %v100 = vld [vmem:[%s1 + $0x1f8] sm:$0xff]
    %v101 = vld [vmem:[%s1 + $0x200] sm:$0xff]
    %v102 = vld [vmem:[%s1 + $0x208] sm:$0xff]
    %v103 = vld [vmem:[%s1 + $0x210] sm:$0xff]
    %v104 = vld [vmem:[%s1 + $0x218] sm:$0xff]
    %v105 = vld [vmem:[%s1 + $0x220] sm:$0xff]
    %v106 = vld [vmem:[%s1 + $0x228] sm:$0xff]
    %v107 = vld [vmem:[%s1 + $0x230] sm:$0xff]
    %v108 = vld [vmem:[%s1 + $0x238] sm:$0xff]
    %v109 = vld [vmem:[%s1 + $0x240] sm:$0xff]
    %v110 = vld [vmem:[%s1 + $0x248] sm:$0xff]
    %v111 = vld [vmem:[%s1 + $0x250] sm:$0xff]
    %v112 = vld [vmem:[%s1 + $0x258] sm:$0xff]
    %v113 = vld [vmem:[%s1 + $0x260] sm:$0xff]
    %v114 = vld [vmem:[%s1 + $0x268] sm:$0xff]
    %v115 = vld [vmem:[%s1 + $0x270] sm:$0xff]
    %v116 = vld [vmem:[%s1 + $0x278] sm:$0xff]
    %v117 = vld [vmem:[%s1 + $0x280] sm:$0xff]
    %v118 = vld [vmem:[%s1 + $0x288] sm:$0xff]
    %v119 = vld [vmem:[%s1 + $0x290] sm:$0xff]
    %v120 = vld [vmem:[%s1 + $0x298] sm:$0xff]
    %v121 = vld [vmem:[%s1 + $0x2a0] sm:$0xff]
    %v122 = vld [vmem:[%s1 + $0x2a8] sm:$0xff]
    %v123 = vld [vmem:[%s1 + $0x2b0] sm:$0xff]
    %v124 = vld [vmem:[%s1 + $0x2b8] sm:$0xff]
    %v125 = vld [vmem:[%s1 + $0x2c0] sm:$0xff]
    %v126 = vld [vmem:[%s1 + $0x2c8] sm:$0xff]
    %v127 = vld [vmem:[%s1 + $0x2d0] sm:$0xff]
    %v128 = vld [vmem:[%s1 + $0x2d8] sm:$0xff]
    %v129 = vld [vmem:[%s1 + $0x2e0] sm:$0xff]
    %v130 = vld [vmem:[%s1 + $0x2e8] sm:$0xff]
    %v131 = vld [vmem:[%s1 + $0x2f0] sm:$0xff]
    %v132 = vld [vmem:[%s1 + $0x2f8] sm:$0xff]
    %v133 = vld [vmem:[%s1 + $0x300] sm:$0xff]
    %v134 = vld [vmem:[%s1 + $0x308] sm:$0xff]
    %v135 = vld [vmem:[%s1 + $0x310] sm:$0xff]
    %v136 = vld [vmem:[%s1 + $0x318] sm:$0xff]
    %v137 = vld [vmem:[%s1 + $0x320] sm:$0xff]
    %v138 = vld [vmem:[%s1 + $0x328] sm:$0xff]
    %v139 = vld [vmem:[%s1 + $0x330] sm:$0xff]
    %v140 = vld [vmem:[%s1 + $0x338] sm:$0xff]
    %v141 = vld [vmem:[%s1 + $0x340] sm:$0xff]
    %v142 = vld [vmem:[%s1 + $0x348] sm:$0xff]
    %v143 = vld [vmem:[%s1 + $0x350] sm:$0xff]
    %v144 = vld [vmem:[%s1 + $0x358] sm:$0xff]
    %v145 = vld [vmem:[%s1 + $0x360] sm:$0xff]
    %v146 = vld [vmem:[%s1 + $0x368] sm:$0xff]
    %v147 = vld [vmem:[%s1 + $0x370] sm:$0xff]
    %v148 = vld [vmem:[%s1 + $0x378] sm:$0xff]
    %v149 = vld [vmem:[%s1 + $0x380] sm:$0xff]
    %v150 = vld [vmem:[%s1 + $0x388] sm:$0xff]
    %v151 = vld [vmem:[%s1 + $0x390] sm:$0xff]
    %v152 = vld [vmem:[%s1 + $0x398] sm:$0xff]
    %v153 = vld [vmem:[%s1 + $0x3a0] sm:$0xff]
    %v154 = vld [vmem:[%s1 + $0x3a8] sm:$0xff]
    %v155 = vld [vmem:[%s1 + $0x3b0] sm:$0xff]
    %v156 = vld [vmem:[%s1 + $0x3b8] sm:$0xff]
    %v157 = vld [vmem:[%s1 + $0x3c0] sm:$0xff]
    %v158 = vld [vmem:[%s1 + $0x3c8] sm:$0xff]
    %v159 = vld [vmem:[%s1 + $0x3d0] sm:$0xff]
    %v160 = vld [vmem:[%s1 + $0x3d8] sm:$0xff]
    %v161 = vld [vmem:[%s1 + $0x3e0] sm:$0xff]
    %v162 = vld [vmem:[%s1 + $0x3e8] sm:$0xff]
    %v163 = vld [vmem:[%s1 + $0x3f0] sm:$0xff]
    %v164 = vld [vmem:[%s1 + $0x3f8] sm:$0xff]
    %v165 = vld [vmem:[%s1 + $0x400] sm:$0xff]
    %v166 = vld [vmem:[%s1 + $0x408] sm:$0xff]
    %v167 = vld [vmem:[%s1 + $0x410] sm:$0xff]
    %v168 = vld [vmem:[%s1 + $0x418] sm:$0xff]
    %v169 = vld [vmem:[%s1 + $0x420] sm:$0xff]
    %v170 = vld [vmem:[%s1 + $0x428] sm:$0xff]
    %v171 = vld [vmem:[%s1 + $0x430] sm:$0xff]
    %v172 = vld [vmem:[%s1 + $0x438] sm:$0xff]
    %v173 = vld [vmem:[%s1 + $0x440] sm:$0xff]
    %v174 = vld [vmem:[%s1 + $0x448] sm:$0xff]
    %v175 = vld [vmem:[%s1 + $0x450] sm:$0xff]
    %v176 = vld [vmem:[%s1 + $0x458] sm:$0xff]
    %v177 = vld [vmem:[%s1 + $0x460] sm:$0xff]
    %v178 = vld [vmem:[%s1 + $0x468] sm:$0xff]
    %v179 = vld [vmem:[%s1 + $0x470] sm:$0xff]
    %v180 = vld [vmem:[%s1 + $0x478] sm:$0xff]
    %v181 = vld [vmem:[%s1 + $0x480] sm:$0xff]
    %v182 = vld [vmem:[%s1 + $0x488] sm:$0xff]
    %v183 = vld [vmem:[%s1 + $0x490] sm:$0xff]
    %v184 = vld [vmem:[%s1 + $0x498] sm:$0xff]
    %v185 = vld [vmem:[%s1 + $0x4a0] sm:$0xff]
    %v186 = vld [vmem:[%s1 + $0x4a8] sm:$0xff]
    %v187 = vld [vmem:[%s1 + $0x4b0] sm:$0xff]
    %v188 = vld [vmem:[%s1 + $0x4b8] sm:$0xff]
    %v189 = vld [vmem:[%s1 + $0x4c0] sm:$0xff]
    %v190 = vld [vmem:[%s1 + $0x4c8] sm:$0xff]
    %v191 = vld [vmem:[%s1 + $0x4d0] sm:$0xff]
    %v192 = vld [vmem:[%s1 + $0x4d8] sm:$0xff]
    %v193 = vld [vmem:[%s1 + $0x4e0] sm:$0xff]
    %v194 = vld [vmem:[%s1 + $0x4e8] sm:$0xff]
    %v195 = vld [vmem:[%s1 + $0x4f0] sm:$0xff]
    %v196 = vld [vmem:[%s1 + $0x4f8] sm:$0xff]
    %v197 = vld [vmem:[%s1 + $0x500] sm:$0xff]
    %v198 = vld [vmem:[%s1 + $0x508] sm:$0xff]
    %v199 = vld [vmem:[%s1 + $0x510] sm:$0xff]
    %v200 = vld [vmem:[%s1 + $0x518] sm:$0xff]
    %v201 = vld [vmem:[%s1 + $0x520] sm:$0xff]
    %v202 = vld [vmem:[%s1 + $0x528] sm:$0xff]
    %v203 = vld [vmem:[%s1 + $0x530] sm:$0xff]
    %v204 = vld [vmem:[%s1 + $0x538] sm:$0xff]
    %v205 = vld [vmem:[%s1 + $0x540] sm:$0xff]
    %v206 = vld [vmem:[%s1 + $0x548] sm:$0xff]
    %v207 = vld [vmem:[%s1 + $0x550] sm:$0xff]
    %v208 = vld [vmem:[%s1 + $0x558] sm:$0xff]
    %v209 = vld [vmem:[%s1 + $0x560] sm:$0xff]
    %v210 = vld [vmem:[%s1 + $0x568] sm:$0xff]
    %v211 = vld [vmem:[%s1 + $0x570] sm:$0xff]
    %v212 = vld [vmem:[%s1 + $0x578] sm:$0xff]
    %v213 = vld [vmem:[%s1 + $0x580] sm:$0xff]
    %v214 = vld [vmem:[%s1 + $0x588] sm:$0xff]
    %v215 = vld [vmem:[%s1 + $0x590] sm:$0xff]
    %v216 = vld [vmem:[%s1 + $0x598] sm:$0xff]
    %v217 = vld [vmem:[%s1 + $0x5a0] sm:$0xff]
    %v218 = vld [vmem:[%s1 + $0x5a8] sm:$0xff]
    %v219 = vld [vmem:[%s1 + $0x5b0] sm:$0xff]
    %v220 = vld [vmem:[%s1 + $0x5b8] sm:$0xff]
    %v221 = vld [vmem:[%s1 + $0x5c0] sm:$0xff]
    %v222 = vld [vmem:[%s1 + $0x5c8] sm:$0xff]
    %v223 = vld [vmem:[%s1 + $0x5d0] sm:$0xff]
    %v224 = vld [vmem:[%s1 + $0x5d8] sm:$0xff]
    %v225 = vld [vmem:[%s1 + $0x5e0] sm:$0xff]
    %v226 = vld [vmem:[%s1 + $0x5e8] sm:$0xff]
    %v227 = vld [vmem:[%s1 + $0x5f0] sm:$0xff]
    %v228 = vld [vmem:[%s1 + $0x5f8] sm:$0xff]
    %v229 = vunpack.c.l.s8.bf16 %v37
    %v230 = vunpack.c.l.s8.bf16 %v38
    %v231 = vunpack.c.l.s8.bf16 %v39
    %v232 = vunpack.c.l.s8.bf16 %v40
    %v233 = vunpack.c.l.s8.bf16 %v41
    %v234 = vunpack.c.l.s8.bf16 %v42
    %v235 = vunpack.c.l.s8.bf16 %v43
    %v236 = vunpack.c.l.s8.bf16 %v44
    %v237 = vunpack.c.h.s8.bf16 %v37
    %v238 = vunpack.c.h.s8.bf16 %v38
    %v239 = vunpack.c.h.s8.bf16 %v39
    %v240 = vunpack.c.h.s8.bf16 %v40
    %v241 = vunpack.c.h.s8.bf16 %v41
    %v242 = vunpack.c.h.s8.bf16 %v42
    %v243 = vunpack.c.h.s8.bf16 %v43
    %v244 = vunpack.c.h.s8.bf16 %v44
    %v245 = vunpack.c.l.s8.bf16 %v45
    %v246 = vunpack.c.l.s8.bf16 %v46
    %v247 = vunpack.c.l.s8.bf16 %v47
    %v248 = vunpack.c.l.s8.bf16 %v48
    %v249 = vunpack.c.l.s8.bf16 %v49
    %v250 = vunpack.c.l.s8.bf16 %v50
    %v251 = vunpack.c.l.s8.bf16 %v51
    %v252 = vunpack.c.l.s8.bf16 %v52
    %v253 = vunpack.c.h.s8.bf16 %v45
    %v254 = vunpack.c.h.s8.bf16 %v46
    %v255 = vunpack.c.h.s8.bf16 %v47
    %v256 = vunpack.c.h.s8.bf16 %v48
    %v257 = vunpack.c.h.s8.bf16 %v49
    %v258 = vunpack.c.h.s8.bf16 %v50
    %v259 = vunpack.c.h.s8.bf16 %v51
    %v260 = vunpack.c.h.s8.bf16 %v52
    %v261 = vunpack.c.l.s8.bf16 %v53
    %v262 = vunpack.c.l.s8.bf16 %v54
    %v263 = vunpack.c.l.s8.bf16 %v55
    %v264 = vunpack.c.l.s8.bf16 %v56
    %v265 = vunpack.c.l.s8.bf16 %v57
    %v266 = vunpack.c.l.s8.bf16 %v58
    %v267 = vunpack.c.l.s8.bf16 %v59
    %v268 = vunpack.c.l.s8.bf16 %v60
    %v269 = vunpack.c.h.s8.bf16 %v53
    %v270 = vunpack.c.h.s8.bf16 %v54
    %v271 = vunpack.c.h.s8.bf16 %v55
    %v272 = vunpack.c.h.s8.bf16 %v56
    %v273 = vunpack.c.h.s8.bf16 %v57
    %v274 = vunpack.c.h.s8.bf16 %v58
    %v275 = vunpack.c.h.s8.bf16 %v59
    %v276 = vunpack.c.h.s8.bf16 %v60
    %v277 = vunpack.c.l.s8.bf16 %v61
    %v278 = vunpack.c.l.s8.bf16 %v62
    %v279 = vunpack.c.l.s8.bf16 %v63
    %v280 = vunpack.c.l.s8.bf16 %v64
    %v281 = vunpack.c.l.s8.bf16 %v65
    %v282 = vunpack.c.l.s8.bf16 %v66
    %v283 = vunpack.c.l.s8.bf16 %v67
    %v284 = vunpack.c.l.s8.bf16 %v68
    %v285 = vunpack.c.h.s8.bf16 %v61
    %v286 = vunpack.c.h.s8.bf16 %v62
    %v287 = vunpack.c.h.s8.bf16 %v63
    %v288 = vunpack.c.h.s8.bf16 %v64
    %v289 = vunpack.c.h.s8.bf16 %v65
    %v290 = vunpack.c.h.s8.bf16 %v66
    %v291 = vunpack.c.h.s8.bf16 %v67
    %v292 = vunpack.c.h.s8.bf16 %v68
    %v293 = vunpack.c.l.s8.bf16 %v69
    %v294 = vunpack.c.l.s8.bf16 %v70
    %v295 = vunpack.c.l.s8.bf16 %v71
    %v296 = vunpack.c.l.s8.bf16 %v72
    %v297 = vunpack.c.l.s8.bf16 %v73
    %v298 = vunpack.c.l.s8.bf16 %v74
    %v299 = vunpack.c.l.s8.bf16 %v75
    %v300 = vunpack.c.l.s8.bf16 %v76
    %v301 = vunpack.c.h.s8.bf16 %v69
    %v302 = vunpack.c.h.s8.bf16 %v70
    %v303 = vunpack.c.h.s8.bf16 %v71
    %v304 = vunpack.c.h.s8.bf16 %v72
    %v305 = vunpack.c.h.s8.bf16 %v73
    %v306 = vunpack.c.h.s8.bf16 %v74
    %v307 = vunpack.c.h.s8.bf16 %v75
    %v308 = vunpack.c.h.s8.bf16 %v76
    %v309 = vunpack.c.l.s8.bf16 %v77
    %v310 = vunpack.c.l.s8.bf16 %v78
    %v311 = vunpack.c.l.s8.bf16 %v79
    %v312 = vunpack.c.l.s8.bf16 %v80
    %v313 = vunpack.c.l.s8.bf16 %v81
    %v314 = vunpack.c.l.s8.bf16 %v82
    %v315 = vunpack.c.l.s8.bf16 %v83
    %v316 = vunpack.c.l.s8.bf16 %v84
    %v317 = vunpack.c.h.s8.bf16 %v77
    %v318 = vunpack.c.h.s8.bf16 %v78
    %v319 = vunpack.c.h.s8.bf16 %v79
    %v320 = vunpack.c.h.s8.bf16 %v80
    %v321 = vunpack.c.h.s8.bf16 %v81
    %v322 = vunpack.c.h.s8.bf16 %v82
    %v323 = vunpack.c.h.s8.bf16 %v83
    %v324 = vunpack.c.h.s8.bf16 %v84
    %v325 = vunpack.c.l.s8.bf16 %v85
    %v326 = vunpack.c.l.s8.bf16 %v86
    %v327 = vunpack.c.l.s8.bf16 %v87
    %v328 = vunpack.c.l.s8.bf16 %v88
    %v329 = vunpack.c.l.s8.bf16 %v89
    %v330 = vunpack.c.l.s8.bf16 %v90
    %v331 = vunpack.c.l.s8.bf16 %v91
    %v332 = vunpack.c.l.s8.bf16 %v92
    %v333 = vunpack.c.h.s8.bf16 %v85
    %v334 = vunpack.c.h.s8.bf16 %v86
    %v335 = vunpack.c.h.s8.bf16 %v87
    %v336 = vunpack.c.h.s8.bf16 %v88
    %v337 = vunpack.c.h.s8.bf16 %v89
    %v338 = vunpack.c.h.s8.bf16 %v90
    %v339 = vunpack.c.h.s8.bf16 %v91
    %v340 = vunpack.c.h.s8.bf16 %v92
    %v341 = vunpack.c.l.s8.bf16 %v93
    %v342 = vunpack.c.l.s8.bf16 %v94
    %v343 = vunpack.c.l.s8.bf16 %v95
    %v344 = vunpack.c.l.s8.bf16 %v96
    %v345 = vunpack.c.l.s8.bf16 %v97
    %v346 = vunpack.c.l.s8.bf16 %v98
    %v347 = vunpack.c.l.s8.bf16 %v99
    %v348 = vunpack.c.l.s8.bf16 %v100
    %v349 = vunpack.c.h.s8.bf16 %v93
    %v350 = vunpack.c.h.s8.bf16 %v94
    %v351 = vunpack.c.h.s8.bf16 %v95
    %v352 = vunpack.c.h.s8.bf16 %v96
    %v353 = vunpack.c.h.s8.bf16 %v97
    %v354 = vunpack.c.h.s8.bf16 %v98
    %v355 = vunpack.c.h.s8.bf16 %v99
    %v356 = vunpack.c.h.s8.bf16 %v100
    %v357 = vunpack.c.l.s8.bf16 %v101
    %v358 = vunpack.c.l.s8.bf16 %v102
    %v359 = vunpack.c.l.s8.bf16 %v103
    %v360 = vunpack.c.l.s8.bf16 %v104
    %v361 = vunpack.c.l.s8.bf16 %v105
    %v362 = vunpack.c.l.s8.bf16 %v106
    %v363 = vunpack.c.l.s8.bf16 %v107
    %v364 = vunpack.c.l.s8.bf16 %v108
    %v365 = vunpack.c.h.s8.bf16 %v101
    %v366 = vunpack.c.h.s8.bf16 %v102
    %v367 = vunpack.c.h.s8.bf16 %v103
    %v368 = vunpack.c.h.s8.bf16 %v104
    %v369 = vunpack.c.h.s8.bf16 %v105
    %v370 = vunpack.c.h.s8.bf16 %v106
    %v371 = vunpack.c.h.s8.bf16 %v107
    %v372 = vunpack.c.h.s8.bf16 %v108
    %v373 = vunpack.c.l.s8.bf16 %v109
    %v374 = vunpack.c.l.s8.bf16 %v110
    %v375 = vunpack.c.l.s8.bf16 %v111
    %v376 = vunpack.c.l.s8.bf16 %v112
    %v377 = vunpack.c.l.s8.bf16 %v113
    %v378 = vunpack.c.l.s8.bf16 %v114
    %v379 = vunpack.c.l.s8.bf16 %v115
    %v380 = vunpack.c.l.s8.bf16 %v116
    %v381 = vunpack.c.h.s8.bf16 %v109
    %v382 = vunpack.c.h.s8.bf16 %v110
    %v383 = vunpack.c.h.s8.bf16 %v111
    %v384 = vunpack.c.h.s8.bf16 %v112
    %v385 = vunpack.c.h.s8.bf16 %v113
    %v386 = vunpack.c.h.s8.bf16 %v114
    %v387 = vunpack.c.h.s8.bf16 %v115
    %v388 = vunpack.c.h.s8.bf16 %v116
    %v389 = vunpack.c.l.s8.bf16 %v117
    %v390 = vunpack.c.l.s8.bf16 %v118
    %v391 = vunpack.c.l.s8.bf16 %v119
    %v392 = vunpack.c.l.s8.bf16 %v120
    %v393 = vunpack.c.l.s8.bf16 %v121
    %v394 = vunpack.c.l.s8.bf16 %v122
    %v395 = vunpack.c.l.s8.bf16 %v123
    %v396 = vunpack.c.l.s8.bf16 %v124
    %v397 = vunpack.c.h.s8.bf16 %v117
    %v398 = vunpack.c.h.s8.bf16 %v118
    %v399 = vunpack.c.h.s8.bf16 %v119
    %v400 = vunpack.c.h.s8.bf16 %v120
    %v401 = vunpack.c.h.s8.bf16 %v121
    %v402 = vunpack.c.h.s8.bf16 %v122
    %v403 = vunpack.c.h.s8.bf16 %v123
    %v404 = vunpack.c.h.s8.bf16 %v124
    %v405 = vunpack.c.l.s8.bf16 %v125
    %v406 = vunpack.c.l.s8.bf16 %v126
    %v407 = vunpack.c.l.s8.bf16 %v127
    %v408 = vunpack.c.l.s8.bf16 %v128
    %v409 = vunpack.c.l.s8.bf16 %v129
    %v410 = vunpack.c.l.s8.bf16 %v130
    %v411 = vunpack.c.l.s8.bf16 %v131
    %v412 = vunpack.c.l.s8.bf16 %v132
    %v413 = vunpack.c.h.s8.bf16 %v125
    %v414 = vunpack.c.h.s8.bf16 %v126
    %v415 = vunpack.c.h.s8.bf16 %v127
    %v416 = vunpack.c.h.s8.bf16 %v128
    %v417 = vunpack.c.h.s8.bf16 %v129
    %v418 = vunpack.c.h.s8.bf16 %v130
    %v419 = vunpack.c.h.s8.bf16 %v131
    %v420 = vunpack.c.h.s8.bf16 %v132
    %v421 = vunpack.c.l.s8.bf16 %v133
    %v422 = vunpack.c.l.s8.bf16 %v134
    %v423 = vunpack.c.l.s8.bf16 %v135
    %v424 = vunpack.c.l.s8.bf16 %v136
    %v425 = vunpack.c.l.s8.bf16 %v137
    %v426 = vunpack.c.l.s8.bf16 %v138
    %v427 = vunpack.c.l.s8.bf16 %v139
    %v428 = vunpack.c.l.s8.bf16 %v140
    %v429 = vunpack.c.h.s8.bf16 %v133
    %v430 = vunpack.c.h.s8.bf16 %v134
    %v431 = vunpack.c.h.s8.bf16 %v135
    %v432 = vunpack.c.h.s8.bf16 %v136
    %v433 = vunpack.c.h.s8.bf16 %v137
    %v434 = vunpack.c.h.s8.bf16 %v138
    %v435 = vunpack.c.h.s8.bf16 %v139
    %v436 = vunpack.c.h.s8.bf16 %v140
    %v437 = vunpack.c.l.s8.bf16 %v141
    %v438 = vunpack.c.l.s8.bf16 %v142
    %v439 = vunpack.c.l.s8.bf16 %v143
    %v440 = vunpack.c.l.s8.bf16 %v144
    %v441 = vunpack.c.l.s8.bf16 %v145
    %v442 = vunpack.c.l.s8.bf16 %v146
    %v443 = vunpack.c.l.s8.bf16 %v147
    %v444 = vunpack.c.l.s8.bf16 %v148
    %v445 = vunpack.c.h.s8.bf16 %v141
    %v446 = vunpack.c.h.s8.bf16 %v142
    %v447 = vunpack.c.h.s8.bf16 %v143
    %v448 = vunpack.c.h.s8.bf16 %v144
    %v449 = vunpack.c.h.s8.bf16 %v145
    %v450 = vunpack.c.h.s8.bf16 %v146
    %v451 = vunpack.c.h.s8.bf16 %v147
    %v452 = vunpack.c.h.s8.bf16 %v148
    %v453 = vunpack.c.l.s8.bf16 %v149
    %v454 = vunpack.c.l.s8.bf16 %v150
    %v455 = vunpack.c.l.s8.bf16 %v151
    %v456 = vunpack.c.l.s8.bf16 %v152
    %v457 = vunpack.c.l.s8.bf16 %v153
    %v458 = vunpack.c.l.s8.bf16 %v154
    %v459 = vunpack.c.l.s8.bf16 %v155
    %v460 = vunpack.c.l.s8.bf16 %v156
    %v461 = vunpack.c.h.s8.bf16 %v149
    %v462 = vunpack.c.h.s8.bf16 %v150
    %v463 = vunpack.c.h.s8.bf16 %v151
    %v464 = vunpack.c.h.s8.bf16 %v152
    %v465 = vunpack.c.h.s8.bf16 %v153
    %v466 = vunpack.c.h.s8.bf16 %v154
    %v467 = vunpack.c.h.s8.bf16 %v155
    %v468 = vunpack.c.h.s8.bf16 %v156
    %v469 = vunpack.c.l.s8.bf16 %v157
    %v470 = vunpack.c.l.s8.bf16 %v158
    %v471 = vunpack.c.l.s8.bf16 %v159
    %v472 = vunpack.c.l.s8.bf16 %v160
    %v473 = vunpack.c.l.s8.bf16 %v161
    %v474 = vunpack.c.l.s8.bf16 %v162
    %v475 = vunpack.c.l.s8.bf16 %v163
    %v476 = vunpack.c.l.s8.bf16 %v164
    %v477 = vunpack.c.h.s8.bf16 %v157
    %v478 = vunpack.c.h.s8.bf16 %v158
    %v479 = vunpack.c.h.s8.bf16 %v159
    %v480 = vunpack.c.h.s8.bf16 %v160
    %v481 = vunpack.c.h.s8.bf16 %v161
    %v482 = vunpack.c.h.s8.bf16 %v162
    %v483 = vunpack.c.h.s8.bf16 %v163
    %v484 = vunpack.c.h.s8.bf16 %v164
    %v485 = vunpack.c.l.s8.bf16 %v165
    %v486 = vunpack.c.l.s8.bf16 %v166
    %v487 = vunpack.c.l.s8.bf16 %v167
    %v488 = vunpack.c.l.s8.bf16 %v168
    %v489 = vunpack.c.l.s8.bf16 %v169
    %v490 = vunpack.c.l.s8.bf16 %v170
    %v491 = vunpack.c.l.s8.bf16 %v171
    %v492 = vunpack.c.l.s8.bf16 %v172
    %v493 = vunpack.c.h.s8.bf16 %v165
    %v494 = vunpack.c.h.s8.bf16 %v166
    %v495 = vunpack.c.h.s8.bf16 %v167
    %v496 = vunpack.c.h.s8.bf16 %v168
    %v497 = vunpack.c.h.s8.bf16 %v169
    %v498 = vunpack.c.h.s8.bf16 %v170
    %v499 = vunpack.c.h.s8.bf16 %v171
    %v500 = vunpack.c.h.s8.bf16 %v172
    %v501 = vunpack.c.l.s8.bf16 %v173
    %v502 = vunpack.c.l.s8.bf16 %v174
    %v503 = vunpack.c.l.s8.bf16 %v175
    %v504 = vunpack.c.l.s8.bf16 %v176
    %v505 = vunpack.c.l.s8.bf16 %v177
    %v506 = vunpack.c.l.s8.bf16 %v178
    %v507 = vunpack.c.l.s8.bf16 %v179
    %v508 = vunpack.c.l.s8.bf16 %v180
    %v509 = vunpack.c.h.s8.bf16 %v173
    %v510 = vunpack.c.h.s8.bf16 %v174
    %v511 = vunpack.c.h.s8.bf16 %v175
    %v512 = vunpack.c.h.s8.bf16 %v176
    %v513 = vunpack.c.h.s8.bf16 %v177
    %v514 = vunpack.c.h.s8.bf16 %v178
    %v515 = vunpack.c.h.s8.bf16 %v179
    %v516 = vunpack.c.h.s8.bf16 %v180
    %v517 = vunpack.c.l.s8.bf16 %v181
    %v518 = vunpack.c.l.s8.bf16 %v182
    %v519 = vunpack.c.l.s8.bf16 %v183
    %v520 = vunpack.c.l.s8.bf16 %v184
    %v521 = vunpack.c.l.s8.bf16 %v185
    %v522 = vunpack.c.l.s8.bf16 %v186
    %v523 = vunpack.c.l.s8.bf16 %v187
    %v524 = vunpack.c.l.s8.bf16 %v188
    %v525 = vunpack.c.h.s8.bf16 %v181
    %v526 = vunpack.c.h.s8.bf16 %v182
    %v527 = vunpack.c.h.s8.bf16 %v183
    %v528 = vunpack.c.h.s8.bf16 %v184
    %v529 = vunpack.c.h.s8.bf16 %v185
    %v530 = vunpack.c.h.s8.bf16 %v186
    %v531 = vunpack.c.h.s8.bf16 %v187
    %v532 = vunpack.c.h.s8.bf16 %v188
    %v533 = vunpack.c.l.s8.bf16 %v189
    %v534 = vunpack.c.l.s8.bf16 %v190
    %v535 = vunpack.c.l.s8.bf16 %v191
    %v536 = vunpack.c.l.s8.bf16 %v192
    %v537 = vunpack.c.l.s8.bf16 %v193
    %v538 = vunpack.c.l.s8.bf16 %v194
    %v539 = vunpack.c.l.s8.bf16 %v195
    %v540 = vunpack.c.l.s8.bf16 %v196
    %v541 = vunpack.c.h.s8.bf16 %v189
    %v542 = vunpack.c.h.s8.bf16 %v190
    %v543 = vunpack.c.h.s8.bf16 %v191
    %v544 = vunpack.c.h.s8.bf16 %v192
    %v545 = vunpack.c.h.s8.bf16 %v193
    %v546 = vunpack.c.h.s8.bf16 %v194
    %v547 = vunpack.c.h.s8.bf16 %v195
    %v548 = vunpack.c.h.s8.bf16 %v196
    %v549 = vunpack.c.l.s8.bf16 %v197
    %v550 = vunpack.c.l.s8.bf16 %v198
    %v551 = vunpack.c.l.s8.bf16 %v199
    %v552 = vunpack.c.l.s8.bf16 %v200
    %v553 = vunpack.c.l.s8.bf16 %v201
    %v554 = vunpack.c.l.s8.bf16 %v202
    %v555 = vunpack.c.l.s8.bf16 %v203
    %v556 = vunpack.c.l.s8.bf16 %v204
    %v557 = vunpack.c.h.s8.bf16 %v197
    %v558 = vunpack.c.h.s8.bf16 %v198
    %v559 = vunpack.c.h.s8.bf16 %v199
    %v560 = vunpack.c.h.s8.bf16 %v200
    %v561 = vunpack.c.h.s8.bf16 %v201
    %v562 = vunpack.c.h.s8.bf16 %v202
    %v563 = vunpack.c.h.s8.bf16 %v203
    %v564 = vunpack.c.h.s8.bf16 %v204
    %v565 = vunpack.c.l.s8.bf16 %v205
    %v566 = vunpack.c.l.s8.bf16 %v206
    %v567 = vunpack.c.l.s8.bf16 %v207
    %v568 = vunpack.c.l.s8.bf16 %v208
    %v569 = vunpack.c.l.s8.bf16 %v209
    %v570 = vunpack.c.l.s8.bf16 %v210
    %v571 = vunpack.c.l.s8.bf16 %v211
    %v572 = vunpack.c.l.s8.bf16 %v212
    %v573 = vunpack.c.h.s8.bf16 %v205
    %v574 = vunpack.c.h.s8.bf16 %v206
    %v575 = vunpack.c.h.s8.bf16 %v207
    %v576 = vunpack.c.h.s8.bf16 %v208
    %v577 = vunpack.c.h.s8.bf16 %v209
    %v578 = vunpack.c.h.s8.bf16 %v210
    %v579 = vunpack.c.h.s8.bf16 %v211
    %v580 = vunpack.c.h.s8.bf16 %v212
    %v581 = vunpack.c.l.s8.bf16 %v213
    %v582 = vunpack.c.l.s8.bf16 %v214
    %v583 = vunpack.c.l.s8.bf16 %v215
    %v584 = vunpack.c.l.s8.bf16 %v216
    %v585 = vunpack.c.l.s8.bf16 %v217
    %v586 = vunpack.c.l.s8.bf16 %v218
    %v587 = vunpack.c.l.s8.bf16 %v219
    %v588 = vunpack.c.l.s8.bf16 %v220
    %v589 = vunpack.c.h.s8.bf16 %v213
    %v590 = vunpack.c.h.s8.bf16 %v214
    %v591 = vunpack.c.h.s8.bf16 %v215
    %v592 = vunpack.c.h.s8.bf16 %v216
    %v593 = vunpack.c.h.s8.bf16 %v217
    %v594 = vunpack.c.h.s8.bf16 %v218
    %v595 = vunpack.c.h.s8.bf16 %v219
    %v596 = vunpack.c.h.s8.bf16 %v220
    %v597 = vunpack.c.l.s8.bf16 %v221
    %v598 = vunpack.c.l.s8.bf16 %v222
    %v599 = vunpack.c.l.s8.bf16 %v223
    %v600 = vunpack.c.l.s8.bf16 %v224
    %v601 = vunpack.c.l.s8.bf16 %v225
    %v602 = vunpack.c.l.s8.bf16 %v226
    %v603 = vunpack.c.l.s8.bf16 %v227
    %v604 = vunpack.c.l.s8.bf16 %v228
    %v605 = vunpack.c.h.s8.bf16 %v221
    %v606 = vunpack.c.h.s8.bf16 %v222
    %v607 = vunpack.c.h.s8.bf16 %v223
    %v608 = vunpack.c.h.s8.bf16 %v224
    %v609 = vunpack.c.h.s8.bf16 %v225
    %v610 = vunpack.c.h.s8.bf16 %v226
    %v611 = vunpack.c.h.s8.bf16 %v227
    %v612 = vunpack.c.h.s8.bf16 %v228
    %v616 = vunpack.c.l.b16 %v34
    %v617 = vunpack.c.h.b16 %v34
    %v618 = vunpack.c.l.b16 %v35
    %v619 = vunpack.c.h.b16 %v35
    %v620 = vunpack.c.l.b16 %v36
    %v621 = vunpack.c.h.b16 %v36
    %v622 = vpack.c.b16 %v616, %v616
    %v623 = vpack.c.b16 %v617, %v617
    %v624 = vpack.c.b16 %v618, %v618
    %v625 = vpack.c.b16 %v619, %v619
    %v626 = vpack.c.b16 %v620, %v620
    %v627 = vpack.c.b16 %v621, %v621
    %634 = vmatprep.subr.bf16.mxu0 %v230
    %635 = vmatpush1.bf16.msra.mxu0 %v229
    %636 = vmatprep.subr.bf16.mxu0 %v238
    %637 = vmatpush1.bf16.msra.mxu0 %v237
    %638 = vmatprep.subr.bf16.mxu0 %v246
    %639 = vmatpush1.bf16.msra.mxu0 %v245
    %640 = vmatprep.subr.bf16.mxu0 %v254
    %641 = vmatpush1.bf16.msra.mxu0 %v253
    %642 = vmatprep.subr.bf16.mxu0 %v262
    %643 = vmatpush1.bf16.msra.mxu0 %v261
    %644 = vmatprep.subr.bf16.mxu0 %v270
    %645 = vmatpush1.bf16.msra.mxu0 %v269
    %646 = vmatprep.subr.bf16.mxu0 %v278
    %647 = vmatpush1.bf16.msra.mxu0 %v277
    %648 = vmatprep.subr.bf16.mxu0 %v286
    %649 = vmatpush1.bf16.msra.mxu0 %v285
    %650 = vmatprep.subr.bf16.mxu0 %v294
    %651 = vmatpush1.bf16.msra.mxu0 %v293
    %652 = vmatprep.subr.bf16.mxu0 %v302
    %653 = vmatpush1.bf16.msra.mxu0 %v301
    %654 = vmatprep.subr.bf16.mxu0 %v310
    %655 = vmatpush1.bf16.msra.mxu0 %v309
    %656 = vmatprep.subr.bf16.mxu0 %v318
    %657 = vmatpush1.bf16.msra.mxu0 %v317
    %658 = vmatprep.subr.bf16.mxu0 %v326
    %659 = vmatpush1.bf16.msra.mxu0 %v325
    %660 = vmatprep.subr.bf16.mxu0 %v334
    %661 = vmatpush1.bf16.msra.mxu0 %v333
    %662 = vmatprep.subr.bf16.mxu0 %v342
    %663 = vmatpush1.bf16.msra.mxu0 %v341
    %664 = vmatprep.subr.bf16.mxu0 %v350
    %665 = vmatpush1.bf16.msra.mxu0 %v349
    %666 = vmatprep.mubr.bf16.mxu0 %v623
    %667 = vmatmul.mubr.bf16.gmra.mrb[0].mxu0 %v622
    %v668 = vpop.f32.mrb[0].mxu0
    %v669 = vadd.f32 0.0, %v668
    %v670 = vpop.f32.mrb[0].mxu0
    %v671 = vadd.f32 0.0, %v670
    %v672 = vpop.f32.mrb[0].mxu0
    %v673 = vpop.f32.mrb[0].mxu0
    %674 = vdwg.mxu0
    %675 = vmatprep.subr.bf16.mxu0 %v358
    %676 = vmatpush1.bf16.msra.mxu0 %v357
    %677 = vmatprep.subr.bf16.mxu0 %v366
    %678 = vmatpush1.bf16.msra.mxu0 %v365
    %679 = vmatprep.subr.bf16.mxu0 %v374
    %680 = vmatpush1.bf16.msra.mxu0 %v373
    %681 = vmatprep.subr.bf16.mxu0 %v382
    %682 = vmatpush1.bf16.msra.mxu0 %v381
    %683 = vmatprep.subr.bf16.mxu0 %v390
    %684 = vmatpush1.bf16.msra.mxu0 %v389
    %685 = vmatprep.subr.bf16.mxu0 %v398
    %686 = vmatpush1.bf16.msra.mxu0 %v397
    %687 = vmatprep.subr.bf16.mxu0 %v406
    %688 = vmatpush1.bf16.msra.mxu0 %v405
    %689 = vmatprep.subr.bf16.mxu0 %v414
    %690 = vmatpush1.bf16.msra.mxu0 %v413
    %691 = vmatprep.subr.bf16.mxu0 %v422
    %692 = vmatpush1.bf16.msra.mxu0 %v421
    %693 = vmatprep.subr.bf16.mxu0 %v430
    %694 = vmatpush1.bf16.msra.mxu0 %v429
    %695 = vmatprep.subr.bf16.mxu0 %v438
    %696 = vmatpush1.bf16.msra.mxu0 %v437
    %697 = vmatprep.subr.bf16.mxu0 %v446
    %698 = vmatpush1.bf16.msra.mxu0 %v445
    %699 = vmatprep.subr.bf16.mxu0 %v454
    %700 = vmatpush1.bf16.msra.mxu0 %v453
    %701 = vmatprep.subr.bf16.mxu0 %v462
    %702 = vmatpush1.bf16.msra.mxu0 %v461
    %703 = vmatprep.subr.bf16.mxu0 %v470
    %704 = vmatpush1.bf16.msra.mxu0 %v469
    %705 = vmatprep.subr.bf16.mxu0 %v478
    %706 = vmatpush1.bf16.msra.mxu0 %v477
    %707 = vmatprep.mubr.bf16.mxu0 %v625
    %708 = vmatmul.mubr.bf16.gmra.mrb[0].mxu0 %v624
    %v709 = vpop.f32.mrb[0].mxu0
    %v710 = vadd.f32 %v669, %v709
    %v711 = vpop.f32.mrb[0].mxu0
    %v712 = vadd.f32 %v671, %v711
    %v713 = vpop.f32.mrb[0].mxu0
    %v714 = vpop.f32.mrb[0].mxu0
    %715 = vdwg.mxu0
    %716 = vmatprep.subr.bf16.mxu0 %v486
    %717 = vmatpush1.bf16.msra.mxu0 %v485
    %718 = vmatprep.subr.bf16.mxu0 %v494
    %719 = vmatpush1.bf16.msra.mxu0 %v493
    %720 = vmatprep.subr.bf16.mxu0 %v502
    %721 = vmatpush1.bf16.msra.mxu0 %v501
    %722 = vmatprep.subr.bf16.mxu0 %v510
    %723 = vmatpush1.bf16.msra.mxu0 %v509
    %724 = vmatprep.subr.bf16.mxu0 %v518
    %725 = vmatpush1.bf16.msra.mxu0 %v517
    %726 = vmatprep.subr.bf16.mxu0 %v526
    %727 = vmatpush1.bf16.msra.mxu0 %v525
    %728 = vmatprep.subr.bf16.mxu0 %v534
    %729 = vmatpush1.bf16.msra.mxu0 %v533
    %730 = vmatprep.subr.bf16.mxu0 %v542
    %731 = vmatpush1.bf16.msra.mxu0 %v541
    %732 = vmatprep.subr.bf16.mxu0 %v550
    %733 = vmatpush1.bf16.msra.mxu0 %v549
    %734 = vmatprep.subr.bf16.mxu0 %v558
    %735 = vmatpush1.bf16.msra.mxu0 %v557
    %736 = vmatprep.subr.bf16.mxu0 %v566
    %737 = vmatpush1.bf16.msra.mxu0 %v565
    %738 = vmatprep.subr.bf16.mxu0 %v574
    %739 = vmatpush1.bf16.msra.mxu0 %v573
    %740 = vmatprep.subr.bf16.mxu0 %v582
    %741 = vmatpush1.bf16.msra.mxu0 %v581
    %742 = vmatprep.subr.bf16.mxu0 %v590
    %743 = vmatpush1.bf16.msra.mxu0 %v589
    %744 = vmatprep.subr.bf16.mxu0 %v598
    %745 = vmatpush1.bf16.msra.mxu0 %v597
    %746 = vmatprep.subr.bf16.mxu0 %v606
    %747 = vmatpush1.bf16.msra.mxu0 %v605
    %748 = vmatprep.mubr.bf16.mxu0 %v627
    %749 = vmatmul.mubr.bf16.gmra.mrb[0].mxu0 %v626
    %v750 = vpop.f32.mrb[0].mxu0
    %v751 = vadd.f32 %v710, %v750
    %v752 = vpop.f32.mrb[0].mxu0
    %v753 = vadd.f32 %v712, %v752
    %v754 = vpop.f32.mrb[0].mxu0
    %v755 = vpop.f32.mrb[0].mxu0
    %756 = vdwg.mxu0
    %757 = vmatprep.subr.bf16.mxu0 %v232
    %758 = vmatpush1.bf16.msra.mxu0 %v231
    %759 = vmatprep.subr.bf16.mxu0 %v240
    %760 = vmatpush1.bf16.msra.mxu0 %v239
    %761 = vmatprep.subr.bf16.mxu0 %v248
    %762 = vmatpush1.bf16.msra.mxu0 %v247
    %763 = vmatprep.subr.bf16.mxu0 %v256
    %764 = vmatpush1.bf16.msra.mxu0 %v255
    %765 = vmatprep.subr.bf16.mxu0 %v264
    %766 = vmatpush1.bf16.msra.mxu0 %v263
    %767 = vmatprep.subr.bf16.mxu0 %v272
    %768 = vmatpush1.bf16.msra.mxu0 %v271
    %769 = vmatprep.subr.bf16.mxu0 %v280
    %770 = vmatpush1.bf16.msra.mxu0 %v279
    %771 = vmatprep.subr.bf16.mxu0 %v288
    %772 = vmatpush1.bf16.msra.mxu0 %v287
    %773 = vmatprep.subr.bf16.mxu0 %v296
    %774 = vmatpush1.bf16.msra.mxu0 %v295
    %775 = vmatprep.subr.bf16.mxu0 %v304
    %776 = vmatpush1.bf16.msra.mxu0 %v303
    %777 = vmatprep.subr.bf16.mxu0 %v312
    %778 = vmatpush1.bf16.msra.mxu0 %v311
    %779 = vmatprep.subr.bf16.mxu0 %v320
    %780 = vmatpush1.bf16.msra.mxu0 %v319
    %781 = vmatprep.subr.bf16.mxu0 %v328
    %782 = vmatpush1.bf16.msra.mxu0 %v327
    %783 = vmatprep.subr.bf16.mxu0 %v336
    %784 = vmatpush1.bf16.msra.mxu0 %v335
    %785 = vmatprep.subr.bf16.mxu0 %v344
    %786 = vmatpush1.bf16.msra.mxu0 %v343
    %787 = vmatprep.subr.bf16.mxu0 %v352
    %788 = vmatpush1.bf16.msra.mxu0 %v351
    %789 = vmatprep.mubr.bf16.mxu0 %v623
    %790 = vmatmul.mubr.bf16.gmra.mrb[0].mxu0 %v622
    %v791 = vpop.f32.mrb[0].mxu0
    %v792 = vadd.f32 0.0, %v791
    %v793 = vpop.f32.mrb[0].mxu0
    %v794 = vadd.f32 0.0, %v793
    %v795 = vpop.f32.mrb[0].mxu0
    %v796 = vpop.f32.mrb[0].mxu0
    %797 = vdwg.mxu0
    %798 = vmatprep.subr.bf16.mxu0 %v360
    %799 = vmatpush1.bf16.msra.mxu0 %v359
    %800 = vmatprep.subr.bf16.mxu0 %v368
    %801 = vmatpush1.bf16.msra.mxu0 %v367
    %802 = vmatprep.subr.bf16.mxu0 %v376
    %803 = vmatpush1.bf16.msra.mxu0 %v375
    %804 = vmatprep.subr.bf16.mxu0 %v384
    %805 = vmatpush1.bf16.msra.mxu0 %v383
    %806 = vmatprep.subr.bf16.mxu0 %v392
    %807 = vmatpush1.bf16.msra.mxu0 %v391
    %808 = vmatprep.subr.bf16.mxu0 %v400
    %809 = vmatpush1.bf16.msra.mxu0 %v399
    %810 = vmatprep.subr.bf16.mxu0 %v408
    %811 = vmatpush1.bf16.msra.mxu0 %v407
    %812 = vmatprep.subr.bf16.mxu0 %v416
    %813 = vmatpush1.bf16.msra.mxu0 %v415
    %814 = vmatprep.subr.bf16.mxu0 %v424
    %815 = vmatpush1.bf16.msra.mxu0 %v423
    %816 = vmatprep.subr.bf16.mxu0 %v432
    %817 = vmatpush1.bf16.msra.mxu0 %v431
    %818 = vmatprep.subr.bf16.mxu0 %v440
    %819 = vmatpush1.bf16.msra.mxu0 %v439
    %820 = vmatprep.subr.bf16.mxu0 %v448
    %821 = vmatpush1.bf16.msra.mxu0 %v447
    %822 = vmatprep.subr.bf16.mxu0 %v456
    %823 = vmatpush1.bf16.msra.mxu0 %v455
    %824 = vmatprep.subr.bf16.mxu0 %v464
    %825 = vmatpush1.bf16.msra.mxu0 %v463
    %826 = vmatprep.subr.bf16.mxu0 %v472
    %827 = vmatpush1.bf16.msra.mxu0 %v471
    %828 = vmatprep.subr.bf16.mxu0 %v480
    %829 = vmatpush1.bf16.msra.mxu0 %v479
    %830 = vmatprep.mubr.bf16.mxu0 %v625
    %831 = vmatmul.mubr.bf16.gmra.mrb[0].mxu0 %v624
    %v832 = vpop.f32.mrb[0].mxu0
    %v833 = vadd.f32 %v792, %v832
    %v834 = vpop.f32.mrb[0].mxu0
    %v835 = vadd.f32 %v794, %v834
    %v836 = vpop.f32.mrb[0].mxu0
    %v837 = vpop.f32.mrb[0].mxu0
    %838 = vdwg.mxu0
    %839 = vmatprep.subr.bf16.mxu0 %v488
    %840 = vmatpush1.bf16.msra.mxu0 %v487
    %841 = vmatprep.subr.bf16.mxu0 %v496
    %842 = vmatpush1.bf16.msra.mxu0 %v495
    %843 = vmatprep.subr.bf16.mxu0 %v504
    %844 = vmatpush1.bf16.msra.mxu0 %v503
    %845 = vmatprep.subr.bf16.mxu0 %v512
    %846 = vmatpush1.bf16.msra.mxu0 %v511
    %847 = vmatprep.subr.bf16.mxu0 %v520
    %848 = vmatpush1.bf16.msra.mxu0 %v519
    %849 = vmatprep.subr.bf16.mxu0 %v528
    %850 = vmatpush1.bf16.msra.mxu0 %v527
    %851 = vmatprep.subr.bf16.mxu0 %v536
    %852 = vmatpush1.bf16.msra.mxu0 %v535
    %853 = vmatprep.subr.bf16.mxu0 %v544
    %854 = vmatpush1.bf16.msra.mxu0 %v543
    %855 = vmatprep.subr.bf16.mxu0 %v552
    %856 = vmatpush1.bf16.msra.mxu0 %v551
    %857 = vmatprep.subr.bf16.mxu0 %v560
    %858 = vmatpush1.bf16.msra.mxu0 %v559
    %859 = vmatprep.subr.bf16.mxu0 %v568
    %860 = vmatpush1.bf16.msra.mxu0 %v567
    %861 = vmatprep.subr.bf16.mxu0 %v576
    %862 = vmatpush1.bf16.msra.mxu0 %v575
    %863 = vmatprep.subr.bf16.mxu0 %v584
    %864 = vmatpush1.bf16.msra.mxu0 %v583
    %865 = vmatprep.subr.bf16.mxu0 %v592
    %866 = vmatpush1.bf16.msra.mxu0 %v591
    %867 = vmatprep.subr.bf16.mxu0 %v600
    %868 = vmatpush1.bf16.msra.mxu0 %v599
    %869 = vmatprep.subr.bf16.mxu0 %v608
    %870 = vmatpush1.bf16.msra.mxu0 %v607
    %871 = vmatprep.mubr.bf16.mxu0 %v627
    %872 = vmatmul.mubr.bf16.gmra.mrb[0].mxu0 %v626
    %v873 = vpop.f32.mrb[0].mxu0
    %v874 = vadd.f32 %v833, %v873
    %v875 = vpop.f32.mrb[0].mxu0
    %v876 = vadd.f32 %v835, %v875
    %v877 = vpop.f32.mrb[0].mxu0
    %v878 = vpop.f32.mrb[0].mxu0
    %879 = vdwg.mxu0
    %880 = vmatprep.subr.bf16.mxu0 %v234
    %881 = vmatpush1.bf16.msra.mxu0 %v233
    %882 = vmatprep.subr.bf16.mxu0 %v242
    %883 = vmatpush1.bf16.msra.mxu0 %v241
    %884 = vmatprep.subr.bf16.mxu0 %v250
    %885 = vmatpush1.bf16.msra.mxu0 %v249
    %886 = vmatprep.subr.bf16.mxu0 %v258
    %887 = vmatpush1.bf16.msra.mxu0 %v257
    %888 = vmatprep.subr.bf16.mxu0 %v266
    %889 = vmatpush1.bf16.msra.mxu0 %v265
    %890 = vmatprep.subr.bf16.mxu0 %v274
    %891 = vmatpush1.bf16.msra.mxu0 %v273
    %892 = vmatprep.subr.bf16.mxu0 %v282
    %893 = vmatpush1.bf16.msra.mxu0 %v281
    %894 = vmatprep.subr.bf16.mxu0 %v290
    %895 = vmatpush1.bf16.msra.mxu0 %v289
    %896 = vmatprep.subr.bf16.mxu0 %v298
    %897 = vmatpush1.bf16.msra.mxu0 %v297
    %898 = vmatprep.subr.bf16.mxu0 %v306
    %899 = vmatpush1.bf16.msra.mxu0 %v305
    %900 = vmatprep.subr.bf16.mxu0 %v314
    %901 = vmatpush1.bf16.msra.mxu0 %v313
    %902 = vmatprep.subr.bf16.mxu0 %v322
    %903 = vmatpush1.bf16.msra.mxu0 %v321
    %904 = vmatprep.subr.bf16.mxu0 %v330
    %905 = vmatpush1.bf16.msra.mxu0 %v329
    %906 = vmatprep.subr.bf16.mxu0 %v338
    %907 = vmatpush1.bf16.msra.mxu0 %v337
    %908 = vmatprep.subr.bf16.mxu0 %v346
    %909 = vmatpush1.bf16.msra.mxu0 %v345
    %910 = vmatprep.subr.bf16.mxu0 %v354
    %911 = vmatpush1.bf16.msra.mxu0 %v353
    %912 = vmatprep.mubr.bf16.mxu0 %v623
    %913 = vmatmul.mubr.bf16.gmra.mrb[0].mxu0 %v622
    %v914 = vpop.f32.mrb[0].mxu0
    %v915 = vadd.f32 0.0, %v914
    %v916 = vpop.f32.mrb[0].mxu0
    %v917 = vadd.f32 0.0, %v916
    %v918 = vpop.f32.mrb[0].mxu0
    %v919 = vpop.f32.mrb[0].mxu0
    %920 = vdwg.mxu0
    %921 = vmatprep.subr.bf16.mxu0 %v362
    %922 = vmatpush1.bf16.msra.mxu0 %v361
    %923 = vmatprep.subr.bf16.mxu0 %v370
    %924 = vmatpush1.bf16.msra.mxu0 %v369
    %925 = vmatprep.subr.bf16.mxu0 %v378
    %926 = vmatpush1.bf16.msra.mxu0 %v377
    %927 = vmatprep.subr.bf16.mxu0 %v386
    %928 = vmatpush1.bf16.msra.mxu0 %v385
    %929 = vmatprep.subr.bf16.mxu0 %v394
    %930 = vmatpush1.bf16.msra.mxu0 %v393
    %931 = vmatprep.subr.bf16.mxu0 %v402
    %932 = vmatpush1.bf16.msra.mxu0 %v401
    %933 = vmatprep.subr.bf16.mxu0 %v410
    %934 = vmatpush1.bf16.msra.mxu0 %v409
    %935 = vmatprep.subr.bf16.mxu0 %v418
    %936 = vmatpush1.bf16.msra.mxu0 %v417
    %937 = vmatprep.subr.bf16.mxu0 %v426
    %938 = vmatpush1.bf16.msra.mxu0 %v425
    %939 = vmatprep.subr.bf16.mxu0 %v434
    %940 = vmatpush1.bf16.msra.mxu0 %v433
    %941 = vmatprep.subr.bf16.mxu0 %v442
    %942 = vmatpush1.bf16.msra.mxu0 %v441
    %943 = vmatprep.subr.bf16.mxu0 %v450
    %944 = vmatpush1.bf16.msra.mxu0 %v449
    %945 = vmatprep.subr.bf16.mxu0 %v458
    %946 = vmatpush1.bf16.msra.mxu0 %v457
    %947 = vmatprep.subr.bf16.mxu0 %v466
    %948 = vmatpush1.bf16.msra.mxu0 %v465
    %949 = vmatprep.subr.bf16.mxu0 %v474
    %950 = vmatpush1.bf16.msra.mxu0 %v473
    %951 = vmatprep.subr.bf16.mxu0 %v482
    %952 = vmatpush1.bf16.msra.mxu0 %v481
    %953 = vmatprep.mubr.bf16.mxu0 %v625
    %954 = vmatmul.mubr.bf16.gmra.mrb[0].mxu0 %v624
    %v955 = vpop.f32.mrb[0].mxu0
    %v956 = vadd.f32 %v915, %v955
    %v957 = vpop.f32.mrb[0].mxu0
    %v958 = vadd.f32 %v917, %v957
    %v959 = vpop.f32.mrb[0].mxu0
    %v960 = vpop.f32.mrb[0].mxu0
    %961 = vdwg.mxu0
    %962 = vmatprep.subr.bf16.mxu0 %v490
    %963 = vmatpush1.bf16.msra.mxu0 %v489
    %964 = vmatprep.subr.bf16.mxu0 %v498
    %965 = vmatpush1.bf16.msra.mxu0 %v497
    %966 = vmatprep.subr.bf16.mxu0 %v506
    %967 = vmatpush1.bf16.msra.mxu0 %v505
    %968 = vmatprep.subr.bf16.mxu0 %v514
    %969 = vmatpush1.bf16.msra.mxu0 %v513
    %970 = vmatprep.subr.bf16.mxu0 %v522
    %971 = vmatpush1.bf16.msra.mxu0 %v521
    %972 = vmatprep.subr.bf16.mxu0 %v530
    %973 = vmatpush1.bf16.msra.mxu0 %v529
    %974 = vmatprep.subr.bf16.mxu0 %v538
    %975 = vmatpush1.bf16.msra.mxu0 %v537
    %976 = vmatprep.subr.bf16.mxu0 %v546
    %977 = vmatpush1.bf16.msra.mxu0 %v545
    %978 = vmatprep.subr.bf16.mxu0 %v554
    %979 = vmatpush1.bf16.msra.mxu0 %v553
    %980 = vmatprep.subr.bf16.mxu0 %v562
    %981 = vmatpush1.bf16.msra.mxu0 %v561
    %982 = vmatprep.subr.bf16.mxu0 %v570
    %983 = vmatpush1.bf16.msra.mxu0 %v569
    %984 = vmatprep.subr.bf16.mxu0 %v578
    %985 = vmatpush1.bf16.msra.mxu0 %v577
    %986 = vmatprep.subr.bf16.mxu0 %v586
    %987 = vmatpush1.bf16.msra.mxu0 %v585
    %988 = vmatprep.subr.bf16.mxu0 %v594
    %989 = vmatpush1.bf16.msra.mxu0 %v593
    %990 = vmatprep.subr.bf16.mxu0 %v602
    %991 = vmatpush1.bf16.msra.mxu0 %v601
    %992 = vmatprep.subr.bf16.mxu0 %v610
    %993 = vmatpush1.bf16.msra.mxu0 %v609
    %994 = vmatprep.mubr.bf16.mxu0 %v627
    %995 = vmatmul.mubr.bf16.gmra.mrb[0].mxu0 %v626
    %v996 = vpop.f32.mrb[0].mxu0
    %v997 = vadd.f32 %v956, %v996
    %v998 = vpop.f32.mrb[0].mxu0
    %v999 = vadd.f32 %v958, %v998
    %v1000 = vpop.f32.mrb[0].mxu0
    %v1001 = vpop.f32.mrb[0].mxu0
    %1002 = vdwg.mxu0
    %1003 = vmatprep.subr.bf16.mxu0 %v236
    %1004 = vmatpush1.bf16.msra.mxu0 %v235
    %1005 = vmatprep.subr.bf16.mxu0 %v244
    %1006 = vmatpush1.bf16.msra.mxu0 %v243
    %1007 = vmatprep.subr.bf16.mxu0 %v252
    %1008 = vmatpush1.bf16.msra.mxu0 %v251
    %1009 = vmatprep.subr.bf16.mxu0 %v260
    %1010 = vmatpush1.bf16.msra.mxu0 %v259
    %1011 = vmatprep.subr.bf16.mxu0 %v268
    %1012 = vmatpush1.bf16.msra.mxu0 %v267
    %1013 = vmatprep.subr.bf16.mxu0 %v276
    %1014 = vmatpush1.bf16.msra.mxu0 %v275
    %1015 = vmatprep.subr.bf16.mxu0 %v284
    %1016 = vmatpush1.bf16.msra.mxu0 %v283
    %1017 = vmatprep.subr.bf16.mxu0 %v292
    %1018 = vmatpush1.bf16.msra.mxu0 %v291
    %1019 = vmatprep.subr.bf16.mxu0 %v300
    %1020 = vmatpush1.bf16.msra.mxu0 %v299
    %1021 = vmatprep.subr.bf16.mxu0 %v308
    %1022 = vmatpush1.bf16.msra.mxu0 %v307
    %1023 = vmatprep.subr.bf16.mxu0 %v316
    %1024 = vmatpush1.bf16.msra.mxu0 %v315
    %1025 = vmatprep.subr.bf16.mxu0 %v324
    %1026 = vmatpush1.bf16.msra.mxu0 %v323
    %1027 = vmatprep.subr.bf16.mxu0 %v332
    %1028 = vmatpush1.bf16.msra.mxu0 %v331
    %1029 = vmatprep.subr.bf16.mxu0 %v340
    %1030 = vmatpush1.bf16.msra.mxu0 %v339
    %1031 = vmatprep.subr.bf16.mxu0 %v348
    %1032 = vmatpush1.bf16.msra.mxu0 %v347
    %1033 = vmatprep.subr.bf16.mxu0 %v356
    %1034 = vmatpush1.bf16.msra.mxu0 %v355
    %1035 = vmatprep.mubr.bf16.mxu0 %v623
    %1036 = vmatmul.mubr.bf16.gmra.mrb[0].mxu0 %v622
    %v1037 = vpop.f32.mrb[0].mxu0
    %v1038 = vadd.f32 0.0, %v1037
    %v1039 = vpop.f32.mrb[0].mxu0
    %v1040 = vadd.f32 0.0, %v1039
    %v1041 = vpop.f32.mrb[0].mxu0
    %v1042 = vpop.f32.mrb[0].mxu0
    %1043 = vdwg.mxu0
    %1044 = vmatprep.subr.bf16.mxu0 %v364
    %1045 = vmatpush1.bf16.msra.mxu0 %v363
    %1046 = vmatprep.subr.bf16.mxu0 %v372
    %1047 = vmatpush1.bf16.msra.mxu0 %v371
    %1048 = vmatprep.subr.bf16.mxu0 %v380
    %1049 = vmatpush1.bf16.msra.mxu0 %v379
    %1050 = vmatprep.subr.bf16.mxu0 %v388
    %1051 = vmatpush1.bf16.msra.mxu0 %v387
    %1052 = vmatprep.subr.bf16.mxu0 %v396
    %1053 = vmatpush1.bf16.msra.mxu0 %v395
    %1054 = vmatprep.subr.bf16.mxu0 %v404
    %1055 = vmatpush1.bf16.msra.mxu0 %v403
    %1056 = vmatprep.subr.bf16.mxu0 %v412
    %1057 = vmatpush1.bf16.msra.mxu0 %v411
    %1058 = vmatprep.subr.bf16.mxu0 %v420
    %1059 = vmatpush1.bf16.msra.mxu0 %v419
    %1060 = vmatprep.subr.bf16.mxu0 %v428
    %1061 = vmatpush1.bf16.msra.mxu0 %v427
    %1062 = vmatprep.subr.bf16.mxu0 %v436
    %1063 = vmatpush1.bf16.msra.mxu0 %v435
    %1064 = vmatprep.subr.bf16.mxu0 %v444
    %1065 = vmatpush1.bf16.msra.mxu0 %v443
    %1066 = vmatprep.subr.bf16.mxu0 %v452
    %1067 = vmatpush1.bf16.msra.mxu0 %v451
    %1068 = vmatprep.subr.bf16.mxu0 %v460
    %1069 = vmatpush1.bf16.msra.mxu0 %v459
    %1070 = vmatprep.subr.bf16.mxu0 %v468
    %1071 = vmatpush1.bf16.msra.mxu0 %v467
    %1072 = vmatprep.subr.bf16.mxu0 %v476
    %1073 = vmatpush1.bf16.msra.mxu0 %v475
    %1074 = vmatprep.subr.bf16.mxu0 %v484
    %1075 = vmatpush1.bf16.msra.mxu0 %v483
    %1076 = vmatprep.mubr.bf16.mxu0 %v625
    %1077 = vmatmul.mubr.bf16.gmra.mrb[0].mxu0 %v624
    %v1078 = vpop.f32.mrb[0].mxu0
    %v1079 = vadd.f32 %v1038, %v1078
    %v1080 = vpop.f32.mrb[0].mxu0
    %v1081 = vadd.f32 %v1040, %v1080
    %v1082 = vpop.f32.mrb[0].mxu0
    %v1083 = vpop.f32.mrb[0].mxu0
    %1084 = vdwg.mxu0
    %1085 = vmatprep.subr.bf16.mxu0 %v492
    %1086 = vmatpush1.bf16.msra.mxu0 %v491
    %1087 = vmatprep.subr.bf16.mxu0 %v500
    %1088 = vmatpush1.bf16.msra.mxu0 %v499
    %1089 = vmatprep.subr.bf16.mxu0 %v508
    %1090 = vmatpush1.bf16.msra.mxu0 %v507
    %1091 = vmatprep.subr.bf16.mxu0 %v516
    %1092 = vmatpush1.bf16.msra.mxu0 %v515
    %1093 = vmatprep.subr.bf16.mxu0 %v524
    %1094 = vmatpush1.bf16.msra.mxu0 %v523
    %1095 = vmatprep.subr.bf16.mxu0 %v532
    %1096 = vmatpush1.bf16.msra.mxu0 %v531
    %1097 = vmatprep.subr.bf16.mxu0 %v540
    %1098 = vmatpush1.bf16.msra.mxu0 %v539
    %1099 = vmatprep.subr.bf16.mxu0 %v548
    %1100 = vmatpush1.bf16.msra.mxu0 %v547
    %1101 = vmatprep.subr.bf16.mxu0 %v556
    %1102 = vmatpush1.bf16.msra.mxu0 %v555
    %1103 = vmatprep.subr.bf16.mxu0 %v564
    %1104 = vmatpush1.bf16.msra.mxu0 %v563
    %1105 = vmatprep.subr.bf16.mxu0 %v572
    %1106 = vmatpush1.bf16.msra.mxu0 %v571
    %1107 = vmatprep.subr.bf16.mxu0 %v580
    %1108 = vmatpush1.bf16.msra.mxu0 %v579
    %1109 = vmatprep.subr.bf16.mxu0 %v588
    %1110 = vmatpush1.bf16.msra.mxu0 %v587
    %1111 = vmatprep.subr.bf16.mxu0 %v596
    %1112 = vmatpush1.bf16.msra.mxu0 %v595
    %1113 = vmatprep.subr.bf16.mxu0 %v604
    %1114 = vmatpush1.bf16.msra.mxu0 %v603
    %1115 = vmatprep.subr.bf16.mxu0 %v612
    %1116 = vmatpush1.bf16.msra.mxu0 %v611
    %1117 = vmatprep.mubr.bf16.mxu0 %v627
    %1118 = vmatmul.mubr.bf16.gmra.mrb[0].mxu0 %v626
    %v1119 = vpop.f32.mrb[0].mxu0
    %v1120 = vadd.f32 %v1079, %v1119
    %v1121 = vpop.f32.mrb[0].mxu0
    %v1122 = vadd.f32 %v1081, %v1121
    %v1123 = vpop.f32.mrb[0].mxu0
    %v1124 = vpop.f32.mrb[0].mxu0
    %1125 = vdwg.mxu0
    %v1126 = vld [vmem:[%s2] sm:$0xff]
    %v1128 = vlaneseq
    %v1129 = vshrl.u32 %v1128, 7
    %v1130 = vsub.s32 0, %v1129
    %v1131 = vrot.slane %v1126, %v1130
    %v1132 = vlaneseq
    %v1133 = vshrl.u32 %v1132, 7
    %v1134 = vsub.s32 1, %v1133
    %v1135 = vrot.slane %v1126, %v1134
    %v1136 = vlaneseq
    %v1137 = vshrl.u32 %v1136, 7
    %v1138 = vsub.s32 2, %v1137
    %v1139 = vrot.slane %v1126, %v1138
    %v1140 = vlaneseq
    %v1141 = vshrl.u32 %v1140, 7
    %v1142 = vsub.s32 3, %v1141
    %v1143 = vrot.slane %v1126, %v1142
    %v1144 = vlaneseq
    %v1145 = vshrl.u32 %v1144, 7
    %v1146 = vsub.s32 4, %v1145
    %v1147 = vrot.slane %v1126, %v1146
    %v1148 = vlaneseq
    %v1149 = vshrl.u32 %v1148, 7
    %v1150 = vsub.s32 5, %v1149
    %v1151 = vrot.slane %v1126, %v1150
    %v1152 = vlaneseq
    %v1153 = vshrl.u32 %v1152, 7
    %v1154 = vsub.s32 6, %v1153
    %v1155 = vrot.slane %v1126, %v1154
    %v1156 = vlaneseq
    %v1157 = vshrl.u32 %v1156, 7
    %v1158 = vsub.s32 7, %v1157
    %v1159 = vrot.slane %v1126, %v1158
    %v1168 = vmul.f32 %v751, %v1131
    %v1169 = vmul.f32 %v753, %v1135
    %v1170 = vmul.f32 %v874, %v1139
    %v1171 = vmul.f32 %v876, %v1143
    %v1172 = vmul.f32 %v997, %v1147
    %v1173 = vmul.f32 %v999, %v1151
    %v1174 = vmul.f32 %v1120, %v1155
    %v1175 = vmul.f32 %v1122, %v1159
    %v1176 = vld [vmem:[%s3] sm:$0xff]
    %v1178 = vlaneseq
    %v1179 = vshrl.u32 %v1178, 7
    %v1180 = vsub.s32 0, %v1179
    %v1181 = vrot.slane %v1176, %v1180
    %v1182 = vlaneseq
    %v1183 = vshrl.u32 %v1182, 7
    %v1184 = vsub.s32 1, %v1183
    %v1185 = vrot.slane %v1176, %v1184
    %v1186 = vlaneseq
    %v1187 = vshrl.u32 %v1186, 7
    %v1188 = vsub.s32 2, %v1187
    %v1189 = vrot.slane %v1176, %v1188
    %v1190 = vlaneseq
    %v1191 = vshrl.u32 %v1190, 7
    %v1192 = vsub.s32 3, %v1191
    %v1193 = vrot.slane %v1176, %v1192
    %v1194 = vlaneseq
    %v1195 = vshrl.u32 %v1194, 7
    %v1196 = vsub.s32 4, %v1195
    %v1197 = vrot.slane %v1176, %v1196
    %v1198 = vlaneseq
    %v1199 = vshrl.u32 %v1198, 7
    %v1200 = vsub.s32 5, %v1199
    %v1201 = vrot.slane %v1176, %v1200
    %v1202 = vlaneseq
    %v1203 = vshrl.u32 %v1202, 7
    %v1204 = vsub.s32 6, %v1203
    %v1205 = vrot.slane %v1176, %v1204
    %v1206 = vlaneseq
    %v1207 = vshrl.u32 %v1206, 7
    %v1208 = vsub.s32 7, %v1207
    %v1209 = vrot.slane %v1176, %v1208
    %v1218 = vadd.f32 %v1168, %v1181
    %v1219 = vadd.f32 %v1169, %v1185
    %v1220 = vadd.f32 %v1170, %v1189
    %v1221 = vadd.f32 %v1171, %v1193
    %v1222 = vadd.f32 %v1172, %v1197
    %v1223 = vadd.f32 %v1173, %v1201
    %v1224 = vadd.f32 %v1174, %v1205
    %v1225 = vadd.f32 %v1175, %v1209
    %v1226 = vld [vmem:[%s4] sm:$0xff]
    %v1227 = vld [vmem:[%s4 + $0x8] sm:$0xff]
    %v1228 = vld [vmem:[%s4 + $0x10] sm:$0xff]
    %v1229 = vld [vmem:[%s4 + $0x18] sm:$0xff]
    %v1230 = vld [vmem:[%s4 + $0x20] sm:$0xff]
    %v1231 = vld [vmem:[%s4 + $0x28] sm:$0xff]
    %v1232 = vld [vmem:[%s4 + $0x30] sm:$0xff]
    %v1233 = vld [vmem:[%s4 + $0x38] sm:$0xff]
    %v1234 = vld [vmem:[%s4 + $0x40] sm:$0xff]
    %v1235 = vld [vmem:[%s4 + $0x48] sm:$0xff]
    %v1236 = vld [vmem:[%s4 + $0x50] sm:$0xff]
    %v1237 = vld [vmem:[%s4 + $0x58] sm:$0xff]
    %v1238 = vld [vmem:[%s4 + $0x60] sm:$0xff]
    %v1239 = vld [vmem:[%s4 + $0x68] sm:$0xff]
    %v1240 = vld [vmem:[%s4 + $0x70] sm:$0xff]
    %v1241 = vld [vmem:[%s4 + $0x78] sm:$0xff]
    %v1242 = vld [vmem:[%s4 + $0x80] sm:$0xff]
    %v1243 = vld [vmem:[%s4 + $0x88] sm:$0xff]
    %v1244 = vld [vmem:[%s4 + $0x90] sm:$0xff]
    %v1245 = vld [vmem:[%s4 + $0x98] sm:$0xff]
    %v1246 = vld [vmem:[%s4 + $0xa0] sm:$0xff]
    %v1247 = vld [vmem:[%s4 + $0xa8] sm:$0xff]
    %v1248 = vld [vmem:[%s4 + $0xb0] sm:$0xff]
    %v1249 = vld [vmem:[%s4 + $0xb8] sm:$0xff]
    %v1250 = vld [vmem:[%s4 + $0xc0] sm:$0xff]
    %v1251 = vld [vmem:[%s4 + $0xc8] sm:$0xff]
    %v1252 = vld [vmem:[%s4 + $0xd0] sm:$0xff]
    %v1253 = vld [vmem:[%s4 + $0xd8] sm:$0xff]
    %v1254 = vld [vmem:[%s4 + $0xe0] sm:$0xff]
    %v1255 = vld [vmem:[%s4 + $0xe8] sm:$0xff]
    %v1256 = vld [vmem:[%s4 + $0xf0] sm:$0xff]
    %v1257 = vld [vmem:[%s4 + $0xf8] sm:$0xff]
    %v1258 = vld [vmem:[%s4 + $0x100] sm:$0xff]
    %v1259 = vld [vmem:[%s4 + $0x108] sm:$0xff]
    %v1260 = vld [vmem:[%s4 + $0x110] sm:$0xff]
    %v1261 = vld [vmem:[%s4 + $0x118] sm:$0xff]
    %v1262 = vld [vmem:[%s4 + $0x120] sm:$0xff]
    %v1263 = vld [vmem:[%s4 + $0x128] sm:$0xff]
    %v1264 = vld [vmem:[%s4 + $0x130] sm:$0xff]
    %v1265 = vld [vmem:[%s4 + $0x138] sm:$0xff]
    %v1266 = vld [vmem:[%s4 + $0x140] sm:$0xff]
    %v1267 = vld [vmem:[%s4 + $0x148] sm:$0xff]
    %v1268 = vld [vmem:[%s4 + $0x150] sm:$0xff]
    %v1269 = vld [vmem:[%s4 + $0x158] sm:$0xff]
    %v1270 = vld [vmem:[%s4 + $0x160] sm:$0xff]
    %v1271 = vld [vmem:[%s4 + $0x168] sm:$0xff]
    %v1272 = vld [vmem:[%s4 + $0x170] sm:$0xff]
    %v1273 = vld [vmem:[%s4 + $0x178] sm:$0xff]
    %v1274 = vld [vmem:[%s4 + $0x180] sm:$0xff]
    %v1275 = vld [vmem:[%s4 + $0x188] sm:$0xff]
    %v1276 = vld [vmem:[%s4 + $0x190] sm:$0xff]
    %v1277 = vld [vmem:[%s4 + $0x198] sm:$0xff]
    %v1278 = vld [vmem:[%s4 + $0x1a0] sm:$0xff]
    %v1279 = vld [vmem:[%s4 + $0x1a8] sm:$0xff]
    %v1280 = vld [vmem:[%s4 + $0x1b0] sm:$0xff]
    %v1281 = vld [vmem:[%s4 + $0x1b8] sm:$0xff]
    %v1282 = vld [vmem:[%s4 + $0x1c0] sm:$0xff]
    %v1283 = vld [vmem:[%s4 + $0x1c8] sm:$0xff]
    %v1284 = vld [vmem:[%s4 + $0x1d0] sm:$0xff]
    %v1285 = vld [vmem:[%s4 + $0x1d8] sm:$0xff]
    %v1286 = vld [vmem:[%s4 + $0x1e0] sm:$0xff]
    %v1287 = vld [vmem:[%s4 + $0x1e8] sm:$0xff]
    %v1288 = vld [vmem:[%s4 + $0x1f0] sm:$0xff]
    %v1289 = vld [vmem:[%s4 + $0x1f8] sm:$0xff]
    %v1290 = vld [vmem:[%s4 + $0x200] sm:$0xff]
    %v1291 = vld [vmem:[%s4 + $0x208] sm:$0xff]
    %v1292 = vld [vmem:[%s4 + $0x210] sm:$0xff]
    %v1293 = vld [vmem:[%s4 + $0x218] sm:$0xff]
    %v1294 = vld [vmem:[%s4 + $0x220] sm:$0xff]
    %v1295 = vld [vmem:[%s4 + $0x228] sm:$0xff]
    %v1296 = vld [vmem:[%s4 + $0x230] sm:$0xff]
    %v1297 = vld [vmem:[%s4 + $0x238] sm:$0xff]
    %v1298 = vld [vmem:[%s4 + $0x240] sm:$0xff]
    %v1299 = vld [vmem:[%s4 + $0x248] sm:$0xff]
    %v1300 = vld [vmem:[%s4 + $0x250] sm:$0xff]
    %v1301 = vld [vmem:[%s4 + $0x258] sm:$0xff]
    %v1302 = vld [vmem:[%s4 + $0x260] sm:$0xff]
    %v1303 = vld [vmem:[%s4 + $0x268] sm:$0xff]
    %v1304 = vld [vmem:[%s4 + $0x270] sm:$0xff]
    %v1305 = vld [vmem:[%s4 + $0x278] sm:$0xff]
    %v1306 = vld [vmem:[%s4 + $0x280] sm:$0xff]
    %v1307 = vld [vmem:[%s4 + $0x288] sm:$0xff]
    %v1308 = vld [vmem:[%s4 + $0x290] sm:$0xff]
    %v1309 = vld [vmem:[%s4 + $0x298] sm:$0xff]
    %v1310 = vld [vmem:[%s4 + $0x2a0] sm:$0xff]
    %v1311 = vld [vmem:[%s4 + $0x2a8] sm:$0xff]
    %v1312 = vld [vmem:[%s4 + $0x2b0] sm:$0xff]
    %v1313 = vld [vmem:[%s4 + $0x2b8] sm:$0xff]
    %v1314 = vld [vmem:[%s4 + $0x2c0] sm:$0xff]
    %v1315 = vld [vmem:[%s4 + $0x2c8] sm:$0xff]
    %v1316 = vld [vmem:[%s4 + $0x2d0] sm:$0xff]
    %v1317 = vld [vmem:[%s4 + $0x2d8] sm:$0xff]
    %v1318 = vld [vmem:[%s4 + $0x2e0] sm:$0xff]
    %v1319 = vld [vmem:[%s4 + $0x2e8] sm:$0xff]
    %v1320 = vld [vmem:[%s4 + $0x2f0] sm:$0xff]
    %v1321 = vld [vmem:[%s4 + $0x2f8] sm:$0xff]
    %v1322 = vld [vmem:[%s4 + $0x300] sm:$0xff]
    %v1323 = vld [vmem:[%s4 + $0x308] sm:$0xff]
    %v1324 = vld [vmem:[%s4 + $0x310] sm:$0xff]
    %v1325 = vld [vmem:[%s4 + $0x318] sm:$0xff]
    %v1326 = vld [vmem:[%s4 + $0x320] sm:$0xff]
    %v1327 = vld [vmem:[%s4 + $0x328] sm:$0xff]
    %v1328 = vld [vmem:[%s4 + $0x330] sm:$0xff]
    %v1329 = vld [vmem:[%s4 + $0x338] sm:$0xff]
    %v1330 = vld [vmem:[%s4 + $0x340] sm:$0xff]
    %v1331 = vld [vmem:[%s4 + $0x348] sm:$0xff]
    %v1332 = vld [vmem:[%s4 + $0x350] sm:$0xff]
    %v1333 = vld [vmem:[%s4 + $0x358] sm:$0xff]
    %v1334 = vld [vmem:[%s4 + $0x360] sm:$0xff]
    %v1335 = vld [vmem:[%s4 + $0x368] sm:$0xff]
    %v1336 = vld [vmem:[%s4 + $0x370] sm:$0xff]
    %v1337 = vld [vmem:[%s4 + $0x378] sm:$0xff]
    %v1338 = vld [vmem:[%s4 + $0x380] sm:$0xff]
    %v1339 = vld [vmem:[%s4 + $0x388] sm:$0xff]
    %v1340 = vld [vmem:[%s4 + $0x390] sm:$0xff]
    %v1341 = vld [vmem:[%s4 + $0x398] sm:$0xff]
    %v1342 = vld [vmem:[%s4 + $0x3a0] sm:$0xff]
    %v1343 = vld [vmem:[%s4 + $0x3a8] sm:$0xff]
    %v1344 = vld [vmem:[%s4 + $0x3b0] sm:$0xff]
    %v1345 = vld [vmem:[%s4 + $0x3b8] sm:$0xff]
    %v1346 = vld [vmem:[%s4 + $0x3c0] sm:$0xff]
    %v1347 = vld [vmem:[%s4 + $0x3c8] sm:$0xff]
    %v1348 = vld [vmem:[%s4 + $0x3d0] sm:$0xff]
    %v1349 = vld [vmem:[%s4 + $0x3d8] sm:$0xff]
    %v1350 = vld [vmem:[%s4 + $0x3e0] sm:$0xff]
    %v1351 = vld [vmem:[%s4 + $0x3e8] sm:$0xff]
    %v1352 = vld [vmem:[%s4 + $0x3f0] sm:$0xff]
    %v1353 = vld [vmem:[%s4 + $0x3f8] sm:$0xff]
    %v1354 = vld [vmem:[%s4 + $0x400] sm:$0xff]
    %v1355 = vld [vmem:[%s4 + $0x408] sm:$0xff]
    %v1356 = vld [vmem:[%s4 + $0x410] sm:$0xff]
    %v1357 = vld [vmem:[%s4 + $0x418] sm:$0xff]
    %v1358 = vld [vmem:[%s4 + $0x420] sm:$0xff]
    %v1359 = vld [vmem:[%s4 + $0x428] sm:$0xff]
    %v1360 = vld [vmem:[%s4 + $0x430] sm:$0xff]
    %v1361 = vld [vmem:[%s4 + $0x438] sm:$0xff]
    %v1362 = vld [vmem:[%s4 + $0x440] sm:$0xff]
    %v1363 = vld [vmem:[%s4 + $0x448] sm:$0xff]
    %v1364 = vld [vmem:[%s4 + $0x450] sm:$0xff]
    %v1365 = vld [vmem:[%s4 + $0x458] sm:$0xff]
    %v1366 = vld [vmem:[%s4 + $0x460] sm:$0xff]
    %v1367 = vld [vmem:[%s4 + $0x468] sm:$0xff]
    %v1368 = vld [vmem:[%s4 + $0x470] sm:$0xff]
    %v1369 = vld [vmem:[%s4 + $0x478] sm:$0xff]
    %v1370 = vld [vmem:[%s4 + $0x480] sm:$0xff]
    %v1371 = vld [vmem:[%s4 + $0x488] sm:$0xff]
    %v1372 = vld [vmem:[%s4 + $0x490] sm:$0xff]
    %v1373 = vld [vmem:[%s4 + $0x498] sm:$0xff]
    %v1374 = vld [vmem:[%s4 + $0x4a0] sm:$0xff]
    %v1375 = vld [vmem:[%s4 + $0x4a8] sm:$0xff]
    %v1376 = vld [vmem:[%s4 + $0x4b0] sm:$0xff]
    %v1377 = vld [vmem:[%s4 + $0x4b8] sm:$0xff]
    %v1378 = vld [vmem:[%s4 + $0x4c0] sm:$0xff]
    %v1379 = vld [vmem:[%s4 + $0x4c8] sm:$0xff]
    %v1380 = vld [vmem:[%s4 + $0x4d0] sm:$0xff]
    %v1381 = vld [vmem:[%s4 + $0x4d8] sm:$0xff]
    %v1382 = vld [vmem:[%s4 + $0x4e0] sm:$0xff]
    %v1383 = vld [vmem:[%s4 + $0x4e8] sm:$0xff]
    %v1384 = vld [vmem:[%s4 + $0x4f0] sm:$0xff]
    %v1385 = vld [vmem:[%s4 + $0x4f8] sm:$0xff]
    %v1386 = vld [vmem:[%s4 + $0x500] sm:$0xff]
    %v1387 = vld [vmem:[%s4 + $0x508] sm:$0xff]
    %v1388 = vld [vmem:[%s4 + $0x510] sm:$0xff]
    %v1389 = vld [vmem:[%s4 + $0x518] sm:$0xff]
    %v1390 = vld [vmem:[%s4 + $0x520] sm:$0xff]
    %v1391 = vld [vmem:[%s4 + $0x528] sm:$0xff]
    %v1392 = vld [vmem:[%s4 + $0x530] sm:$0xff]
    %v1393 = vld [vmem:[%s4 + $0x538] sm:$0xff]
    %v1394 = vld [vmem:[%s4 + $0x540] sm:$0xff]
    %v1395 = vld [vmem:[%s4 + $0x548] sm:$0xff]
    %v1396 = vld [vmem:[%s4 + $0x550] sm:$0xff]
    %v1397 = vld [vmem:[%s4 + $0x558] sm:$0xff]
    %v1398 = vld [vmem:[%s4 + $0x560] sm:$0xff]
    %v1399 = vld [vmem:[%s4 + $0x568] sm:$0xff]
    %v1400 = vld [vmem:[%s4 + $0x570] sm:$0xff]
    %v1401 = vld [vmem:[%s4 + $0x578] sm:$0xff]
    %v1402 = vld [vmem:[%s4 + $0x580] sm:$0xff]
    %v1403 = vld [vmem:[%s4 + $0x588] sm:$0xff]
    %v1404 = vld [vmem:[%s4 + $0x590] sm:$0xff]
    %v1405 = vld [vmem:[%s4 + $0x598] sm:$0xff]
    %v1406 = vld [vmem:[%s4 + $0x5a0] sm:$0xff]
    %v1407 = vld [vmem:[%s4 + $0x5a8] sm:$0xff]
    %v1408 = vld [vmem:[%s4 + $0x5b0] sm:$0xff]
    %v1409 = vld [vmem:[%s4 + $0x5b8] sm:$0xff]
    %v1410 = vld [vmem:[%s4 + $0x5c0] sm:$0xff]
    %v1411 = vld [vmem:[%s4 + $0x5c8] sm:$0xff]
    %v1412 = vld [vmem:[%s4 + $0x5d0] sm:$0xff]
    %v1413 = vld [vmem:[%s4 + $0x5d8] sm:$0xff]
    %v1414 = vld [vmem:[%s4 + $0x5e0] sm:$0xff]
    %v1415 = vld [vmem:[%s4 + $0x5e8] sm:$0xff]
    %v1416 = vld [vmem:[%s4 + $0x5f0] sm:$0xff]
    %v1417 = vld [vmem:[%s4 + $0x5f8] sm:$0xff]
    %v1418 = vld [vmem:[%s4 + $0x600] sm:$0xff]
    %v1419 = vld [vmem:[%s4 + $0x608] sm:$0xff]
    %v1420 = vld [vmem:[%s4 + $0x610] sm:$0xff]
    %v1421 = vld [vmem:[%s4 + $0x618] sm:$0xff]
    %v1422 = vld [vmem:[%s4 + $0x620] sm:$0xff]
    %v1423 = vld [vmem:[%s4 + $0x628] sm:$0xff]
    %v1424 = vld [vmem:[%s4 + $0x630] sm:$0xff]
    %v1425 = vld [vmem:[%s4 + $0x638] sm:$0xff]
    %v1426 = vld [vmem:[%s4 + $0x640] sm:$0xff]
    %v1427 = vld [vmem:[%s4 + $0x648] sm:$0xff]
    %v1428 = vld [vmem:[%s4 + $0x650] sm:$0xff]
    %v1429 = vld [vmem:[%s4 + $0x658] sm:$0xff]
    %v1430 = vld [vmem:[%s4 + $0x660] sm:$0xff]
    %v1431 = vld [vmem:[%s4 + $0x668] sm:$0xff]
    %v1432 = vld [vmem:[%s4 + $0x670] sm:$0xff]
    %v1433 = vld [vmem:[%s4 + $0x678] sm:$0xff]
    %v1434 = vld [vmem:[%s4 + $0x680] sm:$0xff]
    %v1435 = vld [vmem:[%s4 + $0x688] sm:$0xff]
    %v1436 = vld [vmem:[%s4 + $0x690] sm:$0xff]
    %v1437 = vld [vmem:[%s4 + $0x698] sm:$0xff]
    %v1438 = vld [vmem:[%s4 + $0x6a0] sm:$0xff]
    %v1439 = vld [vmem:[%s4 + $0x6a8] sm:$0xff]
    %v1440 = vld [vmem:[%s4 + $0x6b0] sm:$0xff]
    %v1441 = vld [vmem:[%s4 + $0x6b8] sm:$0xff]
    %v1442 = vld [vmem:[%s4 + $0x6c0] sm:$0xff]
    %v1443 = vld [vmem:[%s4 + $0x6c8] sm:$0xff]
    %v1444 = vld [vmem:[%s4 + $0x6d0] sm:$0xff]
    %v1445 = vld [vmem:[%s4 + $0x6d8] sm:$0xff]
    %v1446 = vld [vmem:[%s4 + $0x6e0] sm:$0xff]
    %v1447 = vld [vmem:[%s4 + $0x6e8] sm:$0xff]
    %v1448 = vld [vmem:[%s4 + $0x6f0] sm:$0xff]
    %v1449 = vld [vmem:[%s4 + $0x6f8] sm:$0xff]
    %v1450 = vld [vmem:[%s4 + $0x700] sm:$0xff]
    %v1451 = vld [vmem:[%s4 + $0x708] sm:$0xff]
    %v1452 = vld [vmem:[%s4 + $0x710] sm:$0xff]
    %v1453 = vld [vmem:[%s4 + $0x718] sm:$0xff]
    %v1454 = vld [vmem:[%s4 + $0x720] sm:$0xff]
    %v1455 = vld [vmem:[%s4 + $0x728] sm:$0xff]
    %v1456 = vld [vmem:[%s4 + $0x730] sm:$0xff]
    %v1457 = vld [vmem:[%s4 + $0x738] sm:$0xff]
    %v1458 = vld [vmem:[%s4 + $0x740] sm:$0xff]
    %v1459 = vld [vmem:[%s4 + $0x748] sm:$0xff]
    %v1460 = vld [vmem:[%s4 + $0x750] sm:$0xff]
    %v1461 = vld [vmem:[%s4 + $0x758] sm:$0xff]
    %v1462 = vld [vmem:[%s4 + $0x760] sm:$0xff]
    %v1463 = vld [vmem:[%s4 + $0x768] sm:$0xff]
    %v1464 = vld [vmem:[%s4 + $0x770] sm:$0xff]
    %v1465 = vld [vmem:[%s4 + $0x778] sm:$0xff]
    %v1466 = vld [vmem:[%s4 + $0x780] sm:$0xff]
    %v1467 = vld [vmem:[%s4 + $0x788] sm:$0xff]
    %v1468 = vld [vmem:[%s4 + $0x790] sm:$0xff]
    %v1469 = vld [vmem:[%s4 + $0x798] sm:$0xff]
    %v1470 = vld [vmem:[%s4 + $0x7a0] sm:$0xff]
    %v1471 = vld [vmem:[%s4 + $0x7a8] sm:$0xff]
    %v1472 = vld [vmem:[%s4 + $0x7b0] sm:$0xff]
    %v1473 = vld [vmem:[%s4 + $0x7b8] sm:$0xff]
    %v1474 = vld [vmem:[%s4 + $0x7c0] sm:$0xff]
    %v1475 = vld [vmem:[%s4 + $0x7c8] sm:$0xff]
    %v1476 = vld [vmem:[%s4 + $0x7d0] sm:$0xff]
    %v1477 = vld [vmem:[%s4 + $0x7d8] sm:$0xff]
    %v1478 = vld [vmem:[%s4 + $0x7e0] sm:$0xff]
    %v1479 = vld [vmem:[%s4 + $0x7e8] sm:$0xff]
    %v1480 = vld [vmem:[%s4 + $0x7f0] sm:$0xff]
    %v1481 = vld [vmem:[%s4 + $0x7f8] sm:$0xff]
    %v1482 = vunpack.c.l.s8.bf16 %v1226
    %v1483 = vunpack.c.l.s8.bf16 %v1227
    %v1484 = vunpack.c.l.s8.bf16 %v1228
    %v1485 = vunpack.c.l.s8.bf16 %v1229
    %v1486 = vunpack.c.l.s8.bf16 %v1230
    %v1487 = vunpack.c.l.s8.bf16 %v1231
    %v1488 = vunpack.c.l.s8.bf16 %v1232
    %v1489 = vunpack.c.l.s8.bf16 %v1233
    %v1490 = vunpack.c.h.s8.bf16 %v1226
    %v1491 = vunpack.c.h.s8.bf16 %v1227
    %v1492 = vunpack.c.h.s8.bf16 %v1228
    %v1493 = vunpack.c.h.s8.bf16 %v1229
    %v1494 = vunpack.c.h.s8.bf16 %v1230
    %v1495 = vunpack.c.h.s8.bf16 %v1231
    %v1496 = vunpack.c.h.s8.bf16 %v1232
    %v1497 = vunpack.c.h.s8.bf16 %v1233
    %v1498 = vunpack.c.l.s8.bf16 %v1234
    %v1499 = vunpack.c.l.s8.bf16 %v1235
    %v1500 = vunpack.c.l.s8.bf16 %v1236
    %v1501 = vunpack.c.l.s8.bf16 %v1237
    %v1502 = vunpack.c.l.s8.bf16 %v1238
    %v1503 = vunpack.c.l.s8.bf16 %v1239
    %v1504 = vunpack.c.l.s8.bf16 %v1240
    %v1505 = vunpack.c.l.s8.bf16 %v1241
    %v1506 = vunpack.c.h.s8.bf16 %v1234
    %v1507 = vunpack.c.h.s8.bf16 %v1235
    %v1508 = vunpack.c.h.s8.bf16 %v1236
    %v1509 = vunpack.c.h.s8.bf16 %v1237
    %v1510 = vunpack.c.h.s8.bf16 %v1238
    %v1511 = vunpack.c.h.s8.bf16 %v1239
    %v1512 = vunpack.c.h.s8.bf16 %v1240
    %v1513 = vunpack.c.h.s8.bf16 %v1241
    %v1514 = vunpack.c.l.s8.bf16 %v1242
    %v1515 = vunpack.c.l.s8.bf16 %v1243
    %v1516 = vunpack.c.l.s8.bf16 %v1244
    %v1517 = vunpack.c.l.s8.bf16 %v1245
    %v1518 = vunpack.c.l.s8.bf16 %v1246
    %v1519 = vunpack.c.l.s8.bf16 %v1247
    %v1520 = vunpack.c.l.s8.bf16 %v1248
    %v1521 = vunpack.c.l.s8.bf16 %v1249
    %v1522 = vunpack.c.h.s8.bf16 %v1242
    %v1523 = vunpack.c.h.s8.bf16 %v1243
    %v1524 = vunpack.c.h.s8.bf16 %v1244
    %v1525 = vunpack.c.h.s8.bf16 %v1245
    %v1526 = vunpack.c.h.s8.bf16 %v1246
    %v1527 = vunpack.c.h.s8.bf16 %v1247
    %v1528 = vunpack.c.h.s8.bf16 %v1248
    %v1529 = vunpack.c.h.s8.bf16 %v1249
    %v1530 = vunpack.c.l.s8.bf16 %v1250
    %v1531 = vunpack.c.l.s8.bf16 %v1251
    %v1532 = vunpack.c.l.s8.bf16 %v1252
    %v1533 = vunpack.c.l.s8.bf16 %v1253
    %v1534 = vunpack.c.l.s8.bf16 %v1254
    %v1535 = vunpack.c.l.s8.bf16 %v1255
    %v1536 = vunpack.c.l.s8.bf16 %v1256
    %v1537 = vunpack.c.l.s8.bf16 %v1257
    %v1538 = vunpack.c.h.s8.bf16 %v1250
    %v1539 = vunpack.c.h.s8.bf16 %v1251
    %v1540 = vunpack.c.h.s8.bf16 %v1252
    %v1541 = vunpack.c.h.s8.bf16 %v1253
    %v1542 = vunpack.c.h.s8.bf16 %v1254
    %v1543 = vunpack.c.h.s8.bf16 %v1255
    %v1544 = vunpack.c.h.s8.bf16 %v1256
    %v1545 = vunpack.c.h.s8.bf16 %v1257
    %v1546 = vunpack.c.l.s8.bf16 %v1258
    %v1547 = vunpack.c.l.s8.bf16 %v1259
    %v1548 = vunpack.c.l.s8.bf16 %v1260
    %v1549 = vunpack.c.l.s8.bf16 %v1261
    %v1550 = vunpack.c.l.s8.bf16 %v1262
    %v1551 = vunpack.c.l.s8.bf16 %v1263
    %v1552 = vunpack.c.l.s8.bf16 %v1264
    %v1553 = vunpack.c.l.s8.bf16 %v1265
    %v1554 = vunpack.c.h.s8.bf16 %v1258
    %v1555 = vunpack.c.h.s8.bf16 %v1259
    %v1556 = vunpack.c.h.s8.bf16 %v1260
    %v1557 = vunpack.c.h.s8.bf16 %v1261
    %v1558 = vunpack.c.h.s8.bf16 %v1262
    %v1559 = vunpack.c.h.s8.bf16 %v1263
    %v1560 = vunpack.c.h.s8.bf16 %v1264
    %v1561 = vunpack.c.h.s8.bf16 %v1265
    %v1562 = vunpack.c.l.s8.bf16 %v1266
    %v1563 = vunpack.c.l.s8.bf16 %v1267
    %v1564 = vunpack.c.l.s8.bf16 %v1268
    %v1565 = vunpack.c.l.s8.bf16 %v1269
    %v1566 = vunpack.c.l.s8.bf16 %v1270
    %v1567 = vunpack.c.l.s8.bf16 %v1271
    %v1568 = vunpack.c.l.s8.bf16 %v1272
    %v1569 = vunpack.c.l.s8.bf16 %v1273
    %v1570 = vunpack.c.h.s8.bf16 %v1266
    %v1571 = vunpack.c.h.s8.bf16 %v1267
    %v1572 = vunpack.c.h.s8.bf16 %v1268
    %v1573 = vunpack.c.h.s8.bf16 %v1269
    %v1574 = vunpack.c.h.s8.bf16 %v1270
    %v1575 = vunpack.c.h.s8.bf16 %v1271
    %v1576 = vunpack.c.h.s8.bf16 %v1272
    %v1577 = vunpack.c.h.s8.bf16 %v1273
    %v1578 = vunpack.c.l.s8.bf16 %v1274
    %v1579 = vunpack.c.l.s8.bf16 %v1275
    %v1580 = vunpack.c.l.s8.bf16 %v1276
    %v1581 = vunpack.c.l.s8.bf16 %v1277
    %v1582 = vunpack.c.l.s8.bf16 %v1278
    %v1583 = vunpack.c.l.s8.bf16 %v1279
    %v1584 = vunpack.c.l.s8.bf16 %v1280
    %v1585 = vunpack.c.l.s8.bf16 %v1281
    %v1586 = vunpack.c.h.s8.bf16 %v1274
    %v1587 = vunpack.c.h.s8.bf16 %v1275
    %v1588 = vunpack.c.h.s8.bf16 %v1276
    %v1589 = vunpack.c.h.s8.bf16 %v1277
    %v1590 = vunpack.c.h.s8.bf16 %v1278
    %v1591 = vunpack.c.h.s8.bf16 %v1279
    %v1592 = vunpack.c.h.s8.bf16 %v1280
    %v1593 = vunpack.c.h.s8.bf16 %v1281
    %v1594 = vunpack.c.l.s8.bf16 %v1282
    %v1595 = vunpack.c.l.s8.bf16 %v1283
    %v1596 = vunpack.c.l.s8.bf16 %v1284
    %v1597 = vunpack.c.l.s8.bf16 %v1285
    %v1598 = vunpack.c.l.s8.bf16 %v1286
    %v1599 = vunpack.c.l.s8.bf16 %v1287
    %v1600 = vunpack.c.l.s8.bf16 %v1288
    %v1601 = vunpack.c.l.s8.bf16 %v1289
    %v1602 = vunpack.c.h.s8.bf16 %v1282
    %v1603 = vunpack.c.h.s8.bf16 %v1283
    %v1604 = vunpack.c.h.s8.bf16 %v1284
    %v1605 = vunpack.c.h.s8.bf16 %v1285
    %v1606 = vunpack.c.h.s8.bf16 %v1286
    %v1607 = vunpack.c.h.s8.bf16 %v1287
    %v1608 = vunpack.c.h.s8.bf16 %v1288
    %v1609 = vunpack.c.h.s8.bf16 %v1289
    %v1610 = vunpack.c.l.s8.bf16 %v1290
    %v1611 = vunpack.c.l.s8.bf16 %v1291
    %v1612 = vunpack.c.l.s8.bf16 %v1292
    %v1613 = vunpack.c.l.s8.bf16 %v1293
    %v1614 = vunpack.c.l.s8.bf16 %v1294
    %v1615 = vunpack.c.l.s8.bf16 %v1295
    %v1616 = vunpack.c.l.s8.bf16 %v1296
    %v1617 = vunpack.c.l.s8.bf16 %v1297
    %v1618 = vunpack.c.h.s8.bf16 %v1290
    %v1619 = vunpack.c.h.s8.bf16 %v1291
    %v1620 = vunpack.c.h.s8.bf16 %v1292
    %v1621 = vunpack.c.h.s8.bf16 %v1293
    %v1622 = vunpack.c.h.s8.bf16 %v1294
    %v1623 = vunpack.c.h.s8.bf16 %v1295
    %v1624 = vunpack.c.h.s8.bf16 %v1296
    %v1625 = vunpack.c.h.s8.bf16 %v1297
    %v1626 = vunpack.c.l.s8.bf16 %v1298
    %v1627 = vunpack.c.l.s8.bf16 %v1299
    %v1628 = vunpack.c.l.s8.bf16 %v1300
    %v1629 = vunpack.c.l.s8.bf16 %v1301
    %v1630 = vunpack.c.l.s8.bf16 %v1302
    %v1631 = vunpack.c.l.s8.bf16 %v1303
    %v1632 = vunpack.c.l.s8.bf16 %v1304
    %v1633 = vunpack.c.l.s8.bf16 %v1305
    %v1634 = vunpack.c.h.s8.bf16 %v1298
    %v1635 = vunpack.c.h.s8.bf16 %v1299
    %v1636 = vunpack.c.h.s8.bf16 %v1300
    %v1637 = vunpack.c.h.s8.bf16 %v1301
    %v1638 = vunpack.c.h.s8.bf16 %v1302
    %v1639 = vunpack.c.h.s8.bf16 %v1303
    %v1640 = vunpack.c.h.s8.bf16 %v1304
    %v1641 = vunpack.c.h.s8.bf16 %v1305
    %v1642 = vunpack.c.l.s8.bf16 %v1306
    %v1643 = vunpack.c.l.s8.bf16 %v1307
    %v1644 = vunpack.c.l.s8.bf16 %v1308
    %v1645 = vunpack.c.l.s8.bf16 %v1309
    %v1646 = vunpack.c.l.s8.bf16 %v1310
    %v1647 = vunpack.c.l.s8.bf16 %v1311
    %v1648 = vunpack.c.l.s8.bf16 %v1312
    %v1649 = vunpack.c.l.s8.bf16 %v1313
    %v1650 = vunpack.c.h.s8.bf16 %v1306
    %v1651 = vunpack.c.h.s8.bf16 %v1307
    %v1652 = vunpack.c.h.s8.bf16 %v1308
    %v1653 = vunpack.c.h.s8.bf16 %v1309
    %v1654 = vunpack.c.h.s8.bf16 %v1310
    %v1655 = vunpack.c.h.s8.bf16 %v1311
    %v1656 = vunpack.c.h.s8.bf16 %v1312
    %v1657 = vunpack.c.h.s8.bf16 %v1313
    %v1658 = vunpack.c.l.s8.bf16 %v1314
    %v1659 = vunpack.c.l.s8.bf16 %v1315
    %v1660 = vunpack.c.l.s8.bf16 %v1316
    %v1661 = vunpack.c.l.s8.bf16 %v1317
    %v1662 = vunpack.c.l.s8.bf16 %v1318
    %v1663 = vunpack.c.l.s8.bf16 %v1319
    %v1664 = vunpack.c.l.s8.bf16 %v1320
    %v1665 = vunpack.c.l.s8.bf16 %v1321
    %v1666 = vunpack.c.h.s8.bf16 %v1314
    %v1667 = vunpack.c.h.s8.bf16 %v1315
    %v1668 = vunpack.c.h.s8.bf16 %v1316
    %v1669 = vunpack.c.h.s8.bf16 %v1317
    %v1670 = vunpack.c.h.s8.bf16 %v1318
    %v1671 = vunpack.c.h.s8.bf16 %v1319
    %v1672 = vunpack.c.h.s8.bf16 %v1320
    %v1673 = vunpack.c.h.s8.bf16 %v1321
    %v1674 = vunpack.c.l.s8.bf16 %v1322
    %v1675 = vunpack.c.l.s8.bf16 %v1323
    %v1676 = vunpack.c.l.s8.bf16 %v1324
    %v1677 = vunpack.c.l.s8.bf16 %v1325
    %v1678 = vunpack.c.l.s8.bf16 %v1326
    %v1679 = vunpack.c.l.s8.bf16 %v1327
    %v1680 = vunpack.c.l.s8.bf16 %v1328
    %v1681 = vunpack.c.l.s8.bf16 %v1329
    %v1682 = vunpack.c.h.s8.bf16 %v1322
    %v1683 = vunpack.c.h.s8.bf16 %v1323
    %v1684 = vunpack.c.h.s8.bf16 %v1324
    %v1685 = vunpack.c.h.s8.bf16 %v1325
    %v1686 = vunpack.c.h.s8.bf16 %v1326
    %v1687 = vunpack.c.h.s8.bf16 %v1327
    %v1688 = vunpack.c.h.s8.bf16 %v1328
    %v1689 = vunpack.c.h.s8.bf16 %v1329
    %v1690 = vunpack.c.l.s8.bf16 %v1330
    %v1691 = vunpack.c.l.s8.bf16 %v1331
    %v1692 = vunpack.c.l.s8.bf16 %v1332
    %v1693 = vunpack.c.l.s8.bf16 %v1333
    %v1694 = vunpack.c.l.s8.bf16 %v1334
    %v1695 = vunpack.c.l.s8.bf16 %v1335
    %v1696 = vunpack.c.l.s8.bf16 %v1336
    %v1697 = vunpack.c.l.s8.bf16 %v1337
    %v1698 = vunpack.c.h.s8.bf16 %v1330
    %v1699 = vunpack.c.h.s8.bf16 %v1331
    %v1700 = vunpack.c.h.s8.bf16 %v1332
    %v1701 = vunpack.c.h.s8.bf16 %v1333
    %v1702 = vunpack.c.h.s8.bf16 %v1334
    %v1703 = vunpack.c.h.s8.bf16 %v1335
    %v1704 = vunpack.c.h.s8.bf16 %v1336
    %v1705 = vunpack.c.h.s8.bf16 %v1337
    %v1706 = vunpack.c.l.s8.bf16 %v1338
    %v1707 = vunpack.c.l.s8.bf16 %v1339
    %v1708 = vunpack.c.l.s8.bf16 %v1340
    %v1709 = vunpack.c.l.s8.bf16 %v1341
    %v1710 = vunpack.c.l.s8.bf16 %v1342
    %v1711 = vunpack.c.l.s8.bf16 %v1343
    %v1712 = vunpack.c.l.s8.bf16 %v1344
    %v1713 = vunpack.c.l.s8.bf16 %v1345
    %v1714 = vunpack.c.h.s8.bf16 %v1338
    %v1715 = vunpack.c.h.s8.bf16 %v1339
    %v1716 = vunpack.c.h.s8.bf16 %v1340
    %v1717 = vunpack.c.h.s8.bf16 %v1341
    %v1718 = vunpack.c.h.s8.bf16 %v1342
    %v1719 = vunpack.c.h.s8.bf16 %v1343
    %v1720 = vunpack.c.h.s8.bf16 %v1344
    %v1721 = vunpack.c.h.s8.bf16 %v1345
    %v1722 = vunpack.c.l.s8.bf16 %v1346
    %v1723 = vunpack.c.l.s8.bf16 %v1347
    %v1724 = vunpack.c.l.s8.bf16 %v1348
    %v1725 = vunpack.c.l.s8.bf16 %v1349
    %v1726 = vunpack.c.l.s8.bf16 %v1350
    %v1727 = vunpack.c.l.s8.bf16 %v1351
    %v1728 = vunpack.c.l.s8.bf16 %v1352
    %v1729 = vunpack.c.l.s8.bf16 %v1353
    %v1730 = vunpack.c.h.s8.bf16 %v1346
    %v1731 = vunpack.c.h.s8.bf16 %v1347
    %v1732 = vunpack.c.h.s8.bf16 %v1348
    %v1733 = vunpack.c.h.s8.bf16 %v1349
    %v1734 = vunpack.c.h.s8.bf16 %v1350
    %v1735 = vunpack.c.h.s8.bf16 %v1351
    %v1736 = vunpack.c.h.s8.bf16 %v1352
    %v1737 = vunpack.c.h.s8.bf16 %v1353
    %v1738 = vunpack.c.l.s8.bf16 %v1354
    %v1739 = vunpack.c.l.s8.bf16 %v1355
    %v1740 = vunpack.c.l.s8.bf16 %v1356
    %v1741 = vunpack.c.l.s8.bf16 %v1357
    %v1742 = vunpack.c.l.s8.bf16 %v1358
    %v1743 = vunpack.c.l.s8.bf16 %v1359
    %v1744 = vunpack.c.l.s8.bf16 %v1360
    %v1745 = vunpack.c.l.s8.bf16 %v1361
    %v1746 = vunpack.c.h.s8.bf16 %v1354
    %v1747 = vunpack.c.h.s8.bf16 %v1355
    %v1748 = vunpack.c.h.s8.bf16 %v1356
    %v1749 = vunpack.c.h.s8.bf16 %v1357
    %v1750 = vunpack.c.h.s8.bf16 %v1358
    %v1751 = vunpack.c.h.s8.bf16 %v1359
    %v1752 = vunpack.c.h.s8.bf16 %v1360
    %v1753 = vunpack.c.h.s8.bf16 %v1361
    %v1754 = vunpack.c.l.s8.bf16 %v1362
    %v1755 = vunpack.c.l.s8.bf16 %v1363
    %v1756 = vunpack.c.l.s8.bf16 %v1364
    %v1757 = vunpack.c.l.s8.bf16 %v1365
    %v1758 = vunpack.c.l.s8.bf16 %v1366
    %v1759 = vunpack.c.l.s8.bf16 %v1367
    %v1760 = vunpack.c.l.s8.bf16 %v1368
    %v1761 = vunpack.c.l.s8.bf16 %v1369
    %v1762 = vunpack.c.h.s8.bf16 %v1362
    %v1763 = vunpack.c.h.s8.bf16 %v1363
    %v1764 = vunpack.c.h.s8.bf16 %v1364
    %v1765 = vunpack.c.h.s8.bf16 %v1365
    %v1766 = vunpack.c.h.s8.bf16 %v1366
    %v1767 = vunpack.c.h.s8.bf16 %v1367
    %v1768 = vunpack.c.h.s8.bf16 %v1368
    %v1769 = vunpack.c.h.s8.bf16 %v1369
    %v1770 = vunpack.c.l.s8.bf16 %v1370
    %v1771 = vunpack.c.l.s8.bf16 %v1371
    %v1772 = vunpack.c.l.s8.bf16 %v1372
    %v1773 = vunpack.c.l.s8.bf16 %v1373
    %v1774 = vunpack.c.l.s8.bf16 %v1374
    %v1775 = vunpack.c.l.s8.bf16 %v1375
    %v1776 = vunpack.c.l.s8.bf16 %v1376
    %v1777 = vunpack.c.l.s8.bf16 %v1377
    %v1778 = vunpack.c.h.s8.bf16 %v1370
    %v1779 = vunpack.c.h.s8.bf16 %v1371
    %v1780 = vunpack.c.h.s8.bf16 %v1372
    %v1781 = vunpack.c.h.s8.bf16 %v1373
    %v1782 = vunpack.c.h.s8.bf16 %v1374
    %v1783 = vunpack.c.h.s8.bf16 %v1375
    %v1784 = vunpack.c.h.s8.bf16 %v1376
    %v1785 = vunpack.c.h.s8.bf16 %v1377
    %v1786 = vunpack.c.l.s8.bf16 %v1378
    %v1787 = vunpack.c.l.s8.bf16 %v1379
    %v1788 = vunpack.c.l.s8.bf16 %v1380
    %v1789 = vunpack.c.l.s8.bf16 %v1381
    %v1790 = vunpack.c.l.s8.bf16 %v1382
    %v1791 = vunpack.c.l.s8.bf16 %v1383
    %v1792 = vunpack.c.l.s8.bf16 %v1384
    %v1793 = vunpack.c.l.s8.bf16 %v1385
    %v1794 = vunpack.c.h.s8.bf16 %v1378
    %v1795 = vunpack.c.h.s8.bf16 %v1379
    %v1796 = vunpack.c.h.s8.bf16 %v1380
    %v1797 = vunpack.c.h.s8.bf16 %v1381
    %v1798 = vunpack.c.h.s8.bf16 %v1382
    %v1799 = vunpack.c.h.s8.bf16 %v1383
    %v1800 = vunpack.c.h.s8.bf16 %v1384
    %v1801 = vunpack.c.h.s8.bf16 %v1385
    %v1802 = vunpack.c.l.s8.bf16 %v1386
    %v1803 = vunpack.c.l.s8.bf16 %v1387
    %v1804 = vunpack.c.l.s8.bf16 %v1388
    %v1805 = vunpack.c.l.s8.bf16 %v1389
    %v1806 = vunpack.c.l.s8.bf16 %v1390
    %v1807 = vunpack.c.l.s8.bf16 %v1391
    %v1808 = vunpack.c.l.s8.bf16 %v1392
    %v1809 = vunpack.c.l.s8.bf16 %v1393
    %v1810 = vunpack.c.h.s8.bf16 %v1386
    %v1811 = vunpack.c.h.s8.bf16 %v1387
    %v1812 = vunpack.c.h.s8.bf16 %v1388
    %v1813 = vunpack.c.h.s8.bf16 %v1389
    %v1814 = vunpack.c.h.s8.bf16 %v1390
    %v1815 = vunpack.c.h.s8.bf16 %v1391
    %v1816 = vunpack.c.h.s8.bf16 %v1392
    %v1817 = vunpack.c.h.s8.bf16 %v1393
    %v1818 = vunpack.c.l.s8.bf16 %v1394
    %v1819 = vunpack.c.l.s8.bf16 %v1395
    %v1820 = vunpack.c.l.s8.bf16 %v1396
    %v1821 = vunpack.c.l.s8.bf16 %v1397
    %v1822 = vunpack.c.l.s8.bf16 %v1398
    %v1823 = vunpack.c.l.s8.bf16 %v1399
    %v1824 = vunpack.c.l.s8.bf16 %v1400
    %v1825 = vunpack.c.l.s8.bf16 %v1401
    %v1826 = vunpack.c.h.s8.bf16 %v1394
    %v1827 = vunpack.c.h.s8.bf16 %v1395
    %v1828 = vunpack.c.h.s8.bf16 %v1396
    %v1829 = vunpack.c.h.s8.bf16 %v1397
    %v1830 = vunpack.c.h.s8.bf16 %v1398
    %v1831 = vunpack.c.h.s8.bf16 %v1399
    %v1832 = vunpack.c.h.s8.bf16 %v1400
    %v1833 = vunpack.c.h.s8.bf16 %v1401
    %v1834 = vunpack.c.l.s8.bf16 %v1402
    %v1835 = vunpack.c.l.s8.bf16 %v1403
    %v1836 = vunpack.c.l.s8.bf16 %v1404
    %v1837 = vunpack.c.l.s8.bf16 %v1405
    %v1838 = vunpack.c.l.s8.bf16 %v1406
    %v1839 = vunpack.c.l.s8.bf16 %v1407
    %v1840 = vunpack.c.l.s8.bf16 %v1408
    %v1841 = vunpack.c.l.s8.bf16 %v1409
    %v1842 = vunpack.c.h.s8.bf16 %v1402
    %v1843 = vunpack.c.h.s8.bf16 %v1403
    %v1844 = vunpack.c.h.s8.bf16 %v1404
    %v1845 = vunpack.c.h.s8.bf16 %v1405
    %v1846 = vunpack.c.h.s8.bf16 %v1406
    %v1847 = vunpack.c.h.s8.bf16 %v1407
    %v1848 = vunpack.c.h.s8.bf16 %v1408
    %v1849 = vunpack.c.h.s8.bf16 %v1409
    %v1850 = vunpack.c.l.s8.bf16 %v1410
    %v1851 = vunpack.c.l.s8.bf16 %v1411
    %v1852 = vunpack.c.l.s8.bf16 %v1412
    %v1853 = vunpack.c.l.s8.bf16 %v1413
    %v1854 = vunpack.c.l.s8.bf16 %v1414
    %v1855 = vunpack.c.l.s8.bf16 %v1415
    %v1856 = vunpack.c.l.s8.bf16 %v1416
    %v1857 = vunpack.c.l.s8.bf16 %v1417
    %v1858 = vunpack.c.h.s8.bf16 %v1410
    %v1859 = vunpack.c.h.s8.bf16 %v1411
    %v1860 = vunpack.c.h.s8.bf16 %v1412
    %v1861 = vunpack.c.h.s8.bf16 %v1413
    %v1862 = vunpack.c.h.s8.bf16 %v1414
    %v1863 = vunpack.c.h.s8.bf16 %v1415
    %v1864 = vunpack.c.h.s8.bf16 %v1416
    %v1865 = vunpack.c.h.s8.bf16 %v1417
    %v1866 = vunpack.c.l.s8.bf16 %v1418
    %v1867 = vunpack.c.l.s8.bf16 %v1419
    %v1868 = vunpack.c.l.s8.bf16 %v1420
    %v1869 = vunpack.c.l.s8.bf16 %v1421
    %v1870 = vunpack.c.l.s8.bf16 %v1422
    %v1871 = vunpack.c.l.s8.bf16 %v1423
    %v1872 = vunpack.c.l.s8.bf16 %v1424
    %v1873 = vunpack.c.l.s8.bf16 %v1425
    %v1874 = vunpack.c.h.s8.bf16 %v1418
    %v1875 = vunpack.c.h.s8.bf16 %v1419
    %v1876 = vunpack.c.h.s8.bf16 %v1420
    %v1877 = vunpack.c.h.s8.bf16 %v1421
    %v1878 = vunpack.c.h.s8.bf16 %v1422
    %v1879 = vunpack.c.h.s8.bf16 %v1423
    %v1880 = vunpack.c.h.s8.bf16 %v1424
    %v1881 = vunpack.c.h.s8.bf16 %v1425
    %v1882 = vunpack.c.l.s8.bf16 %v1426
    %v1883 = vunpack.c.l.s8.bf16 %v1427
    %v1884 = vunpack.c.l.s8.bf16 %v1428
    %v1885 = vunpack.c.l.s8.bf16 %v1429
    %v1886 = vunpack.c.l.s8.bf16 %v1430
    %v1887 = vunpack.c.l.s8.bf16 %v1431
    %v1888 = vunpack.c.l.s8.bf16 %v1432
    %v1889 = vunpack.c.l.s8.bf16 %v1433
    %v1890 = vunpack.c.h.s8.bf16 %v1426
    %v1891 = vunpack.c.h.s8.bf16 %v1427
    %v1892 = vunpack.c.h.s8.bf16 %v1428
    %v1893 = vunpack.c.h.s8.bf16 %v1429
    %v1894 = vunpack.c.h.s8.bf16 %v1430
    %v1895 = vunpack.c.h.s8.bf16 %v1431
    %v1896 = vunpack.c.h.s8.bf16 %v1432
    %v1897 = vunpack.c.h.s8.bf16 %v1433
    %v1898 = vunpack.c.l.s8.bf16 %v1434
    %v1899 = vunpack.c.l.s8.bf16 %v1435
    %v1900 = vunpack.c.l.s8.bf16 %v1436
    %v1901 = vunpack.c.l.s8.bf16 %v1437
    %v1902 = vunpack.c.l.s8.bf16 %v1438
    %v1903 = vunpack.c.l.s8.bf16 %v1439
    %v1904 = vunpack.c.l.s8.bf16 %v1440
    %v1905 = vunpack.c.l.s8.bf16 %v1441
    %v1906 = vunpack.c.h.s8.bf16 %v1434
    %v1907 = vunpack.c.h.s8.bf16 %v1435
    %v1908 = vunpack.c.h.s8.bf16 %v1436
    %v1909 = vunpack.c.h.s8.bf16 %v1437
    %v1910 = vunpack.c.h.s8.bf16 %v1438
    %v1911 = vunpack.c.h.s8.bf16 %v1439
    %v1912 = vunpack.c.h.s8.bf16 %v1440
    %v1913 = vunpack.c.h.s8.bf16 %v1441
    %v1914 = vunpack.c.l.s8.bf16 %v1442
    %v1915 = vunpack.c.l.s8.bf16 %v1443
    %v1916 = vunpack.c.l.s8.bf16 %v1444
    %v1917 = vunpack.c.l.s8.bf16 %v1445
    %v1918 = vunpack.c.l.s8.bf16 %v1446
    %v1919 = vunpack.c.l.s8.bf16 %v1447
    %v1920 = vunpack.c.l.s8.bf16 %v1448
    %v1921 = vunpack.c.l.s8.bf16 %v1449
    %v1922 = vunpack.c.h.s8.bf16 %v1442
    %v1923 = vunpack.c.h.s8.bf16 %v1443
    %v1924 = vunpack.c.h.s8.bf16 %v1444
    %v1925 = vunpack.c.h.s8.bf16 %v1445
    %v1926 = vunpack.c.h.s8.bf16 %v1446
    %v1927 = vunpack.c.h.s8.bf16 %v1447
    %v1928 = vunpack.c.h.s8.bf16 %v1448
    %v1929 = vunpack.c.h.s8.bf16 %v1449
    %v1930 = vunpack.c.l.s8.bf16 %v1450
    %v1931 = vunpack.c.l.s8.bf16 %v1451
    %v1932 = vunpack.c.l.s8.bf16 %v1452
    %v1933 = vunpack.c.l.s8.bf16 %v1453
    %v1934 = vunpack.c.l.s8.bf16 %v1454
    %v1935 = vunpack.c.l.s8.bf16 %v1455
    %v1936 = vunpack.c.l.s8.bf16 %v1456
    %v1937 = vunpack.c.l.s8.bf16 %v1457
    %v1938 = vunpack.c.h.s8.bf16 %v1450
    %v1939 = vunpack.c.h.s8.bf16 %v1451
    %v1940 = vunpack.c.h.s8.bf16 %v1452
    %v1941 = vunpack.c.h.s8.bf16 %v1453
    %v1942 = vunpack.c.h.s8.bf16 %v1454
    %v1943 = vunpack.c.h.s8.bf16 %v1455
    %v1944 = vunpack.c.h.s8.bf16 %v1456
    %v1945 = vunpack.c.h.s8.bf16 %v1457
    %v1946 = vunpack.c.l.s8.bf16 %v1458
    %v1947 = vunpack.c.l.s8.bf16 %v1459
    %v1948 = vunpack.c.l.s8.bf16 %v1460
    %v1949 = vunpack.c.l.s8.bf16 %v1461
    %v1950 = vunpack.c.l.s8.bf16 %v1462
    %v1951 = vunpack.c.l.s8.bf16 %v1463
    %v1952 = vunpack.c.l.s8.bf16 %v1464
    %v1953 = vunpack.c.l.s8.bf16 %v1465
    %v1954 = vunpack.c.h.s8.bf16 %v1458
    %v1955 = vunpack.c.h.s8.bf16 %v1459
    %v1956 = vunpack.c.h.s8.bf16 %v1460
    %v1957 = vunpack.c.h.s8.bf16 %v1461
    %v1958 = vunpack.c.h.s8.bf16 %v1462
    %v1959 = vunpack.c.h.s8.bf16 %v1463
    %v1960 = vunpack.c.h.s8.bf16 %v1464
    %v1961 = vunpack.c.h.s8.bf16 %v1465
    %v1962 = vunpack.c.l.s8.bf16 %v1466
    %v1963 = vunpack.c.l.s8.bf16 %v1467
    %v1964 = vunpack.c.l.s8.bf16 %v1468
    %v1965 = vunpack.c.l.s8.bf16 %v1469
    %v1966 = vunpack.c.l.s8.bf16 %v1470
    %v1967 = vunpack.c.l.s8.bf16 %v1471
    %v1968 = vunpack.c.l.s8.bf16 %v1472
    %v1969 = vunpack.c.l.s8.bf16 %v1473
    %v1970 = vunpack.c.h.s8.bf16 %v1466
    %v1971 = vunpack.c.h.s8.bf16 %v1467
    %v1972 = vunpack.c.h.s8.bf16 %v1468
    %v1973 = vunpack.c.h.s8.bf16 %v1469
    %v1974 = vunpack.c.h.s8.bf16 %v1470
    %v1975 = vunpack.c.h.s8.bf16 %v1471
    %v1976 = vunpack.c.h.s8.bf16 %v1472
    %v1977 = vunpack.c.h.s8.bf16 %v1473
    %v1978 = vunpack.c.l.s8.bf16 %v1474
    %v1979 = vunpack.c.l.s8.bf16 %v1475
    %v1980 = vunpack.c.l.s8.bf16 %v1476
    %v1981 = vunpack.c.l.s8.bf16 %v1477
    %v1982 = vunpack.c.l.s8.bf16 %v1478
    %v1983 = vunpack.c.l.s8.bf16 %v1479
    %v1984 = vunpack.c.l.s8.bf16 %v1480
    %v1985 = vunpack.c.l.s8.bf16 %v1481
    %v1986 = vunpack.c.h.s8.bf16 %v1474
    %v1987 = vunpack.c.h.s8.bf16 %v1475
    %v1988 = vunpack.c.h.s8.bf16 %v1476
    %v1989 = vunpack.c.h.s8.bf16 %v1477
    %v1990 = vunpack.c.h.s8.bf16 %v1478
    %v1991 = vunpack.c.h.s8.bf16 %v1479
    %v1992 = vunpack.c.h.s8.bf16 %v1480
    %v1993 = vunpack.c.h.s8.bf16 %v1481
    %v1994 = vpack.c.bf16 %v1218, %v1218
    %v1995 = vpack.c.bf16 %v1219, %v1219
    %v1996 = vpack.c.bf16 %v1220, %v1220
    %v1997 = vpack.c.bf16 %v1221, %v1221
    %v1998 = vpack.c.bf16 %v1222, %v1222
    %v1999 = vpack.c.bf16 %v1223, %v1223
    %v2000 = vpack.c.bf16 %v1224, %v1224
    %v2001 = vpack.c.bf16 %v1225, %v1225
    %2002 = vmatprep.subr.bf16.mxu0 %v1483
    %2003 = vmatpush1.bf16.msra.mxu0 %v1482
    %2004 = vmatprep.subr.bf16.mxu0 %v1491
    %2005 = vmatpush1.bf16.msra.mxu0 %v1490
    %2006 = vmatprep.subr.bf16.mxu0 %v1499
    %2007 = vmatpush1.bf16.msra.mxu0 %v1498
    %2008 = vmatprep.subr.bf16.mxu0 %v1507
    %2009 = vmatpush1.bf16.msra.mxu0 %v1506
    %2010 = vmatprep.subr.bf16.mxu0 %v1515
    %2011 = vmatpush1.bf16.msra.mxu0 %v1514
    %2012 = vmatprep.subr.bf16.mxu0 %v1523
    %2013 = vmatpush1.bf16.msra.mxu0 %v1522
    %2014 = vmatprep.subr.bf16.mxu0 %v1531
    %2015 = vmatpush1.bf16.msra.mxu0 %v1530
    %2016 = vmatprep.subr.bf16.mxu0 %v1539
    %2017 = vmatpush1.bf16.msra.mxu0 %v1538
    %2018 = vmatprep.subr.bf16.mxu0 %v1547
    %2019 = vmatpush1.bf16.msra.mxu0 %v1546
    %2020 = vmatprep.subr.bf16.mxu0 %v1555
    %2021 = vmatpush1.bf16.msra.mxu0 %v1554
    %2022 = vmatprep.subr.bf16.mxu0 %v1563
    %2023 = vmatpush1.bf16.msra.mxu0 %v1562
    %2024 = vmatprep.subr.bf16.mxu0 %v1571
    %2025 = vmatpush1.bf16.msra.mxu0 %v1570
    %2026 = vmatprep.subr.bf16.mxu0 %v1579
    %2027 = vmatpush1.bf16.msra.mxu0 %v1578
    %2028 = vmatprep.subr.bf16.mxu0 %v1587
    %2029 = vmatpush1.bf16.msra.mxu0 %v1586
    %2030 = vmatprep.subr.bf16.mxu0 %v1595
    %2031 = vmatpush1.bf16.msra.mxu0 %v1594
    %2032 = vmatprep.subr.bf16.mxu0 %v1603
    %2033 = vmatpush1.bf16.msra.mxu0 %v1602
    %2034 = vmatprep.mubr.bf16.mxu0 %v1995
    %2035 = vmatmul.mubr.bf16.gmra.mrb[0].mxu0 %v1994
    %v2036 = vpop.f32.mrb[0].mxu0
    %v2037 = vadd.f32 0.0, %v2036
    %v2038 = vpop.f32.mrb[0].mxu0
    %v2039 = vadd.f32 0.0, %v2038
    %v2040 = vpop.f32.mrb[0].mxu0
    %v2041 = vpop.f32.mrb[0].mxu0
    %2042 = vdwg.mxu0
    %2043 = vmatprep.subr.bf16.mxu0 %v1611
    %2044 = vmatpush1.bf16.msra.mxu0 %v1610
    %2045 = vmatprep.subr.bf16.mxu0 %v1619
    %2046 = vmatpush1.bf16.msra.mxu0 %v1618
    %2047 = vmatprep.subr.bf16.mxu0 %v1627
    %2048 = vmatpush1.bf16.msra.mxu0 %v1626
    %2049 = vmatprep.subr.bf16.mxu0 %v1635
    %2050 = vmatpush1.bf16.msra.mxu0 %v1634
    %2051 = vmatprep.subr.bf16.mxu0 %v1643
    %2052 = vmatpush1.bf16.msra.mxu0 %v1642
    %2053 = vmatprep.subr.bf16.mxu0 %v1651
    %2054 = vmatpush1.bf16.msra.mxu0 %v1650
    %2055 = vmatprep.subr.bf16.mxu0 %v1659
    %2056 = vmatpush1.bf16.msra.mxu0 %v1658
    %2057 = vmatprep.subr.bf16.mxu0 %v1667
    %2058 = vmatpush1.bf16.msra.mxu0 %v1666
    %2059 = vmatprep.subr.bf16.mxu0 %v1675
    %2060 = vmatpush1.bf16.msra.mxu0 %v1674
    %2061 = vmatprep.subr.bf16.mxu0 %v1683
    %2062 = vmatpush1.bf16.msra.mxu0 %v1682
    %2063 = vmatprep.subr.bf16.mxu0 %v1691
    %2064 = vmatpush1.bf16.msra.mxu0 %v1690
    %2065 = vmatprep.subr.bf16.mxu0 %v1699
    %2066 = vmatpush1.bf16.msra.mxu0 %v1698
    %2067 = vmatprep.subr.bf16.mxu0 %v1707
    %2068 = vmatpush1.bf16.msra.mxu0 %v1706
    %2069 = vmatprep.subr.bf16.mxu0 %v1715
    %2070 = vmatpush1.bf16.msra.mxu0 %v1714
    %2071 = vmatprep.subr.bf16.mxu0 %v1723
    %2072 = vmatpush1.bf16.msra.mxu0 %v1722
    %2073 = vmatprep.subr.bf16.mxu0 %v1731
    %2074 = vmatpush1.bf16.msra.mxu0 %v1730
    %2075 = vmatprep.mubr.bf16.mxu0 %v1997
    %2076 = vmatmul.mubr.bf16.gmra.mrb[0].mxu0 %v1996
    %v2077 = vpop.f32.mrb[0].mxu0
    %v2078 = vadd.f32 %v2037, %v2077
    %v2079 = vpop.f32.mrb[0].mxu0
    %v2080 = vadd.f32 %v2039, %v2079
    %v2081 = vpop.f32.mrb[0].mxu0
    %v2082 = vpop.f32.mrb[0].mxu0
    %2083 = vdwg.mxu0
    %2084 = vmatprep.subr.bf16.mxu0 %v1739
    %2085 = vmatpush1.bf16.msra.mxu0 %v1738
    %2086 = vmatprep.subr.bf16.mxu0 %v1747
    %2087 = vmatpush1.bf16.msra.mxu0 %v1746
    %2088 = vmatprep.subr.bf16.mxu0 %v1755
    %2089 = vmatpush1.bf16.msra.mxu0 %v1754
    %2090 = vmatprep.subr.bf16.mxu0 %v1763
    %2091 = vmatpush1.bf16.msra.mxu0 %v1762
    %2092 = vmatprep.subr.bf16.mxu0 %v1771
    %2093 = vmatpush1.bf16.msra.mxu0 %v1770
    %2094 = vmatprep.subr.bf16.mxu0 %v1779
    %2095 = vmatpush1.bf16.msra.mxu0 %v1778
    %2096 = vmatprep.subr.bf16.mxu0 %v1787
    %2097 = vmatpush1.bf16.msra.mxu0 %v1786
    %2098 = vmatprep.subr.bf16.mxu0 %v1795
    %2099 = vmatpush1.bf16.msra.mxu0 %v1794
    %2100 = vmatprep.subr.bf16.mxu0 %v1803
    %2101 = vmatpush1.bf16.msra.mxu0 %v1802
    %2102 = vmatprep.subr.bf16.mxu0 %v1811
    %2103 = vmatpush1.bf16.msra.mxu0 %v1810
    %2104 = vmatprep.subr.bf16.mxu0 %v1819
    %2105 = vmatpush1.bf16.msra.mxu0 %v1818
    %2106 = vmatprep.subr.bf16.mxu0 %v1827
    %2107 = vmatpush1.bf16.msra.mxu0 %v1826
    %2108 = vmatprep.subr.bf16.mxu0 %v1835
    %2109 = vmatpush1.bf16.msra.mxu0 %v1834
    %2110 = vmatprep.subr.bf16.mxu0 %v1843
    %2111 = vmatpush1.bf16.msra.mxu0 %v1842
    %2112 = vmatprep.subr.bf16.mxu0 %v1851
    %2113 = vmatpush1.bf16.msra.mxu0 %v1850
    %2114 = vmatprep.subr.bf16.mxu0 %v1859
    %2115 = vmatpush1.bf16.msra.mxu0 %v1858
    %2116 = vmatprep.mubr.bf16.mxu0 %v1999
    %2117 = vmatmul.mubr.bf16.gmra.mrb[0].mxu0 %v1998
    %v2118 = vpop.f32.mrb[0].mxu0
    %v2119 = vadd.f32 %v2078, %v2118
    %v2120 = vpop.f32.mrb[0].mxu0
    %v2121 = vadd.f32 %v2080, %v2120
    %v2122 = vpop.f32.mrb[0].mxu0
    %v2123 = vpop.f32.mrb[0].mxu0
    %2124 = vdwg.mxu0
    %2125 = vmatprep.subr.bf16.mxu0 %v1867
    %2126 = vmatpush1.bf16.msra.mxu0 %v1866
    %2127 = vmatprep.subr.bf16.mxu0 %v1875
    %2128 = vmatpush1.bf16.msra.mxu0 %v1874
    %2129 = vmatprep.subr.bf16.mxu0 %v1883
    %2130 = vmatpush1.bf16.msra.mxu0 %v1882
    %2131 = vmatprep.subr.bf16.mxu0 %v1891
    %2132 = vmatpush1.bf16.msra.mxu0 %v1890
    %2133 = vmatprep.subr.bf16.mxu0 %v1899
    %2134 = vmatpush1.bf16.msra.mxu0 %v1898
    %2135 = vmatprep.subr.bf16.mxu0 %v1907
    %2136 = vmatpush1.bf16.msra.mxu0 %v1906
    %2137 = vmatprep.subr.bf16.mxu0 %v1915
    %2138 = vmatpush1.bf16.msra.mxu0 %v1914
    %2139 = vmatprep.subr.bf16.mxu0 %v1923
    %2140 = vmatpush1.bf16.msra.mxu0 %v1922
    %2141 = vmatprep.subr.bf16.mxu0 %v1931
    %2142 = vmatpush1.bf16.msra.mxu0 %v1930
    %2143 = vmatprep.subr.bf16.mxu0 %v1939
    %2144 = vmatpush1.bf16.msra.mxu0 %v1938
    %2145 = vmatprep.subr.bf16.mxu0 %v1947
    %2146 = vmatpush1.bf16.msra.mxu0 %v1946
    %2147 = vmatprep.subr.bf16.mxu0 %v1955
    %2148 = vmatpush1.bf16.msra.mxu0 %v1954
    %2149 = vmatprep.subr.bf16.mxu0 %v1963
    %2150 = vmatpush1.bf16.msra.mxu0 %v1962
    %2151 = vmatprep.subr.bf16.mxu0 %v1971
    %2152 = vmatpush1.bf16.msra.mxu0 %v1970
    %2153 = vmatprep.subr.bf16.mxu0 %v1979
    %2154 = vmatpush1.bf16.msra.mxu0 %v1978
    %2155 = vmatprep.subr.bf16.mxu0 %v1987
    %2156 = vmatpush1.bf16.msra.mxu0 %v1986
    %2157 = vmatprep.mubr.bf16.mxu0 %v2001
    %2158 = vmatmul.mubr.bf16.gmra.mrb[0].mxu0 %v2000
    %v2159 = vpop.f32.mrb[0].mxu0
    %v2160 = vadd.f32 %v2119, %v2159
    %v2161 = vpop.f32.mrb[0].mxu0
    %v2162 = vadd.f32 %v2121, %v2161
    %v2163 = vpop.f32.mrb[0].mxu0
    %v2164 = vpop.f32.mrb[0].mxu0
    %2165 = vdwg.mxu0
    %2166 = vmatprep.subr.bf16.mxu0 %v1485
    %2167 = vmatpush1.bf16.msra.mxu0 %v1484
    %2168 = vmatprep.subr.bf16.mxu0 %v1493
    %2169 = vmatpush1.bf16.msra.mxu0 %v1492
    %2170 = vmatprep.subr.bf16.mxu0 %v1501
    %2171 = vmatpush1.bf16.msra.mxu0 %v1500
    %2172 = vmatprep.subr.bf16.mxu0 %v1509
    %2173 = vmatpush1.bf16.msra.mxu0 %v1508
    %2174 = vmatprep.subr.bf16.mxu0 %v1517
    %2175 = vmatpush1.bf16.msra.mxu0 %v1516
    %2176 = vmatprep.subr.bf16.mxu0 %v1525
    %2177 = vmatpush1.bf16.msra.mxu0 %v1524
    %2178 = vmatprep.subr.bf16.mxu0 %v1533
    %2179 = vmatpush1.bf16.msra.mxu0 %v1532
    %2180 = vmatprep.subr.bf16.mxu0 %v1541
    %2181 = vmatpush1.bf16.msra.mxu0 %v1540
    %2182 = vmatprep.subr.bf16.mxu0 %v1549
    %2183 = vmatpush1.bf16.msra.mxu0 %v1548
    %2184 = vmatprep.subr.bf16.mxu0 %v1557
    %2185 = vmatpush1.bf16.msra.mxu0 %v1556
    %2186 = vmatprep.subr.bf16.mxu0 %v1565
    %2187 = vmatpush1.bf16.msra.mxu0 %v1564
    %2188 = vmatprep.subr.bf16.mxu0 %v1573
    %2189 = vmatpush1.bf16.msra.mxu0 %v1572
    %2190 = vmatprep.subr.bf16.mxu0 %v1581
    %2191 = vmatpush1.bf16.msra.mxu0 %v1580
    %2192 = vmatprep.subr.bf16.mxu0 %v1589
    %2193 = vmatpush1.bf16.msra.mxu0 %v1588
    %2194 = vmatprep.subr.bf16.mxu0 %v1597
    %2195 = vmatpush1.bf16.msra.mxu0 %v1596
    %2196 = vmatprep.subr.bf16.mxu0 %v1605
    %2197 = vmatpush1.bf16.msra.mxu0 %v1604
    %2198 = vmatprep.mubr.bf16.mxu0 %v1995
    %2199 = vmatmul.mubr.bf16.gmra.mrb[0].mxu0 %v1994
    %v2200 = vpop.f32.mrb[0].mxu0
    %v2201 = vadd.f32 0.0, %v2200
    %v2202 = vpop.f32.mrb[0].mxu0
    %v2203 = vadd.f32 0.0, %v2202
    %v2204 = vpop.f32.mrb[0].mxu0
    %v2205 = vpop.f32.mrb[0].mxu0
    %2206 = vdwg.mxu0
    %2207 = vmatprep.subr.bf16.mxu0 %v1613
    %2208 = vmatpush1.bf16.msra.mxu0 %v1612
    %2209 = vmatprep.subr.bf16.mxu0 %v1621
    %2210 = vmatpush1.bf16.msra.mxu0 %v1620
    %2211 = vmatprep.subr.bf16.mxu0 %v1629
    %2212 = vmatpush1.bf16.msra.mxu0 %v1628
    %2213 = vmatprep.subr.bf16.mxu0 %v1637
    %2214 = vmatpush1.bf16.msra.mxu0 %v1636
    %2215 = vmatprep.subr.bf16.mxu0 %v1645
    %2216 = vmatpush1.bf16.msra.mxu0 %v1644
    %2217 = vmatprep.subr.bf16.mxu0 %v1653
    %2218 = vmatpush1.bf16.msra.mxu0 %v1652
    %2219 = vmatprep.subr.bf16.mxu0 %v1661
    %2220 = vmatpush1.bf16.msra.mxu0 %v1660
    %2221 = vmatprep.subr.bf16.mxu0 %v1669
    %2222 = vmatpush1.bf16.msra.mxu0 %v1668
    %2223 = vmatprep.subr.bf16.mxu0 %v1677
    %2224 = vmatpush1.bf16.msra.mxu0 %v1676
    %2225 = vmatprep.subr.bf16.mxu0 %v1685
    %2226 = vmatpush1.bf16.msra.mxu0 %v1684
    %2227 = vmatprep.subr.bf16.mxu0 %v1693
    %2228 = vmatpush1.bf16.msra.mxu0 %v1692
    %2229 = vmatprep.subr.bf16.mxu0 %v1701
    %2230 = vmatpush1.bf16.msra.mxu0 %v1700
    %2231 = vmatprep.subr.bf16.mxu0 %v1709
    %2232 = vmatpush1.bf16.msra.mxu0 %v1708
    %2233 = vmatprep.subr.bf16.mxu0 %v1717
    %2234 = vmatpush1.bf16.msra.mxu0 %v1716
    %2235 = vmatprep.subr.bf16.mxu0 %v1725
    %2236 = vmatpush1.bf16.msra.mxu0 %v1724
    %2237 = vmatprep.subr.bf16.mxu0 %v1733
    %2238 = vmatpush1.bf16.msra.mxu0 %v1732
    %2239 = vmatprep.mubr.bf16.mxu0 %v1997
    %2240 = vmatmul.mubr.bf16.gmra.mrb[0].mxu0 %v1996
    %v2241 = vpop.f32.mrb[0].mxu0
    %v2242 = vadd.f32 %v2201, %v2241
    %v2243 = vpop.f32.mrb[0].mxu0
    %v2244 = vadd.f32 %v2203, %v2243
    %v2245 = vpop.f32.mrb[0].mxu0
    %v2246 = vpop.f32.mrb[0].mxu0
    %2247 = vdwg.mxu0
    %2248 = vmatprep.subr.bf16.mxu0 %v1741
    %2249 = vmatpush1.bf16.msra.mxu0 %v1740
    %2250 = vmatprep.subr.bf16.mxu0 %v1749
    %2251 = vmatpush1.bf16.msra.mxu0 %v1748
    %2252 = vmatprep.subr.bf16.mxu0 %v1757
    %2253 = vmatpush1.bf16.msra.mxu0 %v1756
    %2254 = vmatprep.subr.bf16.mxu0 %v1765
    %2255 = vmatpush1.bf16.msra.mxu0 %v1764
    %2256 = vmatprep.subr.bf16.mxu0 %v1773
    %2257 = vmatpush1.bf16.msra.mxu0 %v1772
    %2258 = vmatprep.subr.bf16.mxu0 %v1781
    %2259 = vmatpush1.bf16.msra.mxu0 %v1780
    %2260 = vmatprep.subr.bf16.mxu0 %v1789
    %2261 = vmatpush1.bf16.msra.mxu0 %v1788
    %2262 = vmatprep.subr.bf16.mxu0 %v1797
    %2263 = vmatpush1.bf16.msra.mxu0 %v1796
    %2264 = vmatprep.subr.bf16.mxu0 %v1805
    %2265 = vmatpush1.bf16.msra.mxu0 %v1804
    %2266 = vmatprep.subr.bf16.mxu0 %v1813
    %2267 = vmatpush1.bf16.msra.mxu0 %v1812
    %2268 = vmatprep.subr.bf16.mxu0 %v1821
    %2269 = vmatpush1.bf16.msra.mxu0 %v1820
    %2270 = vmatprep.subr.bf16.mxu0 %v1829
    %2271 = vmatpush1.bf16.msra.mxu0 %v1828
    %2272 = vmatprep.subr.bf16.mxu0 %v1837
    %2273 = vmatpush1.bf16.msra.mxu0 %v1836
    %2274 = vmatprep.subr.bf16.mxu0 %v1845
    %2275 = vmatpush1.bf16.msra.mxu0 %v1844
    %2276 = vmatprep.subr.bf16.mxu0 %v1853
    %2277 = vmatpush1.bf16.msra.mxu0 %v1852
    %2278 = vmatprep.subr.bf16.mxu0 %v1861
    %2279 = vmatpush1.bf16.msra.mxu0 %v1860
    %2280 = vmatprep.mubr.bf16.mxu0 %v1999
    %2281 = vmatmul.mubr.bf16.gmra.mrb[0].mxu0 %v1998
    %v2282 = vpop.f32.mrb[0].mxu0
    %v2283 = vadd.f32 %v2242, %v2282
    %v2284 = vpop.f32.mrb[0].mxu0
    %v2285 = vadd.f32 %v2244, %v2284
    %v2286 = vpop.f32.mrb[0].mxu0
    %v2287 = vpop.f32.mrb[0].mxu0
    %2288 = vdwg.mxu0
    %2289 = vmatprep.subr.bf16.mxu0 %v1869
    %2290 = vmatpush1.bf16.msra.mxu0 %v1868
    %2291 = vmatprep.subr.bf16.mxu0 %v1877
    %2292 = vmatpush1.bf16.msra.mxu0 %v1876
    %2293 = vmatprep.subr.bf16.mxu0 %v1885
    %2294 = vmatpush1.bf16.msra.mxu0 %v1884
    %2295 = vmatprep.subr.bf16.mxu0 %v1893
    %2296 = vmatpush1.bf16.msra.mxu0 %v1892
    %2297 = vmatprep.subr.bf16.mxu0 %v1901
    %2298 = vmatpush1.bf16.msra.mxu0 %v1900
    %2299 = vmatprep.subr.bf16.mxu0 %v1909
    %2300 = vmatpush1.bf16.msra.mxu0 %v1908
    %2301 = vmatprep.subr.bf16.mxu0 %v1917
    %2302 = vmatpush1.bf16.msra.mxu0 %v1916
    %2303 = vmatprep.subr.bf16.mxu0 %v1925
    %2304 = vmatpush1.bf16.msra.mxu0 %v1924
    %2305 = vmatprep.subr.bf16.mxu0 %v1933
    %2306 = vmatpush1.bf16.msra.mxu0 %v1932
    %2307 = vmatprep.subr.bf16.mxu0 %v1941
    %2308 = vmatpush1.bf16.msra.mxu0 %v1940
    %2309 = vmatprep.subr.bf16.mxu0 %v1949
    %2310 = vmatpush1.bf16.msra.mxu0 %v1948
    %2311 = vmatprep.subr.bf16.mxu0 %v1957
    %2312 = vmatpush1.bf16.msra.mxu0 %v1956
    %2313 = vmatprep.subr.bf16.mxu0 %v1965
    %2314 = vmatpush1.bf16.msra.mxu0 %v1964
    %2315 = vmatprep.subr.bf16.mxu0 %v1973
    %2316 = vmatpush1.bf16.msra.mxu0 %v1972
    %2317 = vmatprep.subr.bf16.mxu0 %v1981
    %2318 = vmatpush1.bf16.msra.mxu0 %v1980
    %2319 = vmatprep.subr.bf16.mxu0 %v1989
    %2320 = vmatpush1.bf16.msra.mxu0 %v1988
    %2321 = vmatprep.mubr.bf16.mxu0 %v2001
    %2322 = vmatmul.mubr.bf16.gmra.mrb[0].mxu0 %v2000
    %v2323 = vpop.f32.mrb[0].mxu0
    %v2324 = vadd.f32 %v2283, %v2323
    %v2325 = vpop.f32.mrb[0].mxu0
    %v2326 = vadd.f32 %v2285, %v2325
    %v2327 = vpop.f32.mrb[0].mxu0
    %v2328 = vpop.f32.mrb[0].mxu0
    %2329 = vdwg.mxu0
    %2330 = vmatprep.subr.bf16.mxu0 %v1487
    %2331 = vmatpush1.bf16.msra.mxu0 %v1486
    %2332 = vmatprep.subr.bf16.mxu0 %v1495
    %2333 = vmatpush1.bf16.msra.mxu0 %v1494
    %2334 = vmatprep.subr.bf16.mxu0 %v1503
    %2335 = vmatpush1.bf16.msra.mxu0 %v1502
    %2336 = vmatprep.subr.bf16.mxu0 %v1511
    %2337 = vmatpush1.bf16.msra.mxu0 %v1510
    %2338 = vmatprep.subr.bf16.mxu0 %v1519
    %2339 = vmatpush1.bf16.msra.mxu0 %v1518
    %2340 = vmatprep.subr.bf16.mxu0 %v1527
    %2341 = vmatpush1.bf16.msra.mxu0 %v1526
    %2342 = vmatprep.subr.bf16.mxu0 %v1535
    %2343 = vmatpush1.bf16.msra.mxu0 %v1534
    %2344 = vmatprep.subr.bf16.mxu0 %v1543
    %2345 = vmatpush1.bf16.msra.mxu0 %v1542
    %2346 = vmatprep.subr.bf16.mxu0 %v1551
    %2347 = vmatpush1.bf16.msra.mxu0 %v1550
    %2348 = vmatprep.subr.bf16.mxu0 %v1559
    %2349 = vmatpush1.bf16.msra.mxu0 %v1558
    %2350 = vmatprep.subr.bf16.mxu0 %v1567
    %2351 = vmatpush1.bf16.msra.mxu0 %v1566
    %2352 = vmatprep.subr.bf16.mxu0 %v1575
    %2353 = vmatpush1.bf16.msra.mxu0 %v1574
    %2354 = vmatprep.subr.bf16.mxu0 %v1583
    %2355 = vmatpush1.bf16.msra.mxu0 %v1582
    %2356 = vmatprep.subr.bf16.mxu0 %v1591
    %2357 = vmatpush1.bf16.msra.mxu0 %v1590
    %2358 = vmatprep.subr.bf16.mxu0 %v1599
    %2359 = vmatpush1.bf16.msra.mxu0 %v1598
    %2360 = vmatprep.subr.bf16.mxu0 %v1607
    %2361 = vmatpush1.bf16.msra.mxu0 %v1606
    %2362 = vmatprep.mubr.bf16.mxu0 %v1995
    %2363 = vmatmul.mubr.bf16.gmra.mrb[0].mxu0 %v1994
    %v2364 = vpop.f32.mrb[0].mxu0
    %v2365 = vadd.f32 0.0, %v2364
    %v2366 = vpop.f32.mrb[0].mxu0
    %v2367 = vadd.f32 0.0, %v2366
    %v2368 = vpop.f32.mrb[0].mxu0
    %v2369 = vpop.f32.mrb[0].mxu0
    %2370 = vdwg.mxu0
    %2371 = vmatprep.subr.bf16.mxu0 %v1615
    %2372 = vmatpush1.bf16.msra.mxu0 %v1614
    %2373 = vmatprep.subr.bf16.mxu0 %v1623
    %2374 = vmatpush1.bf16.msra.mxu0 %v1622
    %2375 = vmatprep.subr.bf16.mxu0 %v1631
    %2376 = vmatpush1.bf16.msra.mxu0 %v1630
    %2377 = vmatprep.subr.bf16.mxu0 %v1639
    %2378 = vmatpush1.bf16.msra.mxu0 %v1638
    %2379 = vmatprep.subr.bf16.mxu0 %v1647
    %2380 = vmatpush1.bf16.msra.mxu0 %v1646
    %2381 = vmatprep.subr.bf16.mxu0 %v1655
    %2382 = vmatpush1.bf16.msra.mxu0 %v1654
    %2383 = vmatprep.subr.bf16.mxu0 %v1663
    %2384 = vmatpush1.bf16.msra.mxu0 %v1662
    %2385 = vmatprep.subr.bf16.mxu0 %v1671
    %2386 = vmatpush1.bf16.msra.mxu0 %v1670
    %2387 = vmatprep.subr.bf16.mxu0 %v1679
    %2388 = vmatpush1.bf16.msra.mxu0 %v1678
    %2389 = vmatprep.subr.bf16.mxu0 %v1687
    %2390 = vmatpush1.bf16.msra.mxu0 %v1686
    %2391 = vmatprep.subr.bf16.mxu0 %v1695
    %2392 = vmatpush1.bf16.msra.mxu0 %v1694
    %2393 = vmatprep.subr.bf16.mxu0 %v1703
    %2394 = vmatpush1.bf16.msra.mxu0 %v1702
    %2395 = vmatprep.subr.bf16.mxu0 %v1711
    %2396 = vmatpush1.bf16.msra.mxu0 %v1710
    %2397 = vmatprep.subr.bf16.mxu0 %v1719
    %2398 = vmatpush1.bf16.msra.mxu0 %v1718
    %2399 = vmatprep.subr.bf16.mxu0 %v1727
    %2400 = vmatpush1.bf16.msra.mxu0 %v1726
    %2401 = vmatprep.subr.bf16.mxu0 %v1735
    %2402 = vmatpush1.bf16.msra.mxu0 %v1734
    %2403 = vmatprep.mubr.bf16.mxu0 %v1997
    %2404 = vmatmul.mubr.bf16.gmra.mrb[0].mxu0 %v1996
    %v2405 = vpop.f32.mrb[0].mxu0
    %v2406 = vadd.f32 %v2365, %v2405
    %v2407 = vpop.f32.mrb[0].mxu0
    %v2408 = vadd.f32 %v2367, %v2407
    %v2409 = vpop.f32.mrb[0].mxu0
    %v2410 = vpop.f32.mrb[0].mxu0
    %2411 = vdwg.mxu0
    %2412 = vmatprep.subr.bf16.mxu0 %v1743
    %2413 = vmatpush1.bf16.msra.mxu0 %v1742
    %2414 = vmatprep.subr.bf16.mxu0 %v1751
    %2415 = vmatpush1.bf16.msra.mxu0 %v1750
    %2416 = vmatprep.subr.bf16.mxu0 %v1759
    %2417 = vmatpush1.bf16.msra.mxu0 %v1758
    %2418 = vmatprep.subr.bf16.mxu0 %v1767
    %2419 = vmatpush1.bf16.msra.mxu0 %v1766
    %2420 = vmatprep.subr.bf16.mxu0 %v1775
    %2421 = vmatpush1.bf16.msra.mxu0 %v1774
    %2422 = vmatprep.subr.bf16.mxu0 %v1783
    %2423 = vmatpush1.bf16.msra.mxu0 %v1782
    %2424 = vmatprep.subr.bf16.mxu0 %v1791
    %2425 = vmatpush1.bf16.msra.mxu0 %v1790
    %2426 = vmatprep.subr.bf16.mxu0 %v1799
    %2427 = vmatpush1.bf16.msra.mxu0 %v1798
    %2428 = vmatprep.subr.bf16.mxu0 %v1807
    %2429 = vmatpush1.bf16.msra.mxu0 %v1806
    %2430 = vmatprep.subr.bf16.mxu0 %v1815
    %2431 = vmatpush1.bf16.msra.mxu0 %v1814
    %2432 = vmatprep.subr.bf16.mxu0 %v1823
    %2433 = vmatpush1.bf16.msra.mxu0 %v1822
    %2434 = vmatprep.subr.bf16.mxu0 %v1831
    %2435 = vmatpush1.bf16.msra.mxu0 %v1830
    %2436 = vmatprep.subr.bf16.mxu0 %v1839
    %2437 = vmatpush1.bf16.msra.mxu0 %v1838
    %2438 = vmatprep.subr.bf16.mxu0 %v1847
    %2439 = vmatpush1.bf16.msra.mxu0 %v1846
    %2440 = vmatprep.subr.bf16.mxu0 %v1855
    %2441 = vmatpush1.bf16.msra.mxu0 %v1854
    %2442 = vmatprep.subr.bf16.mxu0 %v1863
    %2443 = vmatpush1.bf16.msra.mxu0 %v1862
    %2444 = vmatprep.mubr.bf16.mxu0 %v1999
    %2445 = vmatmul.mubr.bf16.gmra.mrb[0].mxu0 %v1998
    %v2446 = vpop.f32.mrb[0].mxu0
    %v2447 = vadd.f32 %v2406, %v2446
    %v2448 = vpop.f32.mrb[0].mxu0
    %v2449 = vadd.f32 %v2408, %v2448
    %v2450 = vpop.f32.mrb[0].mxu0
    %v2451 = vpop.f32.mrb[0].mxu0
    %2452 = vdwg.mxu0
    %2453 = vmatprep.subr.bf16.mxu0 %v1871
    %2454 = vmatpush1.bf16.msra.mxu0 %v1870
    %2455 = vmatprep.subr.bf16.mxu0 %v1879
    %2456 = vmatpush1.bf16.msra.mxu0 %v1878
    %2457 = vmatprep.subr.bf16.mxu0 %v1887
    %2458 = vmatpush1.bf16.msra.mxu0 %v1886
    %2459 = vmatprep.subr.bf16.mxu0 %v1895
    %2460 = vmatpush1.bf16.msra.mxu0 %v1894
    %2461 = vmatprep.subr.bf16.mxu0 %v1903
    %2462 = vmatpush1.bf16.msra.mxu0 %v1902
    %2463 = vmatprep.subr.bf16.mxu0 %v1911
    %2464 = vmatpush1.bf16.msra.mxu0 %v1910
    %2465 = vmatprep.subr.bf16.mxu0 %v1919
    %2466 = vmatpush1.bf16.msra.mxu0 %v1918
    %2467 = vmatprep.subr.bf16.mxu0 %v1927
    %2468 = vmatpush1.bf16.msra.mxu0 %v1926
    %2469 = vmatprep.subr.bf16.mxu0 %v1935
    %2470 = vmatpush1.bf16.msra.mxu0 %v1934
    %2471 = vmatprep.subr.bf16.mxu0 %v1943
    %2472 = vmatpush1.bf16.msra.mxu0 %v1942
    %2473 = vmatprep.subr.bf16.mxu0 %v1951
    %2474 = vmatpush1.bf16.msra.mxu0 %v1950
    %2475 = vmatprep.subr.bf16.mxu0 %v1959
    %2476 = vmatpush1.bf16.msra.mxu0 %v1958
    %2477 = vmatprep.subr.bf16.mxu0 %v1967
    %2478 = vmatpush1.bf16.msra.mxu0 %v1966
    %2479 = vmatprep.subr.bf16.mxu0 %v1975
    %2480 = vmatpush1.bf16.msra.mxu0 %v1974
    %2481 = vmatprep.subr.bf16.mxu0 %v1983
    %2482 = vmatpush1.bf16.msra.mxu0 %v1982
    %2483 = vmatprep.subr.bf16.mxu0 %v1991
    %2484 = vmatpush1.bf16.msra.mxu0 %v1990
    %2485 = vmatprep.mubr.bf16.mxu0 %v2001
    %2486 = vmatmul.mubr.bf16.gmra.mrb[0].mxu0 %v2000
    %v2487 = vpop.f32.mrb[0].mxu0
    %v2488 = vadd.f32 %v2447, %v2487
    %v2489 = vpop.f32.mrb[0].mxu0
    %v2490 = vadd.f32 %v2449, %v2489
    %v2491 = vpop.f32.mrb[0].mxu0
    %v2492 = vpop.f32.mrb[0].mxu0
    %2493 = vdwg.mxu0
    %2494 = vmatprep.subr.bf16.mxu0 %v1489
    %2495 = vmatpush1.bf16.msra.mxu0 %v1488
    %2496 = vmatprep.subr.bf16.mxu0 %v1497
    %2497 = vmatpush1.bf16.msra.mxu0 %v1496
    %2498 = vmatprep.subr.bf16.mxu0 %v1505
    %2499 = vmatpush1.bf16.msra.mxu0 %v1504
    %2500 = vmatprep.subr.bf16.mxu0 %v1513
    %2501 = vmatpush1.bf16.msra.mxu0 %v1512
    %2502 = vmatprep.subr.bf16.mxu0 %v1521
    %2503 = vmatpush1.bf16.msra.mxu0 %v1520
    %2504 = vmatprep.subr.bf16.mxu0 %v1529
    %2505 = vmatpush1.bf16.msra.mxu0 %v1528
    %2506 = vmatprep.subr.bf16.mxu0 %v1537
    %2507 = vmatpush1.bf16.msra.mxu0 %v1536
    %2508 = vmatprep.subr.bf16.mxu0 %v1545
    %2509 = vmatpush1.bf16.msra.mxu0 %v1544
    %2510 = vmatprep.subr.bf16.mxu0 %v1553
    %2511 = vmatpush1.bf16.msra.mxu0 %v1552
    %2512 = vmatprep.subr.bf16.mxu0 %v1561
    %2513 = vmatpush1.bf16.msra.mxu0 %v1560
    %2514 = vmatprep.subr.bf16.mxu0 %v1569
    %2515 = vmatpush1.bf16.msra.mxu0 %v1568
    %2516 = vmatprep.subr.bf16.mxu0 %v1577
    %2517 = vmatpush1.bf16.msra.mxu0 %v1576
    %2518 = vmatprep.subr.bf16.mxu0 %v1585
    %2519 = vmatpush1.bf16.msra.mxu0 %v1584
    %2520 = vmatprep.subr.bf16.mxu0 %v1593
    %2521 = vmatpush1.bf16.msra.mxu0 %v1592
    %2522 = vmatprep.subr.bf16.mxu0 %v1601
    %2523 = vmatpush1.bf16.msra.mxu0 %v1600
    %2524 = vmatprep.subr.bf16.mxu0 %v1609
    %2525 = vmatpush1.bf16.msra.mxu0 %v1608
    %2526 = vmatprep.mubr.bf16.mxu0 %v1995
    %2527 = vmatmul.mubr.bf16.gmra.mrb[0].mxu0 %v1994
    %v2528 = vpop.f32.mrb[0].mxu0
    %v2529 = vadd.f32 0.0, %v2528
    %v2530 = vpop.f32.mrb[0].mxu0
    %v2531 = vadd.f32 0.0, %v2530
    %v2532 = vpop.f32.mrb[0].mxu0
    %v2533 = vpop.f32.mrb[0].mxu0
    %2534 = vdwg.mxu0
    %2535 = vmatprep.subr.bf16.mxu0 %v1617
    %2536 = vmatpush1.bf16.msra.mxu0 %v1616
    %2537 = vmatprep.subr.bf16.mxu0 %v1625
    %2538 = vmatpush1.bf16.msra.mxu0 %v1624
    %2539 = vmatprep.subr.bf16.mxu0 %v1633
    %2540 = vmatpush1.bf16.msra.mxu0 %v1632
    %2541 = vmatprep.subr.bf16.mxu0 %v1641
    %2542 = vmatpush1.bf16.msra.mxu0 %v1640
    %2543 = vmatprep.subr.bf16.mxu0 %v1649
    %2544 = vmatpush1.bf16.msra.mxu0 %v1648
    %2545 = vmatprep.subr.bf16.mxu0 %v1657
    %2546 = vmatpush1.bf16.msra.mxu0 %v1656
    %2547 = vmatprep.subr.bf16.mxu0 %v1665
    %2548 = vmatpush1.bf16.msra.mxu0 %v1664
    %2549 = vmatprep.subr.bf16.mxu0 %v1673
    %2550 = vmatpush1.bf16.msra.mxu0 %v1672
    %2551 = vmatprep.subr.bf16.mxu0 %v1681
    %2552 = vmatpush1.bf16.msra.mxu0 %v1680
    %2553 = vmatprep.subr.bf16.mxu0 %v1689
    %2554 = vmatpush1.bf16.msra.mxu0 %v1688
    %2555 = vmatprep.subr.bf16.mxu0 %v1697
    %2556 = vmatpush1.bf16.msra.mxu0 %v1696
    %2557 = vmatprep.subr.bf16.mxu0 %v1705
    %2558 = vmatpush1.bf16.msra.mxu0 %v1704
    %2559 = vmatprep.subr.bf16.mxu0 %v1713
    %2560 = vmatpush1.bf16.msra.mxu0 %v1712
    %2561 = vmatprep.subr.bf16.mxu0 %v1721
    %2562 = vmatpush1.bf16.msra.mxu0 %v1720
    %2563 = vmatprep.subr.bf16.mxu0 %v1729
    %2564 = vmatpush1.bf16.msra.mxu0 %v1728
    %2565 = vmatprep.subr.bf16.mxu0 %v1737
    %2566 = vmatpush1.bf16.msra.mxu0 %v1736
    %2567 = vmatprep.mubr.bf16.mxu0 %v1997
    %2568 = vmatmul.mubr.bf16.gmra.mrb[0].mxu0 %v1996
    %v2569 = vpop.f32.mrb[0].mxu0
    %v2570 = vadd.f32 %v2529, %v2569
    %v2571 = vpop.f32.mrb[0].mxu0
    %v2572 = vadd.f32 %v2531, %v2571
    %v2573 = vpop.f32.mrb[0].mxu0
    %v2574 = vpop.f32.mrb[0].mxu0
    %2575 = vdwg.mxu0
    %2576 = vmatprep.subr.bf16.mxu0 %v1745
    %2577 = vmatpush1.bf16.msra.mxu0 %v1744
    %2578 = vmatprep.subr.bf16.mxu0 %v1753
    %2579 = vmatpush1.bf16.msra.mxu0 %v1752
    %2580 = vmatprep.subr.bf16.mxu0 %v1761
    %2581 = vmatpush1.bf16.msra.mxu0 %v1760
    %2582 = vmatprep.subr.bf16.mxu0 %v1769
    %2583 = vmatpush1.bf16.msra.mxu0 %v1768
    %2584 = vmatprep.subr.bf16.mxu0 %v1777
    %2585 = vmatpush1.bf16.msra.mxu0 %v1776
    %2586 = vmatprep.subr.bf16.mxu0 %v1785
    %2587 = vmatpush1.bf16.msra.mxu0 %v1784
    %2588 = vmatprep.subr.bf16.mxu0 %v1793
    %2589 = vmatpush1.bf16.msra.mxu0 %v1792
    %2590 = vmatprep.subr.bf16.mxu0 %v1801
    %2591 = vmatpush1.bf16.msra.mxu0 %v1800
    %2592 = vmatprep.subr.bf16.mxu0 %v1809
    %2593 = vmatpush1.bf16.msra.mxu0 %v1808
    %2594 = vmatprep.subr.bf16.mxu0 %v1817
    %2595 = vmatpush1.bf16.msra.mxu0 %v1816
    %2596 = vmatprep.subr.bf16.mxu0 %v1825
    %2597 = vmatpush1.bf16.msra.mxu0 %v1824
    %2598 = vmatprep.subr.bf16.mxu0 %v1833
    %2599 = vmatpush1.bf16.msra.mxu0 %v1832
    %2600 = vmatprep.subr.bf16.mxu0 %v1841
    %2601 = vmatpush1.bf16.msra.mxu0 %v1840
    %2602 = vmatprep.subr.bf16.mxu0 %v1849
    %2603 = vmatpush1.bf16.msra.mxu0 %v1848
    %2604 = vmatprep.subr.bf16.mxu0 %v1857
    %2605 = vmatpush1.bf16.msra.mxu0 %v1856
    %2606 = vmatprep.subr.bf16.mxu0 %v1865
    %2607 = vmatpush1.bf16.msra.mxu0 %v1864
    %2608 = vmatprep.mubr.bf16.mxu0 %v1999
    %2609 = vmatmul.mubr.bf16.gmra.mrb[0].mxu0 %v1998
    %v2610 = vpop.f32.mrb[0].mxu0
    %v2611 = vadd.f32 %v2570, %v2610
    %v2612 = vpop.f32.mrb[0].mxu0
    %v2613 = vadd.f32 %v2572, %v2612
    %v2614 = vpop.f32.mrb[0].mxu0
    %v2615 = vpop.f32.mrb[0].mxu0
    %2616 = vdwg.mxu0
    %2617 = vmatprep.subr.bf16.mxu0 %v1873
    %2618 = vmatpush1.bf16.msra.mxu0 %v1872
    %2619 = vmatprep.subr.bf16.mxu0 %v1881
    %2620 = vmatpush1.bf16.msra.mxu0 %v1880
    %2621 = vmatprep.subr.bf16.mxu0 %v1889
    %2622 = vmatpush1.bf16.msra.mxu0 %v1888
    %2623 = vmatprep.subr.bf16.mxu0 %v1897
    %2624 = vmatpush1.bf16.msra.mxu0 %v1896
    %2625 = vmatprep.subr.bf16.mxu0 %v1905
    %2626 = vmatpush1.bf16.msra.mxu0 %v1904
    %2627 = vmatprep.subr.bf16.mxu0 %v1913
    %2628 = vmatpush1.bf16.msra.mxu0 %v1912
    %2629 = vmatprep.subr.bf16.mxu0 %v1921
    %2630 = vmatpush1.bf16.msra.mxu0 %v1920
    %2631 = vmatprep.subr.bf16.mxu0 %v1929
    %2632 = vmatpush1.bf16.msra.mxu0 %v1928
    %2633 = vmatprep.subr.bf16.mxu0 %v1937
    %2634 = vmatpush1.bf16.msra.mxu0 %v1936
    %2635 = vmatprep.subr.bf16.mxu0 %v1945
    %2636 = vmatpush1.bf16.msra.mxu0 %v1944
    %2637 = vmatprep.subr.bf16.mxu0 %v1953
    %2638 = vmatpush1.bf16.msra.mxu0 %v1952
    %2639 = vmatprep.subr.bf16.mxu0 %v1961
    %2640 = vmatpush1.bf16.msra.mxu0 %v1960
    %2641 = vmatprep.subr.bf16.mxu0 %v1969
    %2642 = vmatpush1.bf16.msra.mxu0 %v1968
    %2643 = vmatprep.subr.bf16.mxu0 %v1977
    %2644 = vmatpush1.bf16.msra.mxu0 %v1976
    %2645 = vmatprep.subr.bf16.mxu0 %v1985
    %2646 = vmatpush1.bf16.msra.mxu0 %v1984
    %2647 = vmatprep.subr.bf16.mxu0 %v1993
    %2648 = vmatpush1.bf16.msra.mxu0 %v1992
    %2649 = vmatprep.mubr.bf16.mxu0 %v2001
    %2650 = vmatmul.mubr.bf16.gmra.mrb[0].mxu0 %v2000
    %v2651 = vpop.f32.mrb[0].mxu0
    %v2652 = vadd.f32 %v2611, %v2651
    %v2653 = vpop.f32.mrb[0].mxu0
    %v2654 = vadd.f32 %v2613, %v2653
    %v2655 = vpop.f32.mrb[0].mxu0
    %v2656 = vpop.f32.mrb[0].mxu0
    %2657 = vdwg.mxu0
    %v2658 = vld [vmem:[%s5] sm:$0xff]
    %v2660 = vlaneseq
    %v2661 = vshrl.u32 %v2660, 7
    %v2662 = vsub.s32 0, %v2661
    %v2663 = vrot.slane %v2658, %v2662
    %v2664 = vlaneseq
    %v2665 = vshrl.u32 %v2664, 7
    %v2666 = vsub.s32 1, %v2665
    %v2667 = vrot.slane %v2658, %v2666
    %v2668 = vlaneseq
    %v2669 = vshrl.u32 %v2668, 7
    %v2670 = vsub.s32 2, %v2669
    %v2671 = vrot.slane %v2658, %v2670
    %v2672 = vlaneseq
    %v2673 = vshrl.u32 %v2672, 7
    %v2674 = vsub.s32 3, %v2673
    %v2675 = vrot.slane %v2658, %v2674
    %v2676 = vlaneseq
    %v2677 = vshrl.u32 %v2676, 7
    %v2678 = vsub.s32 4, %v2677
    %v2679 = vrot.slane %v2658, %v2678
    %v2680 = vlaneseq
    %v2681 = vshrl.u32 %v2680, 7
    %v2682 = vsub.s32 5, %v2681
    %v2683 = vrot.slane %v2658, %v2682
    %v2684 = vlaneseq
    %v2685 = vshrl.u32 %v2684, 7
    %v2686 = vsub.s32 6, %v2685
    %v2687 = vrot.slane %v2658, %v2686
    %v2688 = vlaneseq
    %v2689 = vshrl.u32 %v2688, 7
    %v2690 = vsub.s32 7, %v2689
    %v2691 = vrot.slane %v2658, %v2690
    %v2700 = vmul.f32 %v2160, %v2663
    %v2701 = vmul.f32 %v2162, %v2667
    %v2702 = vmul.f32 %v2324, %v2671
    %v2703 = vmul.f32 %v2326, %v2675
    %v2704 = vmul.f32 %v2488, %v2679
    %v2705 = vmul.f32 %v2490, %v2683
    %v2706 = vmul.f32 %v2652, %v2687
    %v2707 = vmul.f32 %v2654, %v2691
    %v2708 = vld [vmem:[%s6] sm:$0xff]
    %v2710 = vlaneseq
    %v2711 = vshrl.u32 %v2710, 7
    %v2712 = vsub.s32 0, %v2711
    %v2713 = vrot.slane %v2708, %v2712
    %v2714 = vlaneseq
    %v2715 = vshrl.u32 %v2714, 7
    %v2716 = vsub.s32 1, %v2715
    %v2717 = vrot.slane %v2708, %v2716
    %v2718 = vlaneseq
    %v2719 = vshrl.u32 %v2718, 7
    %v2720 = vsub.s32 2, %v2719
    %v2721 = vrot.slane %v2708, %v2720
    %v2722 = vlaneseq
    %v2723 = vshrl.u32 %v2722, 7
    %v2724 = vsub.s32 3, %v2723
    %v2725 = vrot.slane %v2708, %v2724
    %v2726 = vlaneseq
    %v2727 = vshrl.u32 %v2726, 7
    %v2728 = vsub.s32 4, %v2727
    %v2729 = vrot.slane %v2708, %v2728
    %v2730 = vlaneseq
    %v2731 = vshrl.u32 %v2730, 7
    %v2732 = vsub.s32 5, %v2731
    %v2733 = vrot.slane %v2708, %v2732
    %v2734 = vlaneseq
    %v2735 = vshrl.u32 %v2734, 7
    %v2736 = vsub.s32 6, %v2735
    %v2737 = vrot.slane %v2708, %v2736
    %v2738 = vlaneseq
    %v2739 = vshrl.u32 %v2738, 7
    %v2740 = vsub.s32 7, %v2739
    %v2741 = vrot.slane %v2708, %v2740
    %v2750 = vadd.f32 %v2700, %v2713
    %v2751 = vadd.f32 %v2701, %v2717
    %v2752 = vadd.f32 %v2702, %v2721
    %v2753 = vadd.f32 %v2703, %v2725
    %v2754 = vadd.f32 %v2704, %v2729
    %v2755 = vadd.f32 %v2705, %v2733
    %v2756 = vadd.f32 %v2706, %v2737
    %v2757 = vadd.f32 %v2707, %v2741
    %v2758 = vpack.c.bf16 %v2750, %v2750
    %v2759 = vpack.c.bf16 %v2751, %v2751
    %v2760 = vpack.c.bf16 %v2752, %v2752
    %v2761 = vpack.c.bf16 %v2753, %v2753
    %v2762 = vpack.c.bf16 %v2754, %v2754
    %v2763 = vpack.c.bf16 %v2755, %v2755
    %v2764 = vpack.c.bf16 %v2756, %v2756
    %v2765 = vpack.c.bf16 %v2757, %v2757
    %v2766 = vld [vmem:[%s7] sm:$0xf]
    %v2767 = vld [vmem:[%s7 + $0x4] sm:$0xf]
    %v2768 = vld [vmem:[%s7 + $0x8] sm:$0xf]
    %v2769 = vld [vmem:[%s7 + $0xc] sm:$0xf]
    %v2770 = vld [vmem:[%s7 + $0x10] sm:$0xf]
    %v2771 = vld [vmem:[%s7 + $0x14] sm:$0xf]
    %v2772 = vld [vmem:[%s7 + $0x18] sm:$0xf]
    %v2773 = vld [vmem:[%s7 + $0x1c] sm:$0xf]
    %v2774 = vld [vmem:[%s7 + $0x20] sm:$0xf]
    %v2775 = vld [vmem:[%s7 + $0x24] sm:$0xf]
    %v2776 = vld [vmem:[%s7 + $0x28] sm:$0xf]
    %v2777 = vld [vmem:[%s7 + $0x2c] sm:$0xf]
    %v2778 = vld [vmem:[%s7 + $0x30] sm:$0xf]
    %v2779 = vld [vmem:[%s7 + $0x34] sm:$0xf]
    %v2780 = vld [vmem:[%s7 + $0x38] sm:$0xf]
    %v2781 = vld [vmem:[%s7 + $0x3c] sm:$0xf]
    %v2782 = vld [vmem:[%s7 + $0x40] sm:$0xf]
    %v2783 = vld [vmem:[%s7 + $0x44] sm:$0xf]
    %v2784 = vld [vmem:[%s7 + $0x48] sm:$0xf]
    %v2785 = vld [vmem:[%s7 + $0x4c] sm:$0xf]
    %v2786 = vld [vmem:[%s7 + $0x50] sm:$0xf]
    %v2787 = vld [vmem:[%s7 + $0x54] sm:$0xf]
    %v2788 = vld [vmem:[%s7 + $0x58] sm:$0xf]
    %v2789 = vld [vmem:[%s7 + $0x5c] sm:$0xf]
    %v2790 = vld [vmem:[%s7 + $0x60] sm:$0xf]
    %v2791 = vld [vmem:[%s7 + $0x64] sm:$0xf]
    %v2792 = vld [vmem:[%s7 + $0x68] sm:$0xf]
    %v2793 = vld [vmem:[%s7 + $0x6c] sm:$0xf]
    %v2794 = vld [vmem:[%s7 + $0x70] sm:$0xf]
    %v2795 = vld [vmem:[%s7 + $0x74] sm:$0xf]
    %v2796 = vld [vmem:[%s7 + $0x78] sm:$0xf]
    %v2797 = vld [vmem:[%s7 + $0x7c] sm:$0xf]
    %v2798 = vld [vmem:[%s7 + $0x80] sm:$0xf]
    %v2799 = vld [vmem:[%s7 + $0x84] sm:$0xf]
    %v2800 = vld [vmem:[%s7 + $0x88] sm:$0xf]
    %v2801 = vld [vmem:[%s7 + $0x8c] sm:$0xf]
    %v2802 = vld [vmem:[%s7 + $0x90] sm:$0xf]
    %v2803 = vld [vmem:[%s7 + $0x94] sm:$0xf]
    %v2804 = vld [vmem:[%s7 + $0x98] sm:$0xf]
    %v2805 = vld [vmem:[%s7 + $0x9c] sm:$0xf]
    %v2806 = vld [vmem:[%s7 + $0xa0] sm:$0xf]
    %v2807 = vld [vmem:[%s7 + $0xa4] sm:$0xf]
    %v2808 = vld [vmem:[%s7 + $0xa8] sm:$0xf]
    %v2809 = vld [vmem:[%s7 + $0xac] sm:$0xf]
    %v2810 = vld [vmem:[%s7 + $0xb0] sm:$0xf]
    %v2811 = vld [vmem:[%s7 + $0xb4] sm:$0xf]
    %v2812 = vld [vmem:[%s7 + $0xb8] sm:$0xf]
    %v2813 = vld [vmem:[%s7 + $0xbc] sm:$0xf]
    %v2814 = vld [vmem:[%s7 + $0xc0] sm:$0xf]
    %v2815 = vld [vmem:[%s7 + $0xc4] sm:$0xf]
    %v2816 = vld [vmem:[%s7 + $0xc8] sm:$0xf]
    %v2817 = vld [vmem:[%s7 + $0xcc] sm:$0xf]
    %v2818 = vld [vmem:[%s7 + $0xd0] sm:$0xf]
    %v2819 = vld [vmem:[%s7 + $0xd4] sm:$0xf]
    %v2820 = vld [vmem:[%s7 + $0xd8] sm:$0xf]
    %v2821 = vld [vmem:[%s7 + $0xdc] sm:$0xf]
    %v2822 = vld [vmem:[%s7 + $0xe0] sm:$0xf]
    %v2823 = vld [vmem:[%s7 + $0xe4] sm:$0xf]
    %v2824 = vld [vmem:[%s7 + $0xe8] sm:$0xf]
    %v2825 = vld [vmem:[%s7 + $0xec] sm:$0xf]
    %v2826 = vld [vmem:[%s7 + $0xf0] sm:$0xf]
    %v2827 = vld [vmem:[%s7 + $0xf4] sm:$0xf]
    %v2828 = vld [vmem:[%s7 + $0xf8] sm:$0xf]
    %v2829 = vld [vmem:[%s7 + $0xfc] sm:$0xf]
    %v2830 = vld [vmem:[%s7 + $0x100] sm:$0xf]
    %v2831 = vld [vmem:[%s7 + $0x104] sm:$0xf]
    %v2832 = vld [vmem:[%s7 + $0x108] sm:$0xf]
    %v2833 = vld [vmem:[%s7 + $0x10c] sm:$0xf]
    %v2834 = vld [vmem:[%s7 + $0x110] sm:$0xf]
    %v2835 = vld [vmem:[%s7 + $0x114] sm:$0xf]
    %v2836 = vld [vmem:[%s7 + $0x118] sm:$0xf]
    %v2837 = vld [vmem:[%s7 + $0x11c] sm:$0xf]
    %v2838 = vld [vmem:[%s7 + $0x120] sm:$0xf]
    %v2839 = vld [vmem:[%s7 + $0x124] sm:$0xf]
    %v2840 = vld [vmem:[%s7 + $0x128] sm:$0xf]
    %v2841 = vld [vmem:[%s7 + $0x12c] sm:$0xf]
    %v2842 = vld [vmem:[%s7 + $0x130] sm:$0xf]
    %v2843 = vld [vmem:[%s7 + $0x134] sm:$0xf]
    %v2844 = vld [vmem:[%s7 + $0x138] sm:$0xf]
    %v2845 = vld [vmem:[%s7 + $0x13c] sm:$0xf]
    %v2846 = vld [vmem:[%s7 + $0x140] sm:$0xf]
    %v2847 = vld [vmem:[%s7 + $0x144] sm:$0xf]
    %v2848 = vld [vmem:[%s7 + $0x148] sm:$0xf]
    %v2849 = vld [vmem:[%s7 + $0x14c] sm:$0xf]
    %v2850 = vld [vmem:[%s7 + $0x150] sm:$0xf]
    %v2851 = vld [vmem:[%s7 + $0x154] sm:$0xf]
    %v2852 = vld [vmem:[%s7 + $0x158] sm:$0xf]
    %v2853 = vld [vmem:[%s7 + $0x15c] sm:$0xf]
    %v2854 = vld [vmem:[%s7 + $0x160] sm:$0xf]
    %v2855 = vld [vmem:[%s7 + $0x164] sm:$0xf]
    %v2856 = vld [vmem:[%s7 + $0x168] sm:$0xf]
    %v2857 = vld [vmem:[%s7 + $0x16c] sm:$0xf]
    %v2858 = vld [vmem:[%s7 + $0x170] sm:$0xf]
    %v2859 = vld [vmem:[%s7 + $0x174] sm:$0xf]
    %v2860 = vld [vmem:[%s7 + $0x178] sm:$0xf]
    %v2861 = vld [vmem:[%s7 + $0x17c] sm:$0xf]
    %v2862 = vld [vmem:[%s7 + $0x180] sm:$0xf]
    %v2863 = vld [vmem:[%s7 + $0x184] sm:$0xf]
    %v2864 = vld [vmem:[%s7 + $0x188] sm:$0xf]
    %v2865 = vld [vmem:[%s7 + $0x18c] sm:$0xf]
    %v2866 = vld [vmem:[%s7 + $0x190] sm:$0xf]
    %v2867 = vld [vmem:[%s7 + $0x194] sm:$0xf]
    %v2868 = vld [vmem:[%s7 + $0x198] sm:$0xf]
    %v2869 = vld [vmem:[%s7 + $0x19c] sm:$0xf]
    %v2870 = vld [vmem:[%s7 + $0x1a0] sm:$0xf]
    %v2871 = vld [vmem:[%s7 + $0x1a4] sm:$0xf]
    %v2872 = vld [vmem:[%s7 + $0x1a8] sm:$0xf]
    %v2873 = vld [vmem:[%s7 + $0x1ac] sm:$0xf]
    %v2874 = vld [vmem:[%s7 + $0x1b0] sm:$0xf]
    %v2875 = vld [vmem:[%s7 + $0x1b4] sm:$0xf]
    %v2876 = vld [vmem:[%s7 + $0x1b8] sm:$0xf]
    %v2877 = vld [vmem:[%s7 + $0x1bc] sm:$0xf]
    %v2878 = vld [vmem:[%s7 + $0x1c0] sm:$0xf]
    %v2879 = vld [vmem:[%s7 + $0x1c4] sm:$0xf]
    %v2880 = vld [vmem:[%s7 + $0x1c8] sm:$0xf]
    %v2881 = vld [vmem:[%s7 + $0x1cc] sm:$0xf]
    %v2882 = vld [vmem:[%s7 + $0x1d0] sm:$0xf]
    %v2883 = vld [vmem:[%s7 + $0x1d4] sm:$0xf]
    %v2884 = vld [vmem:[%s7 + $0x1d8] sm:$0xf]
    %v2885 = vld [vmem:[%s7 + $0x1dc] sm:$0xf]
    %v2886 = vld [vmem:[%s7 + $0x1e0] sm:$0xf]
    %v2887 = vld [vmem:[%s7 + $0x1e4] sm:$0xf]
    %v2888 = vld [vmem:[%s7 + $0x1e8] sm:$0xf]
    %v2889 = vld [vmem:[%s7 + $0x1ec] sm:$0xf]
    %v2890 = vld [vmem:[%s7 + $0x1f0] sm:$0xf]
    %v2891 = vld [vmem:[%s7 + $0x1f4] sm:$0xf]
    %v2892 = vld [vmem:[%s7 + $0x1f8] sm:$0xf]
    %v2893 = vld [vmem:[%s7 + $0x1fc] sm:$0xf]
    %v2894 = vld [vmem:[%s8] sm:$0x1]
    %v2896 = vlaneseq
    %v2897 = vshrl.u32 %v2896, 7
    %v2898 = vsub.s32 0, %v2897
    %v2899 = vrot.slane %v2894, %v2898
    %v3029 = vunpack.c.l.b16 %v2766
    %v3030 = vunpack.c.l.b16 %v2767
    %v3031 = vunpack.c.l.b16 %v2768
    %v3032 = vunpack.c.l.b16 %v2769
    %v3033 = vunpack.c.l.b16 %v2770
    %v3034 = vunpack.c.l.b16 %v2771
    %v3035 = vunpack.c.l.b16 %v2772
    %v3036 = vunpack.c.l.b16 %v2773
    %v3037 = vunpack.c.l.b16 %v2774
    %v3038 = vunpack.c.l.b16 %v2775
    %v3039 = vunpack.c.l.b16 %v2776
    %v3040 = vunpack.c.l.b16 %v2777
    %v3041 = vunpack.c.l.b16 %v2778
    %v3042 = vunpack.c.l.b16 %v2779
    %v3043 = vunpack.c.l.b16 %v2780
    %v3044 = vunpack.c.l.b16 %v2781
    %v3045 = vunpack.c.l.b16 %v2782
    %v3046 = vunpack.c.l.b16 %v2783
    %v3047 = vunpack.c.l.b16 %v2784
    %v3048 = vunpack.c.l.b16 %v2785
    %v3049 = vunpack.c.l.b16 %v2786
    %v3050 = vunpack.c.l.b16 %v2787
    %v3051 = vunpack.c.l.b16 %v2788
    %v3052 = vunpack.c.l.b16 %v2789
    %v3053 = vunpack.c.l.b16 %v2790
    %v3054 = vunpack.c.l.b16 %v2791
    %v3055 = vunpack.c.l.b16 %v2792
    %v3056 = vunpack.c.l.b16 %v2793
    %v3057 = vunpack.c.l.b16 %v2794
    %v3058 = vunpack.c.l.b16 %v2795
    %v3059 = vunpack.c.l.b16 %v2796
    %v3060 = vunpack.c.l.b16 %v2797
    %v3061 = vunpack.c.l.b16 %v2798
    %v3062 = vunpack.c.l.b16 %v2799
    %v3063 = vunpack.c.l.b16 %v2800
    %v3064 = vunpack.c.l.b16 %v2801
    %v3065 = vunpack.c.l.b16 %v2802
    %v3066 = vunpack.c.l.b16 %v2803
    %v3067 = vunpack.c.l.b16 %v2804
    %v3068 = vunpack.c.l.b16 %v2805
    %v3069 = vunpack.c.l.b16 %v2806
    %v3070 = vunpack.c.l.b16 %v2807
    %v3071 = vunpack.c.l.b16 %v2808
    %v3072 = vunpack.c.l.b16 %v2809
    %v3073 = vunpack.c.l.b16 %v2810
    %v3074 = vunpack.c.l.b16 %v2811
    %v3075 = vunpack.c.l.b16 %v2812
    %v3076 = vunpack.c.l.b16 %v2813
    %v3077 = vunpack.c.l.b16 %v2814
    %v3078 = vunpack.c.l.b16 %v2815
    %v3079 = vunpack.c.l.b16 %v2816
    %v3080 = vunpack.c.l.b16 %v2817
    %v3081 = vunpack.c.l.b16 %v2818
    %v3082 = vunpack.c.l.b16 %v2819
    %v3083 = vunpack.c.l.b16 %v2820
    %v3084 = vunpack.c.l.b16 %v2821
    %v3085 = vunpack.c.l.b16 %v2822
    %v3086 = vunpack.c.l.b16 %v2823
    %v3087 = vunpack.c.l.b16 %v2824
    %v3088 = vunpack.c.l.b16 %v2825
    %v3089 = vunpack.c.l.b16 %v2826
    %v3090 = vunpack.c.l.b16 %v2827
    %v3091 = vunpack.c.l.b16 %v2828
    %v3092 = vunpack.c.l.b16 %v2829
    %v3093 = vunpack.c.l.b16 %v2830
    %v3094 = vunpack.c.l.b16 %v2831
    %v3095 = vunpack.c.l.b16 %v2832
    %v3096 = vunpack.c.l.b16 %v2833
    %v3097 = vunpack.c.l.b16 %v2834
    %v3098 = vunpack.c.l.b16 %v2835
    %v3099 = vunpack.c.l.b16 %v2836
    %v3100 = vunpack.c.l.b16 %v2837
    %v3101 = vunpack.c.l.b16 %v2838
    %v3102 = vunpack.c.l.b16 %v2839
    %v3103 = vunpack.c.l.b16 %v2840
    %v3104 = vunpack.c.l.b16 %v2841
    %v3105 = vunpack.c.l.b16 %v2842
    %v3106 = vunpack.c.l.b16 %v2843
    %v3107 = vunpack.c.l.b16 %v2844
    %v3108 = vunpack.c.l.b16 %v2845
    %v3109 = vunpack.c.l.b16 %v2846
    %v3110 = vunpack.c.l.b16 %v2847
    %v3111 = vunpack.c.l.b16 %v2848
    %v3112 = vunpack.c.l.b16 %v2849
    %v3113 = vunpack.c.l.b16 %v2850
    %v3114 = vunpack.c.l.b16 %v2851
    %v3115 = vunpack.c.l.b16 %v2852
    %v3116 = vunpack.c.l.b16 %v2853
    %v3117 = vunpack.c.l.b16 %v2854
    %v3118 = vunpack.c.l.b16 %v2855
    %v3119 = vunpack.c.l.b16 %v2856
    %v3120 = vunpack.c.l.b16 %v2857
    %v3121 = vunpack.c.l.b16 %v2858
    %v3122 = vunpack.c.l.b16 %v2859
    %v3123 = vunpack.c.l.b16 %v2860
    %v3124 = vunpack.c.l.b16 %v2861
    %v3125 = vunpack.c.l.b16 %v2862
    %v3126 = vunpack.c.l.b16 %v2863
    %v3127 = vunpack.c.l.b16 %v2864
    %v3128 = vunpack.c.l.b16 %v2865
    %v3129 = vunpack.c.l.b16 %v2866
    %v3130 = vunpack.c.l.b16 %v2867
    %v3131 = vunpack.c.l.b16 %v2868
    %v3132 = vunpack.c.l.b16 %v2869
    %v3133 = vunpack.c.l.b16 %v2870
    %v3134 = vunpack.c.l.b16 %v2871
    %v3135 = vunpack.c.l.b16 %v2872
    %v3136 = vunpack.c.l.b16 %v2873
    %v3137 = vunpack.c.l.b16 %v2874
    %v3138 = vunpack.c.l.b16 %v2875
    %v3139 = vunpack.c.l.b16 %v2876
    %v3140 = vunpack.c.l.b16 %v2877
    %v3141 = vunpack.c.l.b16 %v2878
    %v3142 = vunpack.c.l.b16 %v2879
    %v3143 = vunpack.c.l.b16 %v2880
    %v3144 = vunpack.c.l.b16 %v2881
    %v3145 = vunpack.c.l.b16 %v2882
    %v3146 = vunpack.c.l.b16 %v2883
    %v3147 = vunpack.c.l.b16 %v2884
    %v3148 = vunpack.c.l.b16 %v2885
    %v3149 = vunpack.c.l.b16 %v2886
    %v3150 = vunpack.c.l.b16 %v2887
    %v3151 = vunpack.c.l.b16 %v2888
    %v3152 = vunpack.c.l.b16 %v2889
    %v3153 = vunpack.c.l.b16 %v2890
    %v3154 = vunpack.c.l.b16 %v2891
    %v3155 = vunpack.c.l.b16 %v2892
    %v3156 = vunpack.c.l.b16 %v2893
    %v3157 = vpack.c.b16 %v3030, %v3029
    %v3158 = vpack.c.b16 %v3032, %v3031
    %v3159 = vpack.c.b16 %v3034, %v3033
    %v3160 = vpack.c.b16 %v3036, %v3035
    %v3161 = vpack.c.b16 %v3038, %v3037
    %v3162 = vpack.c.b16 %v3040, %v3039
    %v3163 = vpack.c.b16 %v3042, %v3041
    %v3164 = vpack.c.b16 %v3044, %v3043
    %v3165 = vpack.c.b16 %v3046, %v3045
    %v3166 = vpack.c.b16 %v3048, %v3047
    %v3167 = vpack.c.b16 %v3050, %v3049
    %v3168 = vpack.c.b16 %v3052, %v3051
    %v3169 = vpack.c.b16 %v3054, %v3053
    %v3170 = vpack.c.b16 %v3056, %v3055
    %v3171 = vpack.c.b16 %v3058, %v3057
    %v3172 = vpack.c.b16 %v3060, %v3059
    %v3173 = vpack.c.b16 %v3062, %v3061
    %v3174 = vpack.c.b16 %v3064, %v3063
    %v3175 = vpack.c.b16 %v3066, %v3065
    %v3176 = vpack.c.b16 %v3068, %v3067
    %v3177 = vpack.c.b16 %v3070, %v3069
    %v3178 = vpack.c.b16 %v3072, %v3071
    %v3179 = vpack.c.b16 %v3074, %v3073
    %v3180 = vpack.c.b16 %v3076, %v3075
    %v3181 = vpack.c.b16 %v3078, %v3077
    %v3182 = vpack.c.b16 %v3080, %v3079
    %v3183 = vpack.c.b16 %v3082, %v3081
    %v3184 = vpack.c.b16 %v3084, %v3083
    %v3185 = vpack.c.b16 %v3086, %v3085
    %v3186 = vpack.c.b16 %v3088, %v3087
    %v3187 = vpack.c.b16 %v3090, %v3089
    %v3188 = vpack.c.b16 %v3092, %v3091
    %v3189 = vpack.c.b16 %v3094, %v3093
    %v3190 = vpack.c.b16 %v3096, %v3095
    %v3191 = vpack.c.b16 %v3098, %v3097
    %v3192 = vpack.c.b16 %v3100, %v3099
    %v3193 = vpack.c.b16 %v3102, %v3101
    %v3194 = vpack.c.b16 %v3104, %v3103
    %v3195 = vpack.c.b16 %v3106, %v3105
    %v3196 = vpack.c.b16 %v3108, %v3107
    %v3197 = vpack.c.b16 %v3110, %v3109
    %v3198 = vpack.c.b16 %v3112, %v3111
    %v3199 = vpack.c.b16 %v3114, %v3113
    %v3200 = vpack.c.b16 %v3116, %v3115
    %v3201 = vpack.c.b16 %v3118, %v3117
    %v3202 = vpack.c.b16 %v3120, %v3119
    %v3203 = vpack.c.b16 %v3122, %v3121
    %v3204 = vpack.c.b16 %v3124, %v3123
    %v3205 = vpack.c.b16 %v3126, %v3125
    %v3206 = vpack.c.b16 %v3128, %v3127
    %v3207 = vpack.c.b16 %v3130, %v3129
    %v3208 = vpack.c.b16 %v3132, %v3131
    %v3209 = vpack.c.b16 %v3134, %v3133
    %v3210 = vpack.c.b16 %v3136, %v3135
    %v3211 = vpack.c.b16 %v3138, %v3137
    %v3212 = vpack.c.b16 %v3140, %v3139
    %v3213 = vpack.c.b16 %v3142, %v3141
    %v3214 = vpack.c.b16 %v3144, %v3143
    %v3215 = vpack.c.b16 %v3146, %v3145
    %v3216 = vpack.c.b16 %v3148, %v3147
    %v3217 = vpack.c.b16 %v3150, %v3149
    %v3218 = vpack.c.b16 %v3152, %v3151
    %v3219 = vpack.c.b16 %v3154, %v3153
    %v3220 = vpack.c.b16 %v3156, %v3155
    %3285 = vmatprep.subr.bf16.mxu0 0
    %3286 = vmatpush1.bf16.msra.mxu0 %v3157
    %3287 = vmatprep.subr.bf16.mxu0 0
    %3288 = vmatpush1.bf16.msra.mxu0 %v3158
    %3289 = vmatprep.subr.bf16.mxu0 0
    %3290 = vmatpush1.bf16.msra.mxu0 %v3159
    %3291 = vmatprep.subr.bf16.mxu0 0
    %3292 = vmatpush1.bf16.msra.mxu0 %v3160
    %3293 = vmatprep.subr.bf16.mxu0 0
    %3294 = vmatpush1.bf16.msra.mxu0 %v3161
    %3295 = vmatprep.subr.bf16.mxu0 0
    %3296 = vmatpush1.bf16.msra.mxu0 %v3162
    %3297 = vmatprep.subr.bf16.mxu0 0
    %3298 = vmatpush1.bf16.msra.mxu0 %v3163
    %3299 = vmatprep.subr.bf16.mxu0 0
    %3300 = vmatpush1.bf16.msra.mxu0 %v3164
    %3301 = vmatprep.subr.bf16.mxu0 0
    %3302 = vmatpush1.bf16.msra.mxu0 %v3165
    %3303 = vmatprep.subr.bf16.mxu0 0
    %3304 = vmatpush1.bf16.msra.mxu0 %v3166
    %3305 = vmatprep.subr.bf16.mxu0 0
    %3306 = vmatpush1.bf16.msra.mxu0 %v3167
    %3307 = vmatprep.subr.bf16.mxu0 0
    %3308 = vmatpush1.bf16.msra.mxu0 %v3168
    %3309 = vmatprep.subr.bf16.mxu0 0
    %3310 = vmatpush1.bf16.msra.mxu0 %v3169
    %3311 = vmatprep.subr.bf16.mxu0 0
    %3312 = vmatpush1.bf16.msra.mxu0 %v3170
    %3313 = vmatprep.subr.bf16.mxu0 0
    %3314 = vmatpush1.bf16.msra.mxu0 %v3171
    %3315 = vmatprep.subr.bf16.mxu0 0
    %3316 = vmatpush1.bf16.msra.mxu0 %v3172
    %3317 = vmatprep.mubr.bf16.mxu0 %v2759
    %3318 = vmatmul.mubr.bf16.gmra.mrb[0].mxu0 %v2758
    %v3319 = vpop.f32.mrb[0].mxu0
    %v3320 = vadd.f32 %v2899, %v3319
    %v3321 = vpop.f32.mrb[0].mxu0
    %v3322 = vpop.f32.mrb[0].mxu0
    %v3323 = vpop.f32.mrb[0].mxu0
    %3324 = vdwg.mxu0
    %3325 = vmatprep.subr.bf16.mxu0 0
    %3326 = vmatpush1.bf16.msra.mxu0 %v3173
    %3327 = vmatprep.subr.bf16.mxu0 0
    %3328 = vmatpush1.bf16.msra.mxu0 %v3174
    %3329 = vmatprep.subr.bf16.mxu0 0
    %3330 = vmatpush1.bf16.msra.mxu0 %v3175
    %3331 = vmatprep.subr.bf16.mxu0 0
    %3332 = vmatpush1.bf16.msra.mxu0 %v3176
    %3333 = vmatprep.subr.bf16.mxu0 0
    %3334 = vmatpush1.bf16.msra.mxu0 %v3177
    %3335 = vmatprep.subr.bf16.mxu0 0
    %3336 = vmatpush1.bf16.msra.mxu0 %v3178
    %3337 = vmatprep.subr.bf16.mxu0 0
    %3338 = vmatpush1.bf16.msra.mxu0 %v3179
    %3339 = vmatprep.subr.bf16.mxu0 0
    %3340 = vmatpush1.bf16.msra.mxu0 %v3180
    %3341 = vmatprep.subr.bf16.mxu0 0
    %3342 = vmatpush1.bf16.msra.mxu0 %v3181
    %3343 = vmatprep.subr.bf16.mxu0 0
    %3344 = vmatpush1.bf16.msra.mxu0 %v3182
    %3345 = vmatprep.subr.bf16.mxu0 0
    %3346 = vmatpush1.bf16.msra.mxu0 %v3183
    %3347 = vmatprep.subr.bf16.mxu0 0
    %3348 = vmatpush1.bf16.msra.mxu0 %v3184
    %3349 = vmatprep.subr.bf16.mxu0 0
    %3350 = vmatpush1.bf16.msra.mxu0 %v3185
    %3351 = vmatprep.subr.bf16.mxu0 0
    %3352 = vmatpush1.bf16.msra.mxu0 %v3186
    %3353 = vmatprep.subr.bf16.mxu0 0
    %3354 = vmatpush1.bf16.msra.mxu0 %v3187
    %3355 = vmatprep.subr.bf16.mxu0 0
    %3356 = vmatpush1.bf16.msra.mxu0 %v3188
    %3357 = vmatprep.mubr.bf16.mxu0 %v2761
    %3358 = vmatmul.mubr.bf16.gmra.mrb[0].mxu0 %v2760
    %v3359 = vpop.f32.mrb[0].mxu0
    %v3360 = vadd.f32 %v3320, %v3359
    %v3361 = vpop.f32.mrb[0].mxu0
    %v3362 = vpop.f32.mrb[0].mxu0
    %v3363 = vpop.f32.mrb[0].mxu0
    %3364 = vdwg.mxu0
    %3365 = vmatprep.subr.bf16.mxu0 0
    %3366 = vmatpush1.bf16.msra.mxu0 %v3189
    %3367 = vmatprep.subr.bf16.mxu0 0
    %3368 = vmatpush1.bf16.msra.mxu0 %v3190
    %3369 = vmatprep.subr.bf16.mxu0 0
    %3370 = vmatpush1.bf16.msra.mxu0 %v3191
    %3371 = vmatprep.subr.bf16.mxu0 0
    %3372 = vmatpush1.bf16.msra.mxu0 %v3192
    %3373 = vmatprep.subr.bf16.mxu0 0
    %3374 = vmatpush1.bf16.msra.mxu0 %v3193
    %3375 = vmatprep.subr.bf16.mxu0 0
    %3376 = vmatpush1.bf16.msra.mxu0 %v3194
    %3377 = vmatprep.subr.bf16.mxu0 0
    %3378 = vmatpush1.bf16.msra.mxu0 %v3195
    %3379 = vmatprep.subr.bf16.mxu0 0
    %3380 = vmatpush1.bf16.msra.mxu0 %v3196
    %3381 = vmatprep.subr.bf16.mxu0 0
    %3382 = vmatpush1.bf16.msra.mxu0 %v3197
    %3383 = vmatprep.subr.bf16.mxu0 0
    %3384 = vmatpush1.bf16.msra.mxu0 %v3198
    %3385 = vmatprep.subr.bf16.mxu0 0
    %3386 = vmatpush1.bf16.msra.mxu0 %v3199
    %3387 = vmatprep.subr.bf16.mxu0 0
    %3388 = vmatpush1.bf16.msra.mxu0 %v3200
    %3389 = vmatprep.subr.bf16.mxu0 0
    %3390 = vmatpush1.bf16.msra.mxu0 %v3201
    %3391 = vmatprep.subr.bf16.mxu0 0
    %3392 = vmatpush1.bf16.msra.mxu0 %v3202
    %3393 = vmatprep.subr.bf16.mxu0 0
    %3394 = vmatpush1.bf16.msra.mxu0 %v3203
    %3395 = vmatprep.subr.bf16.mxu0 0
    %3396 = vmatpush1.bf16.msra.mxu0 %v3204
    %3397 = vmatprep.mubr.bf16.mxu0 %v2763
    %3398 = vmatmul.mubr.bf16.gmra.mrb[0].mxu0 %v2762
    %v3399 = vpop.f32.mrb[0].mxu0
    %v3400 = vadd.f32 %v3360, %v3399
    %v3401 = vpop.f32.mrb[0].mxu0
    %v3402 = vpop.f32.mrb[0].mxu0
    %v3403 = vpop.f32.mrb[0].mxu0
    %3404 = vdwg.mxu0
    %3405 = vmatprep.subr.bf16.mxu0 0
    %3406 = vmatpush1.bf16.msra.mxu0 %v3205
    %3407 = vmatprep.subr.bf16.mxu0 0
    %3408 = vmatpush1.bf16.msra.mxu0 %v3206
    %3409 = vmatprep.subr.bf16.mxu0 0
    %3410 = vmatpush1.bf16.msra.mxu0 %v3207
    %3411 = vmatprep.subr.bf16.mxu0 0
    %3412 = vmatpush1.bf16.msra.mxu0 %v3208
    %3413 = vmatprep.subr.bf16.mxu0 0
    %3414 = vmatpush1.bf16.msra.mxu0 %v3209
    %3415 = vmatprep.subr.bf16.mxu0 0
    %3416 = vmatpush1.bf16.msra.mxu0 %v3210
    %3417 = vmatprep.subr.bf16.mxu0 0
    %3418 = vmatpush1.bf16.msra.mxu0 %v3211
    %3419 = vmatprep.subr.bf16.mxu0 0
    %3420 = vmatpush1.bf16.msra.mxu0 %v3212
    %3421 = vmatprep.subr.bf16.mxu0 0
    %3422 = vmatpush1.bf16.msra.mxu0 %v3213
    %3423 = vmatprep.subr.bf16.mxu0 0
    %3424 = vmatpush1.bf16.msra.mxu0 %v3214
    %3425 = vmatprep.subr.bf16.mxu0 0
    %3426 = vmatpush1.bf16.msra.mxu0 %v3215
    %3427 = vmatprep.subr.bf16.mxu0 0
    %3428 = vmatpush1.bf16.msra.mxu0 %v3216
    %3429 = vmatprep.subr.bf16.mxu0 0
    %3430 = vmatpush1.bf16.msra.mxu0 %v3217
    %3431 = vmatprep.subr.bf16.mxu0 0
    %3432 = vmatpush1.bf16.msra.mxu0 %v3218
    %3433 = vmatprep.subr.bf16.mxu0 0
    %3434 = vmatpush1.bf16.msra.mxu0 %v3219
    %3435 = vmatprep.subr.bf16.mxu0 0
    %3436 = vmatpush1.bf16.msra.mxu0 %v3220
    %3437 = vmatprep.mubr.bf16.mxu0 %v2765
    %3438 = vmatmul.mubr.bf16.gmra.mrb[0].mxu0 %v2764
    %v3439 = vpop.f32.mrb[0].mxu0
    %v3440 = vadd.f32 %v3400, %v3439
    %v3441 = vpop.f32.mrb[0].mxu0
    %v3442 = vpop.f32.mrb[0].mxu0
    %v3443 = vpop.f32.mrb[0].mxu0
    %3444 = vdwg.mxu0
    %3445 = vst [vmem:[#allocation2] sm:$0xff] %v3440
    // Predicated region
    $region38: #{my_ensemble_forward.1} parent=1 // pred_check
      _
    $region39: #{my_ensemble_forward.1} parent=1 // pred_check_branch
      %3447 = sbr.rel (0) target = $region41
    $region40: #{my_ensemble_forward.1} parent=1 // pred_region
      %s3449 = ssub.s32 128, 128
      %3450 = vsyncadd [#allocation3], %s3449
      %s3452 = sshll.u32 [#allocation2], 4
      %s3453 = int_to_ptr.vmem [resolvable:$true] %s3452
      %3455 = dma.vmem_to_hbm [thread:$0]  %s3453, 128, %s9, [#allocation3]
    $region41: #{my_ensemble_forward.1} parent=1 // pred_fallthru
      _
    // Predicated region
    $region42: #{my_ensemble_forward.1} parent=1 // pred_check
      _
    $region43: #{my_ensemble_forward.1} parent=1 // pred_check_branch
      %3457 = sbr.rel (0) target = $region45
    $region44: #{my_ensemble_forward.1} parent=1 // pred_region
      %3458 = dma.done [#allocation3], 128
    $region45: #{my_ensemble_forward.1} parent=1 // pred_fallthru
      _
    %3459 = vsyncpa [#allocation3], 1

</llo_original>
